<compile_context>
chip_gen: v7x
topology: tpu7x:2x2x1
jax: 0.10.0
libtpu: 0.0.40
codegen_flags: <defaults>
</compile_context>

<pallas_src>
import functools

import numpy as np
import jax
import jax.numpy as jnp
from jax.experimental import pallas as pl
from jax.experimental.pallas import tpu as pltpu

_LN_EPS = 1e-5


# ----------------------------- helpers (host / numpy) -----------------------------

def _relative_position_index(ws):
    """Same buffer WindowAttention builds (torch.meshgrid indexing='ij')."""
    coords = np.stack(np.meshgrid(np.arange(ws), np.arange(ws), indexing="ij"))  # (2, ws, ws)
    cf = coords.reshape(2, -1)                                                    # (2, N)
    rel = cf[:, :, None] - cf[:, None, :]                                         # (2, N, N)
    rel = rel.transpose(1, 2, 0).astype(np.int64)                                 # (N, N, 2)
    rel[..., 0] += ws - 1
    rel[..., 1] += ws - 1
    rel[..., 0] *= 2 * ws - 1
    return rel.sum(-1)                                                            # (N, N)


def _attention_mask(H, W, ws, shift):
    """Faithful port of SwinTransformerLayer.create_mask (incl. the tuple-index
    quirk of its first h_slices entry)."""
    Hp = int(np.ceil(H / ws)) * ws
    Wp = int(np.ceil(W / ws)) * ws
    img_mask = np.zeros((Hp, Wp), np.float32)
    h_slices = ((0, -ws), slice(-ws, -shift), slice(-shift, None))
    w_slices = (slice(0, -ws), slice(-ws, -shift), slice(-shift, None))
    cnt = 0
    for hs in h_slices:
        for wsl in w_slices:
            img_mask[hs, wsl] = cnt
            cnt += 1
    N = ws * ws
    mw = img_mask.reshape(Hp // ws, ws, Wp // ws, ws).transpose(0, 2, 1, 3).reshape(-1, N)
    am = mw[:, None, :] - mw[:, :, None]                                          # (nW, N, N)
    return np.where(am != 0, -100.0, 0.0).astype(np.float32)


def _pick_row_tile(M, target=1024):
    if M <= target:
        return M
    t = (target // 8) * 8
    while t >= 8:
        if M % t == 0:
            return t
        t -= 8
    return M


def _gelu_tanh(x):
    # TODO(synk): PyTorch nn.GELU() default is the exact erf formulation; the
    # tanh approximation is used here (erf lowering availability in Mosaic is
    # not guaranteed).  Max deviation from exact GELU is ~3e-4 absolute.
    c0 = np.sqrt(2.0 / np.pi).astype(np.float32)
    return 0.5 * x * (1.0 + jnp.tanh(c0 * (x + 0.044715 * x * x * x)))


def _layer_norm(x, g, b, eps=_LN_EPS):
    mu = jnp.mean(x, axis=-1, keepdims=True)
    var = jnp.mean(jnp.square(x - mu), axis=-1, keepdims=True)
    return (x - mu) * jax.lax.rsqrt(var + eps) * g + b


# ----------------------------- Pallas kernels -----------------------------

def _window_attn_kernel(x_ref, bias_ref, g1_ref, b1_ref, wqkv_ref, wp_ref, bp_ref,
                        o_ref, *, num_heads, window_size, n_win_h, ln_eps):
    """norm1 + window MHSA (+rel-pos bias / shift mask) + proj for one
    (batch, window-column) block of shape (1, Hp, ws, C)."""
    C = x_ref.shape[-1]
    ws = window_size
    N = ws * ws
    nWh = n_win_h
    hd = C // num_heads
    scale = float(hd) ** -0.5

    # tokens, window-major then row-major inside the window (matches torch
    # window_partition for this column of windows)
    xt = x_ref[0].reshape(nWh * N, C)

    # LayerNorm (norm1) over channels
    mu = jnp.mean(xt, axis=-1, keepdims=True)
    var = jnp.mean(jnp.square(xt - mu), axis=-1, keepdims=True)
    xn = (xt - mu) * jax.lax.rsqrt(var + ln_eps)
    xn = xn * g1_ref[...] + b1_ref[...]

    # one big qkv matmul for every token in the block (MXU)
    qkv = jnp.dot(xn, wqkv_ref[...], preferred_element_type=jnp.float32)   # (nWh*N, 3C)

    bias_all = bias_ref[0]          # (num_heads * nWh, N, N)  rel-pos bias (+ mask)
    wproj = wp_ref[...]             # (C, C)

    acc = jnp.zeros((nWh * N, C), jnp.float32)
    for h in range(num_heads):      # static unroll; per-head dots keep a single
        #                             batch dim (windows), the validated pattern
        q = qkv[:, h * hd:(h + 1) * hd].reshape(nWh, N, hd) * scale
        k = qkv[:, C + h * hd:C + (h + 1) * hd].reshape(nWh, N, hd)
        v = qkv[:, 2 * C + h * hd:2 * C + (h + 1) * hd].reshape(nWh, N, hd)

        s = jnp.einsum('wnd,wmd->wnm', q, k, preferred_element_type=jnp.float32)
        s = s + bias_all[h * nWh:(h + 1) * nWh]

        m = jnp.max(s, axis=-1, keepdims=True)
        e = jnp.exp(s - m)
        p = e / jnp.sum(e, axis=-1, keepdims=True)

        o_h = jnp.einsum('wnm,wmd->wnd', p, v, preferred_element_type=jnp.float32)
        # fold the head-concat + projection into per-head partial matmuls
        acc = acc + jnp.dot(o_h.reshape(nWh * N, hd), wproj[h * hd:(h + 1) * hd, :],
                            preferred_element_type=jnp.float32)

    out = acc + bp_ref[...]
    o_ref[...] = out.reshape(o_ref.shape)


def _mlp_residual_kernel(sc_ref, at_ref, g2_ref, b2_ref, w1_ref, fb1_ref,
                         w2_ref, fb2_ref, o_ref, *, ln_eps):
    """h = shortcut + attn ; out = h + fc2(gelu(fc1(norm2(h))))."""
    h = sc_ref[...] + at_ref[...]
    mu = jnp.mean(h, axis=-1, keepdims=True)
    var = jnp.mean(jnp.square(h - mu), axis=-1, keepdims=True)
    hn = (h - mu) * jax.lax.rsqrt(var + ln_eps)
    hn = hn * g2_ref[...] + b2_ref[...]
    z = jnp.dot(hn, w1_ref[...], preferred_element_type=jnp.float32) + fb1_ref[...]
    z = _gelu_tanh(z)
    y = jnp.dot(z, w2_ref[...], preferred_element_type=jnp.float32) + fb2_ref[...]
    o_ref[...] = h + y


# ----------------------------- wrapper -----------------------------

def swin_layer_forward(x, params, *, num_heads, window_size, shift_size=0):
    """x: (B, C, W, H) NCHW exactly like the PyTorch module's input."""
    ws = window_size
    xp = jnp.transpose(x, (0, 3, 2, 1)).astype(jnp.float32)        # (B, H, W, C)
    B, H, W, C = xp.shape
    nh = num_heads
    assert C % nh == 0
    # TODO(synk): spatial padding path (H or W not a multiple of window_size) is
    # not implemented; PyTorch zero-pads the *normalized* tensor which cannot be
    # fused with the in-kernel norm1.
    assert H % ws == 0 and W % ws == 0, "H, W must be multiples of window_size"
    # TODO(synk): window_size must be a multiple of 8 (TPU sublane tile) for the
    # direct window BlockSpec; the Swin default ws=7 would need a padded-window path.
    assert ws % 8 == 0, "window_size must be a multiple of 8 for this kernel"
    nWh, nWw = H // ws, W // ws
    N = ws * ws

    shortcut = xp
    shifted = (jnp.roll(xp, (-shift_size, -shift_size), axis=(1, 2))
               if shift_size > 0 else xp)

    # ---- combined per-window additive bias: rel-pos bias (+ shift mask) ----
    rel_idx = _relative_position_index(ws)                                    # (N, N) np
    rel_bias = params["rel_bias_table"][rel_idx.reshape(-1)].reshape(N, N, nh)
    rel_bias = jnp.transpose(rel_bias, (2, 0, 1))                             # (nh, N, N)
    if shift_size > 0:
        mask = jnp.asarray(_attention_mask(H, W, ws, shift_size))             # (nW, N, N)
    else:
        mask = jnp.zeros((nWh * nWw, N, N), jnp.float32)
    mask_cw = jnp.transpose(mask.reshape(nWh, nWw, N, N), (1, 0, 2, 3))       # (nWw, nWh, N, N)
    bias_comb = rel_bias[None, :, None] + mask_cw[:, None]                    # (nWw, nh, nWh, N, N)
    bias_comb = bias_comb.reshape(nWw, nh * nWh, N, N)

    wqkv_t = params["qkv_w"].T                # (C, 3C)   (qkv_bias=False: module default)
    wproj_t = params["proj_w"].T              # (C, C)
    bproj = params["proj_b"][None, :]
    g1 = params["norm1_g"][None, :]
    b1 = params["norm1_b"][None, :]

    attn_kernel = functools.partial(_window_attn_kernel, num_heads=nh,
                                    window_size=ws, n_win_h=nWh, ln_eps=_LN_EPS)
    attn_out = pl.pallas_call(
        attn_kernel,
        grid=(B, nWw),
        in_specs=[
            pl.BlockSpec((1, H, ws, C), lambda b, j: (b, 0, j, 0)),       # shifted x (column of windows)
            pl.BlockSpec((1, nh * nWh, N, N), lambda b, j: (j, 0, 0, 0)),  # bias+mask for this column
            pl.BlockSpec((1, C), lambda b, j: (0, 0)),                     # norm1 gamma
            pl.BlockSpec((1, C), lambda b, j: (0, 0)),                     # norm1 beta
            pl.BlockSpec((C, 3 * C), lambda b, j: (0, 0)),                 # qkv weight (in, 3*out)
            pl.BlockSpec((C, C), lambda b, j: (0, 0)),                     # proj weight (in, out)
            pl.BlockSpec((1, C), lambda b, j: (0, 0)),                     # proj bias
        ],
        out_specs=pl.BlockSpec((1, H, ws, C), lambda b, j: (b, 0, j, 0)),
        out_shape=jax.ShapeDtypeStruct((B, H, W, C), jnp.float32),
        compiler_params=pltpu.CompilerParams(
            dimension_semantics=("parallel", "parallel")),
    )(shifted, bias_comb, g1, b1, wqkv_t, wproj_t, bproj)

    if shift_size > 0:
        attn_out = jnp.roll(attn_out, (shift_size, shift_size), axis=(1, 2))

    # ---- residual + norm2 + MLP + residual, tiled lane-dense over tokens ----
    M = B * H * W
    tm = _pick_row_tile(M)
    hid = params["fc1_w"].shape[0]
    mlp_kernel = functools.partial(_mlp_residual_kernel, ln_eps=_LN_EPS)
    y = pl.pallas_call(
        mlp_kernel,
        grid=(M // tm,),
        in_specs=[
            pl.BlockSpec((tm, C), lambda i: (i, 0)),       # shortcut rows
            pl.BlockSpec((tm, C), lambda i: (i, 0)),       # attention output rows
            pl.BlockSpec((1, C), lambda i: (0, 0)),        # norm2 gamma
            pl.BlockSpec((1, C), lambda i: (0, 0)),        # norm2 beta
            pl.BlockSpec((C, hid), lambda i: (0, 0)),      # fc1 weight (in, out)
            pl.BlockSpec((1, hid), lambda i: (0, 0)),      # fc1 bias
            pl.BlockSpec((hid, C), lambda i: (0, 0)),      # fc2 weight (in, out)
            pl.BlockSpec((1, C), lambda i: (0, 0)),        # fc2 bias
        ],
        out_specs=pl.BlockSpec((tm, C), lambda i: (i, 0)),
        out_shape=jax.ShapeDtypeStruct((M, C), jnp.float32),
        compiler_params=pltpu.CompilerParams(dimension_semantics=("parallel",)),
    )(shortcut.reshape(M, C), attn_out.reshape(M, C),
      params["norm2_g"][None, :], params["norm2_b"][None, :],
      params["fc1_w"].T, params["fc1_b"][None, :],
      params["fc2_w"].T, params["fc2_b"][None, :])

    return jnp.transpose(y.reshape(B, H, W, C), (0, 3, 2, 1)).astype(x.dtype)


# ----------------------------- parameters -----------------------------

def init_params(key, c, num_heads, window_size, mlp_ratio=4):
    hidden = int(c * mlp_ratio)
    n_rel = (2 * window_size - 1) ** 2
    ks = jax.random.split(key, 12)

    def lin(k, fan_out, fan_in):
        return jax.random.normal(k, (fan_out, fan_in), jnp.float32) / np.sqrt(fan_in)

    return {
        "norm1_g": 1.0 + 0.1 * jax.random.normal(ks[0], (c,), jnp.float32),
        "norm1_b": 0.1 * jax.random.normal(ks[1], (c,), jnp.float32),
        "qkv_w": lin(ks[2], 3 * c, c),                     # torch layout (out, in), no bias (default)
        "proj_w": lin(ks[3], c, c),
        "proj_b": 0.02 * jax.random.normal(ks[4], (c,), jnp.float32),
        "rel_bias_table": 0.02 * jax.random.normal(ks[5], (n_rel, num_heads), jnp.float32),
        "norm2_g": 1.0 + 0.1 * jax.random.normal(ks[6], (c,), jnp.float32),
        "norm2_b": 0.1 * jax.random.normal(ks[7], (c,), jnp.float32),
        "fc1_w": lin(ks[8], hidden, c),
        "fc1_b": 0.02 * jax.random.normal(ks[9], (hidden,), jnp.float32),
        "fc2_w": lin(ks[10], c, hidden),
        "fc2_b": 0.02 * jax.random.normal(ks[11], (c,), jnp.float32),
    }


# ----------------------------- pure-JAX reference -----------------------------

def ref_forward(x, params, num_heads, window_size, shift_size):
    ws = window_size
    xp = jnp.transpose(x, (0, 3, 2, 1)).astype(jnp.float32)        # (B, H, W, C)
    B, H, W, C = xp.shape
    nh = num_heads
    hd = C // nh
    nWh, nWw = H // ws, W // ws
    N = ws * ws

    shortcut = xp
    xn = _layer_norm(xp, params["norm1_g"], params["norm1_b"])
    shifted = (jnp.roll(xn, (-shift_size, -shift_size), axis=(1, 2))
               if shift_size > 0 else xn)

    xw = shifted.reshape(B, nWh, ws, nWw, ws, C).transpose(0, 1, 3, 2, 4, 5)
    xw = xw.reshape(B * nWh * nWw, N, C)

    qkv = xw @ params["qkv_w"].T
    qkv = qkv.reshape(-1, N, 3, nh, hd).transpose(2, 0, 3, 1, 4)
    q, k, v = qkv[0] * (float(hd) ** -0.5), qkv[1], qkv[2]
    attn = q @ jnp.swapaxes(k, -1, -2)                              # (B_, nh, N, N)

    rel_idx = _relative_position_index(ws)
    rel_bias = params["rel_bias_table"][rel_idx.reshape(-1)].reshape(N, N, nh)
    attn = attn + jnp.transpose(rel_bias, (2, 0, 1))[None]
    if shift_size > 0:
        mask = jnp.asarray(_attention_mask(H, W, ws, shift_size))   # (nW, N, N)
        attn = attn.reshape(B, nWh * nWw, nh, N, N) + mask[None, :, None]
        attn = attn.reshape(-1, nh, N, N)
    attn = jax.nn.softmax(attn, axis=-1)

    out = jnp.swapaxes(attn @ v, 1, 2).reshape(-1, N, C)
    out = out @ params["proj_w"].T + params["proj_b"]
    out = out.reshape(B, nWh, nWw, ws, ws, C).transpose(0, 1, 3, 2, 4, 5).reshape(B, H, W, C)
    if shift_size > 0:
        out = jnp.roll(out, (shift_size, shift_size), axis=(1, 2))

    h1 = shortcut + out
    hn = _layer_norm(h1, params["norm2_g"], params["norm2_b"])
    z = _gelu_tanh(hn @ params["fc1_w"].T + params["fc1_b"])
    h2 = h1 + (z @ params["fc2_w"].T + params["fc2_b"])
    return jnp.transpose(h2, (0, 3, 2, 1)).astype(x.dtype)


# ----------------------------- main -----------------------------

if __name__ == "__main__":
    B, C, H, W = 2, 32, 16, 16
    num_heads = 2
    window_size = 8

    key = jax.random.PRNGKey(0)
    kx, kp = jax.random.split(key)
    x = jax.random.normal(kx, (B, C, W, H), jnp.float32)   # NCHW, like the torch module
    params = init_params(kp, C, num_heads, window_size)

    for shift in (0, window_size // 2):                    # W-MSA and SW-MSA (with mask)
        fwd = jax.jit(functools.partial(swin_layer_forward, num_heads=num_heads,
                                        window_size=window_size, shift_size=shift))
        out = jax.block_until_ready(fwd(x, params))
        assert out.shape == x.shape
        ref = ref_forward(x, params, num_heads, window_size, shift)
        if not bool(jnp.allclose(out, ref, rtol=2e-4, atol=2e-4)):
            err = float(jnp.max(jnp.abs(out - ref)))
            raise AssertionError(f"Pallas output mismatch (shift={shift}), max abs err {err}")

    print("KERNEL_OK")
</pallas_src>

<mosaic_0001>
module attributes {stable_mosaic.version = 11 : i64} {
  func.func @_window_attn_kernel(%arg0: i32, %arg1: i32, %arg2: memref<1x16x8x32xf32, #tpu.memory_space<vmem>>, %arg3: memref<1x4x64x64xf32, #tpu.memory_space<vmem>>, %arg4: memref<1x32xf32, #tpu.memory_space<vmem>>, %arg5: memref<1x32xf32, #tpu.memory_space<vmem>>, %arg6: memref<32x96xf32, #tpu.memory_space<vmem>>, %arg7: memref<32x32xf32, #tpu.memory_space<vmem>>, %arg8: memref<1x32xf32, #tpu.memory_space<vmem>>, %arg9: memref<1x16x8x32xf32, #tpu.memory_space<vmem>>) attributes {dimension_semantics = [#tpu.dimension_semantics<parallel>, #tpu.dimension_semantics<parallel>], iteration_bounds = array<i64: 2, 2>, scalar_prefetch = 0 : i64, scratch_operands = 0 : i64, tpu.core_type = #tpu.core_type<tc>, window_params = [{transform_indices = @transform_0, window_bounds = array<i64: 1, 16, 8, 32>}, {transform_indices = @transform_1, window_bounds = array<i64: 1, 4, 64, 64>}, {pipeline_mode = #tpu.pipeline_mode<synchronous>, transform_indices = @transform_2, window_bounds = array<i64: 1, 32>}, {pipeline_mode = #tpu.pipeline_mode<synchronous>, transform_indices = @transform_3, window_bounds = array<i64: 1, 32>}, {pipeline_mode = #tpu.pipeline_mode<synchronous>, transform_indices = @transform_4, window_bounds = array<i64: 32, 96>}, {pipeline_mode = #tpu.pipeline_mode<synchronous>, transform_indices = @transform_5, window_bounds = array<i64: 32, 32>}, {pipeline_mode = #tpu.pipeline_mode<synchronous>, transform_indices = @transform_6, window_bounds = array<i64: 1, 32>}, {transform_indices = @transform_7, window_bounds = array<i64: 1, 16, 8, 32>}]} {
    %c0 = arith.constant 0 : index
    %c0_0 = arith.constant 0 : index
    %c0_1 = arith.constant 0 : index
    %c0_2 = arith.constant 0 : index
    %0 = vector.load %arg2[%c0, %c0_0, %c0_1, %c0_2] : memref<1x16x8x32xf32, #tpu.memory_space<vmem>>, vector<1x16x8x32xf32>
    %1 = vector.shape_cast %0 : vector<1x16x8x32xf32> to vector<16x8x32xf32>
    %2 = vector.shape_cast %1 : vector<16x8x32xf32> to vector<128x32xf32>
    %cst = arith.constant dense<0.000000e+00> : vector<128xf32>
    %3 = vector.multi_reduction <add>, %2, %cst [1] : vector<128x32xf32> to vector<128xf32>
    %4 = vector.shape_cast %3 : vector<128xf32> to vector<128x1xf32>
    %cst_3 = arith.constant 3.200000e+01 : f32
    %5 = vector.broadcast %cst_3 : f32 to vector<128x1xf32>
    %6 = arith.divf %4, %5 : vector<128x1xf32>
    %7 = vector.broadcast %6 : vector<128x1xf32> to vector<128x32xf32>
    %8 = arith.subf %2, %7 : vector<128x32xf32>
    %9 = arith.mulf %8, %8 : vector<128x32xf32>
    %cst_4 = arith.constant dense<0.000000e+00> : vector<128xf32>
    %10 = vector.multi_reduction <add>, %9, %cst_4 [1] : vector<128x32xf32> to vector<128xf32>
    %11 = vector.shape_cast %10 : vector<128xf32> to vector<128x1xf32>
    %cst_5 = arith.constant 3.200000e+01 : f32
    %12 = vector.broadcast %cst_5 : f32 to vector<128x1xf32>
    %13 = arith.divf %11, %12 : vector<128x1xf32>
    %14 = vector.broadcast %6 : vector<128x1xf32> to vector<128x32xf32>
    %15 = arith.subf %2, %14 : vector<128x32xf32>
    %cst_6 = arith.constant 9.99999974E-6 : f32
    %16 = vector.broadcast %cst_6 : f32 to vector<128x1xf32>
    %17 = arith.addf %13, %16 : vector<128x1xf32>
    %18 = math.rsqrt %17 : vector<128x1xf32>
    %19 = vector.broadcast %18 : vector<128x1xf32> to vector<128x32xf32>
    %20 = arith.mulf %15, %19 : vector<128x32xf32>
    %c0_7 = arith.constant 0 : index
    %c0_8 = arith.constant 0 : index
    %21 = vector.load %arg4[%c0_7, %c0_8] : memref<1x32xf32, #tpu.memory_space<vmem>>, vector<1x32xf32>
    %22 = vector.broadcast %21 : vector<1x32xf32> to vector<128x32xf32>
    %23 = arith.mulf %20, %22 : vector<128x32xf32>
    %c0_9 = arith.constant 0 : index
    %c0_10 = arith.constant 0 : index
    %24 = vector.load %arg5[%c0_9, %c0_10] : memref<1x32xf32, #tpu.memory_space<vmem>>, vector<1x32xf32>
    %25 = vector.broadcast %24 : vector<1x32xf32> to vector<128x32xf32>
    %26 = arith.addf %23, %25 : vector<128x32xf32>
    %c0_11 = arith.constant 0 : index
    %c0_12 = arith.constant 0 : index
    %27 = vector.load %arg6[%c0_11, %c0_12] : memref<32x96xf32, #tpu.memory_space<vmem>>, vector<32x96xf32>
    %cst_13 = arith.constant dense<0.000000e+00> : vector<128x96xf32>
    %28 = tpu.matmul %26, %27, %cst_13 {dimension_numbers = #tpu.dot_dimension_numbers<[1], [0], [0], [1], [0, 0, 1, 1], [], []>} : vector<128x32xf32>, vector<32x96xf32>, vector<128x96xf32> -> vector<128x96xf32>
    %c0_14 = arith.constant 0 : index
    %c0_15 = arith.constant 0 : index
    %c0_16 = arith.constant 0 : index
    %c0_17 = arith.constant 0 : index
    %29 = vector.load %arg3[%c0_14, %c0_15, %c0_16, %c0_17] : memref<1x4x64x64xf32, #tpu.memory_space<vmem>>, vector<1x4x64x64xf32>
    %30 = vector.shape_cast %29 : vector<1x4x64x64xf32> to vector<4x64x64xf32>
    %c0_18 = arith.constant 0 : index
    %c0_19 = arith.constant 0 : index
    %31 = vector.load %arg7[%c0_18, %c0_19] : memref<32x32xf32, #tpu.memory_space<vmem>>, vector<32x32xf32>
    %cst_20 = arith.constant 0.000000e+00 : f32
    %32 = vector.broadcast %cst_20 : f32 to vector<128x32xf32>
    %33 = vector.extract_strided_slice %28 {offsets = [0, 0], sizes = [128, 16], strides = [1, 1]} : vector<128x96xf32> to vector<128x16xf32>
    %34 = vector.shape_cast %33 : vector<128x16xf32> to vector<2x64x16xf32>
    %cst_21 = arith.constant 2.500000e-01 : f32
    %35 = vector.broadcast %cst_21 : f32 to vector<2x64x16xf32>
    %36 = arith.mulf %34, %35 : vector<2x64x16xf32>
    %37 = vector.extract_strided_slice %28 {offsets = [0, 32], sizes = [128, 16], strides = [1, 1]} : vector<128x96xf32> to vector<128x16xf32>
    %38 = vector.shape_cast %37 : vector<128x16xf32> to vector<2x64x16xf32>
    %39 = vector.extract_strided_slice %28 {offsets = [0, 64], sizes = [128, 16], strides = [1, 1]} : vector<128x96xf32> to vector<128x16xf32>
    %40 = vector.shape_cast %39 : vector<128x16xf32> to vector<2x64x16xf32>
    "tpu.trace_start"() <{level = 10 : i32, message = "wnd,wmd->wnm"}> : () -> ()
    %cst_22 = arith.constant dense<0.000000e+00> : vector<2x64x64xf32>
    %41 = tpu.matmul %36, %38, %cst_22 {dimension_numbers = #tpu.dot_dimension_numbers<[2], [2], [1], [1], [0, 0, 0, 1, 1, 1], [0], [0]>} : vector<2x64x16xf32>, vector<2x64x16xf32>, vector<2x64x64xf32> -> vector<2x64x64xf32>
    "tpu.trace_stop"() : () -> ()
    %42 = vector.extract_strided_slice %30 {offsets = [0, 0, 0], sizes = [2, 64, 64], strides = [1, 1, 1]} : vector<4x64x64xf32> to vector<2x64x64xf32>
    %43 = arith.addf %41, %42 : vector<2x64x64xf32>
    %cst_23 = arith.constant dense<0xFF800000> : vector<2x64xf32>
    %44 = vector.multi_reduction <maximumf>, %43, %cst_23 [2] : vector<2x64x64xf32> to vector<2x64xf32>
    %45 = vector.shape_cast %44 : vector<2x64xf32> to vector<2x64x1xf32>
    %46 = vector.broadcast %45 : vector<2x64x1xf32> to vector<2x64x64xf32>
    %47 = arith.subf %43, %46 : vector<2x64x64xf32>
    %48 = math.exp %47 : vector<2x64x64xf32>
    %cst_24 = arith.constant dense<0.000000e+00> : vector<2x64xf32>
    %49 = vector.multi_reduction <add>, %48, %cst_24 [2] : vector<2x64x64xf32> to vector<2x64xf32>
    %50 = vector.shape_cast %49 : vector<2x64xf32> to vector<2x64x1xf32>
    %51 = vector.broadcast %50 : vector<2x64x1xf32> to vector<2x64x64xf32>
    %52 = arith.divf %48, %51 : vector<2x64x64xf32>
    "tpu.trace_start"() <{level = 10 : i32, message = "wnm,wmd->wnd"}> : () -> ()
    %cst_25 = arith.constant dense<0.000000e+00> : vector<2x64x16xf32>
    %53 = tpu.matmul %52, %40, %cst_25 {dimension_numbers = #tpu.dot_dimension_numbers<[2], [1], [1], [2], [0, 0, 0, 1, 1, 2], [0], [0]>} : vector<2x64x64xf32>, vector<2x64x16xf32>, vector<2x64x16xf32> -> vector<2x64x16xf32>
    "tpu.trace_stop"() : () -> ()
    %54 = vector.shape_cast %53 : vector<2x64x16xf32> to vector<128x16xf32>
    %55 = vector.extract_strided_slice %31 {offsets = [0, 0], sizes = [16, 32], strides = [1, 1]} : vector<32x32xf32> to vector<16x32xf32>
    %cst_26 = arith.constant dense<0.000000e+00> : vector<128x32xf32>
    %56 = tpu.matmul %54, %55, %cst_26 {dimension_numbers = #tpu.dot_dimension_numbers<[1], [0], [0], [1], [0, 0, 1, 1], [], []>} : vector<128x16xf32>, vector<16x32xf32>, vector<128x32xf32> -> vector<128x32xf32>
    %57 = arith.addf %32, %56 : vector<128x32xf32>
    %58 = vector.extract_strided_slice %28 {offsets = [0, 16], sizes = [128, 16], strides = [1, 1]} : vector<128x96xf32> to vector<128x16xf32>
    %59 = vector.shape_cast %58 : vector<128x16xf32> to vector<2x64x16xf32>
    %cst_27 = arith.constant 2.500000e-01 : f32
    %60 = vector.broadcast %cst_27 : f32 to vector<2x64x16xf32>
    %61 = arith.mulf %59, %60 : vector<2x64x16xf32>
    %62 = vector.extract_strided_slice %28 {offsets = [0, 48], sizes = [128, 16], strides = [1, 1]} : vector<128x96xf32> to vector<128x16xf32>
    %63 = vector.shape_cast %62 : vector<128x16xf32> to vector<2x64x16xf32>
    %64 = vector.extract_strided_slice %28 {offsets = [0, 80], sizes = [128, 16], strides = [1, 1]} : vector<128x96xf32> to vector<128x16xf32>
    %65 = vector.shape_cast %64 : vector<128x16xf32> to vector<2x64x16xf32>
    "tpu.trace_start"() <{level = 10 : i32, message = "wnd,wmd->wnm"}> : () -> ()
    %cst_28 = arith.constant dense<0.000000e+00> : vector<2x64x64xf32>
    %66 = tpu.matmul %61, %63, %cst_28 {dimension_numbers = #tpu.dot_dimension_numbers<[2], [2], [1], [1], [0, 0, 0, 1, 1, 1], [0], [0]>} : vector<2x64x16xf32>, vector<2x64x16xf32>, vector<2x64x64xf32> -> vector<2x64x64xf32>
    "tpu.trace_stop"() : () -> ()
    %67 = vector.extract_strided_slice %30 {offsets = [2, 0, 0], sizes = [2, 64, 64], strides = [1, 1, 1]} : vector<4x64x64xf32> to vector<2x64x64xf32>
    %68 = arith.addf %66, %67 : vector<2x64x64xf32>
    %cst_29 = arith.constant dense<0xFF800000> : vector<2x64xf32>
    %69 = vector.multi_reduction <maximumf>, %68, %cst_29 [2] : vector<2x64x64xf32> to vector<2x64xf32>
    %70 = vector.shape_cast %69 : vector<2x64xf32> to vector<2x64x1xf32>
    %71 = vector.broadcast %70 : vector<2x64x1xf32> to vector<2x64x64xf32>
    %72 = arith.subf %68, %71 : vector<2x64x64xf32>
    %73 = math.exp %72 : vector<2x64x64xf32>
    %cst_30 = arith.constant dense<0.000000e+00> : vector<2x64xf32>
    %74 = vector.multi_reduction <add>, %73, %cst_30 [2] : vector<2x64x64xf32> to vector<2x64xf32>
    %75 = vector.shape_cast %74 : vector<2x64xf32> to vector<2x64x1xf32>
    %76 = vector.broadcast %75 : vector<2x64x1xf32> to vector<2x64x64xf32>
    %77 = arith.divf %73, %76 : vector<2x64x64xf32>
    "tpu.trace_start"() <{level = 10 : i32, message = "wnm,wmd->wnd"}> : () -> ()
    %cst_31 = arith.constant dense<0.000000e+00> : vector<2x64x16xf32>
    %78 = tpu.matmul %77, %65, %cst_31 {dimension_numbers = #tpu.dot_dimension_numbers<[2], [1], [1], [2], [0, 0, 0, 1, 1, 2], [0], [0]>} : vector<2x64x64xf32>, vector<2x64x16xf32>, vector<2x64x16xf32> -> vector<2x64x16xf32>
    "tpu.trace_stop"() : () -> ()
    %79 = vector.shape_cast %78 : vector<2x64x16xf32> to vector<128x16xf32>
    %80 = vector.extract_strided_slice %31 {offsets = [16, 0], sizes = [16, 32], strides = [1, 1]} : vector<32x32xf32> to vector<16x32xf32>
    %cst_32 = arith.constant dense<0.000000e+00> : vector<128x32xf32>
    %81 = tpu.matmul %79, %80, %cst_32 {dimension_numbers = #tpu.dot_dimension_numbers<[1], [0], [0], [1], [0, 0, 1, 1], [], []>} : vector<128x16xf32>, vector<16x32xf32>, vector<128x32xf32> -> vector<128x32xf32>
    %82 = arith.addf %57, %81 : vector<128x32xf32>
    %c0_33 = arith.constant 0 : index
    %c0_34 = arith.constant 0 : index
    %83 = vector.load %arg8[%c0_33, %c0_34] : memref<1x32xf32, #tpu.memory_space<vmem>>, vector<1x32xf32>
    %84 = vector.broadcast %83 : vector<1x32xf32> to vector<128x32xf32>
    %85 = arith.addf %82, %84 : vector<128x32xf32>
    %86 = vector.shape_cast %85 : vector<128x32xf32> to vector<1x16x8x32xf32>
    %c0_35 = arith.constant 0 : index
    %c0_36 = arith.constant 0 : index
    %c0_37 = arith.constant 0 : index
    %c0_38 = arith.constant 0 : index
    %87 = vector.load %arg9[%c0_35, %c0_36, %c0_37, %c0_38] : memref<1x16x8x32xf32, #tpu.memory_space<vmem>>, vector<1x16x8x32xf32>
    tpu.vector_store %arg9[%c0_35, %c0_36, %c0_37, %c0_38], %86 {strides = array<i32>} : memref<1x16x8x32xf32, #tpu.memory_space<vmem>>, vector<1x16x8x32xf32>,
    return
  }
  func.func @transform_0(%arg0: i32, %arg1: i32) -> (i32, i32, i32, i32) {
    %c0_i32 = arith.constant 0 : i32
    %c0_i32_0 = arith.constant 0 : i32
    %c0_i32_1 = arith.constant 0 : i32
    return %arg0, %c0_i32, %arg1, %c0_i32_0 : i32, i32, i32, i32
  }
  func.func @transform_1(%arg0: i32, %arg1: i32) -> (i32, i32, i32, i32) {
    %c0_i32 = arith.constant 0 : i32
    %c0_i32_0 = arith.constant 0 : i32
    %c0_i32_1 = arith.constant 0 : i32
    %c0_i32_2 = arith.constant 0 : i32
    return %arg1, %c0_i32, %c0_i32_0, %c0_i32_1 : i32, i32, i32, i32
  }
  func.func @transform_2(%arg0: i32, %arg1: i32) -> (i32, i32) {
    %c0_i32 = arith.constant 0 : i32
    %c0_i32_0 = arith.constant 0 : i32
    %c0_i32_1 = arith.constant 0 : i32
    return %c0_i32, %c0_i32_0 : i32, i32
  }
  func.func @transform_3(%arg0: i32, %arg1: i32) -> (i32, i32) {
    %c0_i32 = arith.constant 0 : i32
    %c0_i32_0 = arith.constant 0 : i32
    %c0_i32_1 = arith.constant 0 : i32
    return %c0_i32, %c0_i32_0 : i32, i32
  }
  func.func @transform_4(%arg0: i32, %arg1: i32) -> (i32, i32) {
    %c0_i32 = arith.constant 0 : i32
    %c0_i32_0 = arith.constant 0 : i32
    %c0_i32_1 = arith.constant 0 : i32
    return %c0_i32, %c0_i32_0 : i32, i32
  }
  func.func @transform_5(%arg0: i32, %arg1: i32) -> (i32, i32) {
    %c0_i32 = arith.constant 0 : i32
    %c0_i32_0 = arith.constant 0 : i32
    %c0_i32_1 = arith.constant 0 : i32
    return %c0_i32, %c0_i32_0 : i32, i32
  }
  func.func @transform_6(%arg0: i32, %arg1: i32) -> (i32, i32) {
    %c0_i32 = arith.constant 0 : i32
    %c0_i32_0 = arith.constant 0 : i32
    %c0_i32_1 = arith.constant 0 : i32
    return %c0_i32, %c0_i32_0 : i32, i32
  }
  func.func @transform_7(%arg0: i32, %arg1: i32) -> (i32, i32, i32, i32) {
    %c0_i32 = arith.constant 0 : i32
    %c0_i32_0 = arith.constant 0 : i32
    %c0_i32_1 = arith.constant 0 : i32
    return %arg0, %c0_i32, %arg1, %c0_i32_0 : i32, i32, i32, i32
  }
}

module attributes {stable_mosaic.version = 11 : i64} {
  func.func @_mlp_residual_kernel(%arg0: i32, %arg1: memref<512x32xf32, #tpu.memory_space<vmem>>, %arg2: memref<512x32xf32, #tpu.memory_space<vmem>>, %arg3: memref<1x32xf32, #tpu.memory_space<vmem>>, %arg4: memref<1x32xf32, #tpu.memory_space<vmem>>, %arg5: memref<32x128xf32, #tpu.memory_space<vmem>>, %arg6: memref<1x128xf32, #tpu.memory_space<vmem>>, %arg7: memref<128x32xf32, #tpu.memory_space<vmem>>, %arg8: memref<1x32xf32, #tpu.memory_space<vmem>>, %arg9: memref<512x32xf32, #tpu.memory_space<vmem>>) attributes {dimension_semantics = [#tpu.dimension_semantics<parallel>], iteration_bounds = array<i64: 1>, scalar_prefetch = 0 : i64, scratch_operands = 0 : i64, tpu.core_type = #tpu.core_type<tc>, window_params = [{transform_indices = @transform_0, window_bounds = array<i64: 512, 32>}, {transform_indices = @transform_1, window_bounds = array<i64: 512, 32>}, {pipeline_mode = #tpu.pipeline_mode<synchronous>, transform_indices = @transform_2, window_bounds = array<i64: 1, 32>}, {pipeline_mode = #tpu.pipeline_mode<synchronous>, transform_indices = @transform_3, window_bounds = array<i64: 1, 32>}, {pipeline_mode = #tpu.pipeline_mode<synchronous>, transform_indices = @transform_4, window_bounds = array<i64: 32, 128>}, {pipeline_mode = #tpu.pipeline_mode<synchronous>, transform_indices = @transform_5, window_bounds = array<i64: 1, 128>}, {pipeline_mode = #tpu.pipeline_mode<synchronous>, transform_indices = @transform_6, window_bounds = array<i64: 128, 32>}, {pipeline_mode = #tpu.pipeline_mode<synchronous>, transform_indices = @transform_7, window_bounds = array<i64: 1, 32>}, {transform_indices = @transform_8, window_bounds = array<i64: 512, 32>}]} {
    %c0 = arith.constant 0 : index
    %c0_0 = arith.constant 0 : index
    %0 = vector.load %arg1[%c0, %c0_0] : memref<512x32xf32, #tpu.memory_space<vmem>>, vector<512x32xf32>
    %c0_1 = arith.constant 0 : index
    %c0_2 = arith.constant 0 : index
    %1 = vector.load %arg2[%c0_1, %c0_2] : memref<512x32xf32, #tpu.memory_space<vmem>>, vector<512x32xf32>
    %2 = arith.addf %0, %1 : vector<512x32xf32>
    %cst = arith.constant dense<0.000000e+00> : vector<512xf32>
    %3 = vector.multi_reduction <add>, %2, %cst [1] : vector<512x32xf32> to vector<512xf32>
    %4 = vector.shape_cast %3 : vector<512xf32> to vector<512x1xf32>
    %cst_3 = arith.constant 3.200000e+01 : f32
    %5 = vector.broadcast %cst_3 : f32 to vector<512x1xf32>
    %6 = arith.divf %4, %5 : vector<512x1xf32>
    %7 = vector.broadcast %6 : vector<512x1xf32> to vector<512x32xf32>
    %8 = arith.subf %2, %7 : vector<512x32xf32>
    %9 = arith.mulf %8, %8 : vector<512x32xf32>
    %cst_4 = arith.constant dense<0.000000e+00> : vector<512xf32>
    %10 = vector.multi_reduction <add>, %9, %cst_4 [1] : vector<512x32xf32> to vector<512xf32>
    %11 = vector.shape_cast %10 : vector<512xf32> to vector<512x1xf32>
    %cst_5 = arith.constant 3.200000e+01 : f32
    %12 = vector.broadcast %cst_5 : f32 to vector<512x1xf32>
    %13 = arith.divf %11, %12 : vector<512x1xf32>
    %14 = vector.broadcast %6 : vector<512x1xf32> to vector<512x32xf32>
    %15 = arith.subf %2, %14 : vector<512x32xf32>
    %cst_6 = arith.constant 9.99999974E-6 : f32
    %16 = vector.broadcast %cst_6 : f32 to vector<512x1xf32>
    %17 = arith.addf %13, %16 : vector<512x1xf32>
    %18 = math.rsqrt %17 : vector<512x1xf32>
    %19 = vector.broadcast %18 : vector<512x1xf32> to vector<512x32xf32>
    %20 = arith.mulf %15, %19 : vector<512x32xf32>
    %c0_7 = arith.constant 0 : index
    %c0_8 = arith.constant 0 : index
    %21 = vector.load %arg3[%c0_7, %c0_8] : memref<1x32xf32, #tpu.memory_space<vmem>>, vector<1x32xf32>
    %22 = vector.broadcast %21 : vector<1x32xf32> to vector<512x32xf32>
    %23 = arith.mulf %20, %22 : vector<512x32xf32>
    %c0_9 = arith.constant 0 : index
    %c0_10 = arith.constant 0 : index
    %24 = vector.load %arg4[%c0_9, %c0_10] : memref<1x32xf32, #tpu.memory_space<vmem>>, vector<1x32xf32>
    %25 = vector.broadcast %24 : vector<1x32xf32> to vector<512x32xf32>
    %26 = arith.addf %23, %25 : vector<512x32xf32>
    %c0_11 = arith.constant 0 : index
    %c0_12 = arith.constant 0 : index
    %27 = vector.load %arg5[%c0_11, %c0_12] : memref<32x128xf32, #tpu.memory_space<vmem>>, vector<32x128xf32>
    %cst_13 = arith.constant dense<0.000000e+00> : vector<512x128xf32>
    %28 = tpu.matmul %26, %27, %cst_13 {dimension_numbers = #tpu.dot_dimension_numbers<[1], [0], [0], [1], [0, 0, 1, 1], [], []>} : vector<512x32xf32>, vector<32x128xf32>, vector<512x128xf32> -> vector<512x128xf32>
    %c0_14 = arith.constant 0 : index
    %c0_15 = arith.constant 0 : index
    %29 = vector.load %arg6[%c0_14, %c0_15] : memref<1x128xf32, #tpu.memory_space<vmem>>, vector<1x128xf32>
    %30 = vector.broadcast %29 : vector<1x128xf32> to vector<512x128xf32>
    %31 = arith.addf %28, %30 : vector<512x128xf32>
    %cst_16 = arith.constant 5.000000e-01 : f32
    %32 = vector.broadcast %cst_16 : f32 to vector<512x128xf32>
    %33 = arith.mulf %32, %31 : vector<512x128xf32>
    %cst_17 = arith.constant 4.471500e-02 : f32
    %34 = vector.broadcast %cst_17 : f32 to vector<512x128xf32>
    %35 = arith.mulf %34, %31 : vector<512x128xf32>
    %36 = arith.mulf %35, %31 : vector<512x128xf32>
    %37 = arith.mulf %36, %31 : vector<512x128xf32>
    %38 = arith.addf %31, %37 : vector<512x128xf32>
    %cst_18 = arith.constant 0.797884583 : f32
    %39 = vector.broadcast %cst_18 : f32 to vector<512x128xf32>
    %40 = arith.mulf %39, %38 : vector<512x128xf32>
    %41 = math.tanh %40 : vector<512x128xf32>
    %cst_19 = arith.constant 1.000000e+00 : f32
    %42 = vector.broadcast %cst_19 : f32 to vector<512x128xf32>
    %43 = arith.addf %42, %41 : vector<512x128xf32>
    %44 = arith.mulf %33, %43 : vector<512x128xf32>
    %c0_20 = arith.constant 0 : index
    %c0_21 = arith.constant 0 : index
    %45 = vector.load %arg7[%c0_20, %c0_21] : memref<128x32xf32, #tpu.memory_space<vmem>>, vector<128x32xf32>
    %cst_22 = arith.constant dense<0.000000e+00> : vector<512x32xf32>
    %46 = tpu.matmul %44, %45, %cst_22 {dimension_numbers = #tpu.dot_dimension_numbers<[1], [0], [0], [1], [0, 0, 1, 1], [], []>} : vector<512x128xf32>, vector<128x32xf32>, vector<512x32xf32> -> vector<512x32xf32>
    %c0_23 = arith.constant 0 : index
    %c0_24 = arith.constant 0 : index
    %47 = vector.load %arg8[%c0_23, %c0_24] : memref<1x32xf32, #tpu.memory_space<vmem>>, vector<1x32xf32>
    %48 = vector.broadcast %47 : vector<1x32xf32> to vector<512x32xf32>
    %49 = arith.addf %46, %48 : vector<512x32xf32>
    %50 = arith.addf %2, %49 : vector<512x32xf32>
    %c0_25 = arith.constant 0 : index
    %c0_26 = arith.constant 0 : index
    %51 = vector.load %arg9[%c0_25, %c0_26] : memref<512x32xf32, #tpu.memory_space<vmem>>, vector<512x32xf32>
    tpu.vector_store %arg9[%c0_25, %c0_26], %50 {strides = array<i32>} : memref<512x32xf32, #tpu.memory_space<vmem>>, vector<512x32xf32>,
    return
  }
  func.func @transform_0(%arg0: i32) -> (i32, i32) {
    %c0_i32 = arith.constant 0 : i32
    %c0_i32_0 = arith.constant 0 : i32
    return %arg0, %c0_i32 : i32, i32
  }
  func.func @transform_1(%arg0: i32) -> (i32, i32) {
    %c0_i32 = arith.constant 0 : i32
    %c0_i32_0 = arith.constant 0 : i32
    return %arg0, %c0_i32 : i32, i32
  }
  func.func @transform_2(%arg0: i32) -> (i32, i32) {
    %c0_i32 = arith.constant 0 : i32
    %c0_i32_0 = arith.constant 0 : i32
    %c0_i32_1 = arith.constant 0 : i32
    return %c0_i32, %c0_i32_0 : i32, i32
  }
  func.func @transform_3(%arg0: i32) -> (i32, i32) {
    %c0_i32 = arith.constant 0 : i32
    %c0_i32_0 = arith.constant 0 : i32
    %c0_i32_1 = arith.constant 0 : i32
    return %c0_i32, %c0_i32_0 : i32, i32
  }
  func.func @transform_4(%arg0: i32) -> (i32, i32) {
    %c0_i32 = arith.constant 0 : i32
    %c0_i32_0 = arith.constant 0 : i32
    %c0_i32_1 = arith.constant 0 : i32
    return %c0_i32, %c0_i32_0 : i32, i32
  }
  func.func @transform_5(%arg0: i32) -> (i32, i32) {
    %c0_i32 = arith.constant 0 : i32
    %c0_i32_0 = arith.constant 0 : i32
    %c0_i32_1 = arith.constant 0 : i32
    return %c0_i32, %c0_i32_0 : i32, i32
  }
  func.func @transform_6(%arg0: i32) -> (i32, i32) {
    %c0_i32 = arith.constant 0 : i32
    %c0_i32_0 = arith.constant 0 : i32
    %c0_i32_1 = arith.constant 0 : i32
    return %c0_i32, %c0_i32_0 : i32, i32
  }
  func.func @transform_7(%arg0: i32) -> (i32, i32) {
    %c0_i32 = arith.constant 0 : i32
    %c0_i32_0 = arith.constant 0 : i32
    %c0_i32_1 = arith.constant 0 : i32
    return %c0_i32, %c0_i32_0 : i32, i32
  }
  func.func @transform_8(%arg0: i32) -> (i32, i32) {
    %c0_i32 = arith.constant 0 : i32
    %c0_i32_0 = arith.constant 0 : i32
    return %arg0, %c0_i32 : i32, i32
  }
}

</mosaic_0001>

<llo_original>
// kernel: swin_layer_forward.2
$region0: #{swin_layer_forward.2}
  #allocation0 [shape = 'u32[]', space=smem, size = 0x4, offset = 0x4, fixed_abs, tag = 'smem constant byte address 0x4 - core index']
  #allocation1 [shape = 'u32[144,128]{1,0:T(1,128)}', space=vmem, size = 0x12000, scoped, tag = 'internal scratch']
  %s0 = inlined_call_operand.vmem [shape: f32[2,16,16,32], index: 0, kind: input, shape index: {}]
  %s1 = inlined_call_operand.vmem [shape: f32[2,4,64,64], index: 1, kind: input, shape index: {}]
  %s2 = inlined_call_operand.vmem [shape: f32[1,32], index: 2, kind: input, shape index: {}]
  %s3 = inlined_call_operand.vmem [shape: f32[1,32], index: 3, kind: input, shape index: {}]
  %s4 = inlined_call_operand.vmem [shape: f32[32,96], index: 4, kind: input, shape index: {}]
  %s5 = inlined_call_operand.vmem [shape: f32[32,32], index: 5, kind: input, shape index: {}]
  %s6 = inlined_call_operand.vmem [shape: f32[1,32], index: 6, kind: input, shape index: {}]
  %s7 = inlined_call_operand.vmem [shape: f32[2,16,16,32], index: 7, kind: output, shape index: {}]
  %s8 = sld [smem:[#allocation0]]
  $region133: #{swin_layer_forward.2} parent=0
    _
  %s10 = ssub.s32 1, %s8
  %s11 = scalar_select 0, %s10, %s8
  $region1: #{swin_layer_forward.2} parent=0
    #allocation2 [shape = 'u8[131072]{0}', space=vmem, size = 0x20000, scoped, tag = 'input window, operand 0']
    #allocation3 [shape = 'u8[131072]{0}', space=vmem, size = 0x20000, scoped, tag = 'output window, operand 0']
    loop: start=0, step=1, limit=6
    $region2: #{swin_layer_forward.2} parent=1 // loop_pre_header
      _
    $region3: #{swin_layer_forward.2} parent=1 // loop_header
      %s13 = sphi 0, %s17
      %p14 = scmp.ge.s32.totalorder %s13, 6
      %s20 = sphi 0, %s32
      %s21 = sphi 0, %s28
      %s22 = sphi 0, %s20
      %s23 = sphi 0, %s21
      %s24 = sphi 0, %s22
      %s25 = sphi 0, %s23
      %s37 = sphi 0, %s39
      %s40 = sphi 0, %s37
      %s41 = sphi 0, %s40
      %s57 = sphi 0, %s41
      %s63 = sphi 0, %s65
      %s66 = sphi 0, %s63
      %s67 = sphi 0, %s66
      %s83 = sphi 0, %s67
      %s87 = sphi 0, %s87
      %s89 = sphi 0, %s87
      %s90 = sphi 0, %s89
      %s104 = sphi 0, %s90
      %s108 = sphi 0, %s108
      %s110 = sphi 0, %s108
      %s111 = sphi 0, %s110
      %s125 = sphi 0, %s111
      %s129 = sphi 0, %s129
      %s131 = sphi 0, %s129
      %s132 = sphi 0, %s131
      %s146 = sphi 0, %s132
      %s150 = sphi 0, %s150
      %s152 = sphi 0, %s150
      %s153 = sphi 0, %s152
      %s167 = sphi 0, %s153
      %s171 = sphi 0, %s171
      %s173 = sphi 0, %s171
      %s174 = sphi 0, %s173
      %s188 = sphi 0, %s174
      %s196 = sphi 0, %s198
      %s199 = sphi 0, %s196
      %s200 = sphi 0, %s199
      %s216 = sphi 0, %s200
    $region4: #{swin_layer_forward.2} parent=1 // loop_header_branch
      %16 = sbr.rel (%p14) target = $region8
    $region5: #{swin_layer_forward.2} parent=1 // loop_body
      %s18 = ssub.s32 %s13, 1
      %s19 = ssub.s32 %s13, 2
      %s26 = sadd.s32 1, %s21
      %p27 = scmp.ge.s32.totalorder %s26, 2
      %s28 = scalar_select %p27, 0, %s26
      %s29 = sadd.s32 1, %s20
      %s30 = scalar_select %p27, %s29, %s20
      %p31 = scmp.ge.s32.totalorder %s30, 2
      %s32 = scalar_select %p31, 0, %s30
      %s33 = ssub.s32 %s20, %s32
      %s34 = ssub.s32 %s21, %s28
      %s35 = sor.u32 %s33, %s34
      %p36 = scmp.eq.s32.totalorder %s35, 0
      %s38 = sadd.s32 %s37, 1
      %s39 = scalar_select %p36, %s37, %s38
      %p42 = pneg %p36
      %p43 = scmp.eq.s32.totalorder %s13, 3
      %p44 = por %p42, %p43
      %p45 = scmp.ne.s32.totalorder %s37, %s40
      %p46 = scmp.eq.s32.totalorder %s13, 0
      %p47 = por %p45, %p46
      %p48 = scmp.ne.s32.totalorder %s37, %s40
      %p49 = scmp.eq.s32.totalorder %s18, 3
      %p50 = por %p48, %p49
      %p51 = scmp.ne.s32.totalorder %s40, %s41
      %p52 = scmp.eq.s32.totalorder %s18, 0
      %p53 = por %p51, %p52
      %p54 = scmp.ne.s32.totalorder %s40, %s41
      %p55 = scmp.eq.s32.totalorder %s19, 3
      %p56 = por %p54, %p55
      %p58 = scmp.ne.s32.totalorder %s41, %s57
      %p59 = scmp.eq.s32.totalorder %s19, 0
      %p60 = por %p58, %p59
      %s61 = ssub.s32 %s21, %s28
      %p62 = scmp.eq.s32.totalorder %s61, 0
      %s64 = sadd.s32 %s63, 1
      %s65 = scalar_select %p62, %s63, %s64
      %p68 = pneg %p62
      %p69 = scmp.eq.s32.totalorder %s13, 3
      %p70 = por %p68, %p69
      %p71 = scmp.ne.s32.totalorder %s63, %s66
      %p72 = scmp.eq.s32.totalorder %s13, 0
      %p73 = por %p71, %p72
      %p74 = scmp.ne.s32.totalorder %s63, %s66
      %p75 = scmp.eq.s32.totalorder %s18, 3
      %p76 = por %p74, %p75
      %p77 = scmp.ne.s32.totalorder %s66, %s67
      %p78 = scmp.eq.s32.totalorder %s18, 0
      %p79 = por %p77, %p78
      %p80 = scmp.ne.s32.totalorder %s66, %s67
      %p81 = scmp.eq.s32.totalorder %s19, 3
      %p82 = por %p80, %p81
      %p84 = scmp.ne.s32.totalorder %s67, %s83
      %p85 = scmp.eq.s32.totalorder %s19, 0
      %p86 = por %p84, %p85
      %s88 = sadd.s32 %s87, 1
      %p91 = scmp.eq.s32.totalorder %s13, 3
      %p92 = scmp.ne.s32.totalorder %s87, %s89
      %p93 = scmp.eq.s32.totalorder %s13, 0
      %p94 = por %p92, %p93
      %p95 = scmp.ne.s32.totalorder %s87, %s89
      %p96 = scmp.eq.s32.totalorder %s18, 3
      %p97 = por %p95, %p96
      %p98 = scmp.ne.s32.totalorder %s89, %s90
      %p99 = scmp.eq.s32.totalorder %s18, 0
      %p100 = por %p98, %p99
      %p101 = scmp.ne.s32.totalorder %s89, %s90
      %p102 = scmp.eq.s32.totalorder %s19, 3
      %p103 = por %p101, %p102
      %p105 = scmp.ne.s32.totalorder %s90, %s104
      %p106 = scmp.eq.s32.totalorder %s19, 0
      %p107 = por %p105, %p106
      %s109 = sadd.s32 %s108, 1
      %p112 = scmp.eq.s32.totalorder %s13, 3
      %p113 = scmp.ne.s32.totalorder %s108, %s110
      %p114 = scmp.eq.s32.totalorder %s13, 0
      %p115 = por %p113, %p114
      %p116 = scmp.ne.s32.totalorder %s108, %s110
      %p117 = scmp.eq.s32.totalorder %s18, 3
      %p118 = por %p116, %p117
      %p119 = scmp.ne.s32.totalorder %s110, %s111
      %p120 = scmp.eq.s32.totalorder %s18, 0
      %p121 = por %p119, %p120
      %p122 = scmp.ne.s32.totalorder %s110, %s111
      %p123 = scmp.eq.s32.totalorder %s19, 3
      %p124 = por %p122, %p123
      %p126 = scmp.ne.s32.totalorder %s111, %s125
      %p127 = scmp.eq.s32.totalorder %s19, 0
      %p128 = por %p126, %p127
      %s130 = sadd.s32 %s129, 1
      %p133 = scmp.eq.s32.totalorder %s13, 3
      %p134 = scmp.ne.s32.totalorder %s129, %s131
      %p135 = scmp.eq.s32.totalorder %s13, 0
      %p136 = por %p134, %p135
      %p137 = scmp.ne.s32.totalorder %s129, %s131
      %p138 = scmp.eq.s32.totalorder %s18, 3
      %p139 = por %p137, %p138
      %p140 = scmp.ne.s32.totalorder %s131, %s132
      %p141 = scmp.eq.s32.totalorder %s18, 0
      %p142 = por %p140, %p141
      %p143 = scmp.ne.s32.totalorder %s131, %s132
      %p144 = scmp.eq.s32.totalorder %s19, 3
      %p145 = por %p143, %p144
      %p147 = scmp.ne.s32.totalorder %s132, %s146
      %p148 = scmp.eq.s32.totalorder %s19, 0
      %p149 = por %p147, %p148
      %s151 = sadd.s32 %s150, 1
      %p154 = scmp.eq.s32.totalorder %s13, 3
      %p155 = scmp.ne.s32.totalorder %s150, %s152
      %p156 = scmp.eq.s32.totalorder %s13, 0
      %p157 = por %p155, %p156
      %p158 = scmp.ne.s32.totalorder %s150, %s152
      %p159 = scmp.eq.s32.totalorder %s18, 3
      %p160 = por %p158, %p159
      %p161 = scmp.ne.s32.totalorder %s152, %s153
      %p162 = scmp.eq.s32.totalorder %s18, 0
      %p163 = por %p161, %p162
      %p164 = scmp.ne.s32.totalorder %s152, %s153
      %p165 = scmp.eq.s32.totalorder %s19, 3
      %p166 = por %p164, %p165
      %p168 = scmp.ne.s32.totalorder %s153, %s167
      %p169 = scmp.eq.s32.totalorder %s19, 0
      %p170 = por %p168, %p169
      %s172 = sadd.s32 %s171, 1
      %p175 = scmp.eq.s32.totalorder %s13, 3
      %p176 = scmp.ne.s32.totalorder %s171, %s173
      %p177 = scmp.eq.s32.totalorder %s13, 0
      %p178 = por %p176, %p177
      %p179 = scmp.ne.s32.totalorder %s171, %s173
      %p180 = scmp.eq.s32.totalorder %s18, 3
      %p181 = por %p179, %p180
      %p182 = scmp.ne.s32.totalorder %s173, %s174
      %p183 = scmp.eq.s32.totalorder %s18, 0
      %p184 = por %p182, %p183
      %p185 = scmp.ne.s32.totalorder %s173, %s174
      %p186 = scmp.eq.s32.totalorder %s19, 3
      %p187 = por %p185, %p186
      %p189 = scmp.ne.s32.totalorder %s174, %s188
      %p190 = scmp.eq.s32.totalorder %s19, 0
      %p191 = por %p189, %p190
      %s192 = ssub.s32 %s20, %s32
      %s193 = ssub.s32 %s21, %s28
      %s194 = sor.u32 %s192, %s193
      %p195 = scmp.eq.s32.totalorder %s194, 0
      %s197 = sadd.s32 %s196, 1
      %s198 = scalar_select %p195, %s196, %s197
      %p201 = pneg %p195
      %p202 = scmp.eq.s32.totalorder %s13, 3
      %p203 = por %p201, %p202
      %p204 = scmp.ne.s32.totalorder %s196, %s199
      %p205 = scmp.eq.s32.totalorder %s13, 0
      %p206 = por %p204, %p205
      %p207 = scmp.ne.s32.totalorder %s196, %s199
      %p208 = scmp.eq.s32.totalorder %s18, 3
      %p209 = por %p207, %p208
      %p210 = scmp.ne.s32.totalorder %s199, %s200
      %p211 = scmp.eq.s32.totalorder %s18, 0
      %p212 = por %p210, %p211
      %p213 = scmp.ne.s32.totalorder %s199, %s200
      %p214 = scmp.eq.s32.totalorder %s19, 3
      %p215 = por %p213, %p214
      %p217 = scmp.ne.s32.totalorder %s200, %s216
      %p218 = scmp.eq.s32.totalorder %s19, 0
      %p219 = por %p217, %p218
      %p220 = scmp.le.s32.totalorder 1, %s13
      %p221 = scmp.lt.s32.totalorder %s13, 5
      %p222 = pnand %p220, %p221
      %p223 = pneg %p222
      // Predicated region
      $region9: #{swin_layer_forward.2} parent=5 // pred_check
        _
      $region10: #{swin_layer_forward.2} parent=5 // pred_check_branch
        %225 = sbr.rel (%p222) target = $region12
      $region11: #{swin_layer_forward.2} parent=5 // pred_region
        %s226 = ssub.s32 %s13, 1
        // Predicated region
        $region13: #{swin_layer_forward.2} parent=11 // pred_check
          %p227 = pneg %p100
        $region14: #{swin_layer_forward.2} parent=11 // pred_check_branch
          %229 = sbr.rel (%p227) target = $region16
        $region15: #{swin_layer_forward.2} parent=11 // pred_region
          _
        $region16: #{swin_layer_forward.2} parent=11 // pred_fallthru
          _
        // Predicated region
        $region17: #{swin_layer_forward.2} parent=11 // pred_check
          %p230 = pneg %p121
        $region18: #{swin_layer_forward.2} parent=11 // pred_check_branch
          %232 = sbr.rel (%p230) target = $region20
        $region19: #{swin_layer_forward.2} parent=11 // pred_region
          _
        $region20: #{swin_layer_forward.2} parent=11 // pred_fallthru
          _
        // Predicated region
        $region21: #{swin_layer_forward.2} parent=11 // pred_check
          %p233 = pneg %p142
        $region22: #{swin_layer_forward.2} parent=11 // pred_check_branch
          %235 = sbr.rel (%p233) target = $region24
        $region23: #{swin_layer_forward.2} parent=11 // pred_region
          _
        $region24: #{swin_layer_forward.2} parent=11 // pred_fallthru
          _
        // Predicated region
        $region25: #{swin_layer_forward.2} parent=11 // pred_check
          %p236 = pneg %p163
        $region26: #{swin_layer_forward.2} parent=11 // pred_check_branch
          %238 = sbr.rel (%p236) target = $region28
        $region27: #{swin_layer_forward.2} parent=11 // pred_region
          _
        $region28: #{swin_layer_forward.2} parent=11 // pred_fallthru
          _
        // Predicated region
        $region29: #{swin_layer_forward.2} parent=11 // pred_check
          %p239 = pneg %p184
        $region30: #{swin_layer_forward.2} parent=11 // pred_check_branch
          %241 = sbr.rel (%p239) target = $region32
        $region31: #{swin_layer_forward.2} parent=11 // pred_region
          _
        $region32: #{swin_layer_forward.2} parent=11 // pred_fallthru
          _
      $region12: #{swin_layer_forward.2} parent=5 // pred_fallthru
        _
      %p242 = scmp.lt.s32.totalorder %s13, 4
      // Predicated region
      $region33: #{swin_layer_forward.2} parent=5 // pred_check
        %p243 = pneg %p242
      $region34: #{swin_layer_forward.2} parent=5 // pred_check_branch
        %245 = sbr.rel (%p243) target = $region36
      $region35: #{swin_layer_forward.2} parent=5 // pred_region
        // Predicated region
        $region37: #{swin_layer_forward.2} parent=35 // pred_check
          %p246 = pneg %p47
        $region38: #{swin_layer_forward.2} parent=35 // pred_check_branch
          %248 = sbr.rel (%p246) target = $region40
        $region39: #{swin_layer_forward.2} parent=35 // pred_region
          %s249 = sand.u32 %s37, 1
          %s250 = sand.u32 %s37, 1
          %s251 = smul.addr %s250, 128
          %s252 = scalar_lea.vmem [#allocation2], %s251
          %s253 = smul.addr %s20, 32
          %s254 = sadd.s32 %s21, %s253
          %s255 = smul.addr %s254, 8
          %s256 = scalar_lea.vmem %s0, %s255
          // Predicated region
          $region41: #{swin_layer_forward.2} parent=39 // pred_check
            _
          $region42: #{swin_layer_forward.2} parent=39 // pred_check_branch
            %258 = sbr.rel (0) target = $region44
          $region43: #{swin_layer_forward.2} parent=39 // pred_region
            // Predicated region
            $region45: #{swin_layer_forward.2} parent=43 // pred_check
              _
            $region46: #{swin_layer_forward.2} parent=43 // pred_check_branch
              %260 = sbr.rel (0) target = $region48
            $region47: #{swin_layer_forward.2} parent=43 // pred_region
              // Predicated region
              $region60: #{swin_layer_forward.2} parent=47 // pred_check
                _
              $region61: #{swin_layer_forward.2} parent=47 // pred_check_branch
                %305 = sbr.rel (0) target = $region63
              $region62: #{swin_layer_forward.2} parent=47 // pred_region
                loop: start=0, step=1, limit=1
                $region64: #{swin_layer_forward.2} parent=62 // loop_pre_header
                  _
                $region65: #{swin_layer_forward.2} parent=62 // loop_header
                  %s307 = sphi 0, %s311
                  %p308 = scmp.ge.s32.totalorder %s307, 1
                  %s312 = sphi %s256, %s256
                  %s313 = sphi %s252, %s252
                $region66: #{swin_layer_forward.2} parent=62 // loop_header_branch
                  %310 = sbr.rel (%p308) target = $region70
                $region67: #{swin_layer_forward.2} parent=62 // loop_body
                  %v314 = vld [vmem:[%s312] sm:$0xff]
                  %315 = vst [vmem:[%s313] sm:$0xff] %v314
                  %v316 = vld [vmem:[%s312 + $0x10] sm:$0xff]
                  %317 = vst [vmem:[%s313 + $0x8] sm:$0xff] %v316
                  %v318 = vld [vmem:[%s312 + $0x20] sm:$0xff]
                  %319 = vst [vmem:[%s313 + $0x10] sm:$0xff] %v318
                  %v320 = vld [vmem:[%s312 + $0x30] sm:$0xff]
                  %321 = vst [vmem:[%s313 + $0x18] sm:$0xff] %v320
                  %v322 = vld [vmem:[%s312 + $0x40] sm:$0xff]
                  %323 = vst [vmem:[%s313 + $0x20] sm:$0xff] %v322
                  %v324 = vld [vmem:[%s312 + $0x50] sm:$0xff]
                  %325 = vst [vmem:[%s313 + $0x28] sm:$0xff] %v324
                  %v326 = vld [vmem:[%s312 + $0x60] sm:$0xff]
                  %327 = vst [vmem:[%s313 + $0x30] sm:$0xff] %v326
                  %v328 = vld [vmem:[%s312 + $0x70] sm:$0xff]
                  %329 = vst [vmem:[%s313 + $0x38] sm:$0xff] %v328
                  %v330 = vld [vmem:[%s312 + $0x80] sm:$0xff]
                  %331 = vst [vmem:[%s313 + $0x40] sm:$0xff] %v330
                  %v332 = vld [vmem:[%s312 + $0x90] sm:$0xff]
                  %333 = vst [vmem:[%s313 + $0x48] sm:$0xff] %v332
                  %v334 = vld [vmem:[%s312 + $0xa0] sm:$0xff]
                  %335 = vst [vmem:[%s313 + $0x50] sm:$0xff] %v334
                  %v336 = vld [vmem:[%s312 + $0xb0] sm:$0xff]
                  %337 = vst [vmem:[%s313 + $0x58] sm:$0xff] %v336
                  %v338 = vld [vmem:[%s312 + $0xc0] sm:$0xff]
                  %339 = vst [vmem:[%s313 + $0x60] sm:$0xff] %v338
                  %v340 = vld [vmem:[%s312 + $0xd0] sm:$0xff]
                  %341 = vst [vmem:[%s313 + $0x68] sm:$0xff] %v340
                  %v342 = vld [vmem:[%s312 + $0xe0] sm:$0xff]
                  %343 = vst [vmem:[%s313 + $0x70] sm:$0xff] %v342
                  %v344 = vld [vmem:[%s312 + $0xf0] sm:$0xff]
                  %345 = vst [vmem:[%s313 + $0x78] sm:$0xff] %v344
                $region68: #{swin_layer_forward.2} parent=62 // loop_footer
                  %s311 = sadd.s32 1, %s307
                $region69: #{swin_layer_forward.2} parent=62 // loop_footer_branch
                  %306 = sbr.rel target = $region65
                $region70: #{swin_layer_forward.2} parent=62 // loop_exit
                  _
              $region63: #{swin_layer_forward.2} parent=47 // pred_fallthru
                _
              // Predicated region
              $region71: #{swin_layer_forward.2} parent=47 // pred_check
                _
              $region72: #{swin_layer_forward.2} parent=47 // pred_check_branch
                %347 = sbr.rel target = $region74
              $region73: #{swin_layer_forward.2} parent=47 // pred_region
                _
              $region74: #{swin_layer_forward.2} parent=47 // pred_fallthru
                _
            $region48: #{swin_layer_forward.2} parent=43 // pred_fallthru
              _
            // Predicated region
            $region49: #{swin_layer_forward.2} parent=43 // pred_check
              _
            $region50: #{swin_layer_forward.2} parent=43 // pred_check_branch
              %262 = sbr.rel target = $region52
            $region51: #{swin_layer_forward.2} parent=43 // pred_region
              loop: start=0, step=1, limit=1
              $region53: #{swin_layer_forward.2} parent=51 // loop_pre_header
                _
              $region54: #{swin_layer_forward.2} parent=51 // loop_header
                %s265 = sphi 0, %s269
                %p266 = scmp.ge.s32.totalorder %s265, 1
                %s270 = sphi %s256, %s256
                %s271 = sphi %s252, %s252
              $region55: #{swin_layer_forward.2} parent=51 // loop_header_branch
                %268 = sbr.rel (%p266) target = $region59
              $region56: #{swin_layer_forward.2} parent=51 // loop_body
                %v272 = vld [vmem:[%s270] sm:$0xff]
                %273 = vst [vmem:[%s271] sm:$0xff] %v272
                %v274 = vld [vmem:[%s270 + $0x10] sm:$0xff]
                %275 = vst [vmem:[%s271 + $0x8] sm:$0xff] %v274
                %v276 = vld [vmem:[%s270 + $0x20] sm:$0xff]
                %277 = vst [vmem:[%s271 + $0x10] sm:$0xff] %v276
                %v278 = vld [vmem:[%s270 + $0x30] sm:$0xff]
                %279 = vst [vmem:[%s271 + $0x18] sm:$0xff] %v278
                %v280 = vld [vmem:[%s270 + $0x40] sm:$0xff]
                %281 = vst [vmem:[%s271 + $0x20] sm:$0xff] %v280
                %v282 = vld [vmem:[%s270 + $0x50] sm:$0xff]
                %283 = vst [vmem:[%s271 + $0x28] sm:$0xff] %v282
                %v284 = vld [vmem:[%s270 + $0x60] sm:$0xff]
                %285 = vst [vmem:[%s271 + $0x30] sm:$0xff] %v284
                %v286 = vld [vmem:[%s270 + $0x70] sm:$0xff]
                %287 = vst [vmem:[%s271 + $0x38] sm:$0xff] %v286
                %v288 = vld [vmem:[%s270 + $0x80] sm:$0xff]
                %289 = vst [vmem:[%s271 + $0x40] sm:$0xff] %v288
                %v290 = vld [vmem:[%s270 + $0x90] sm:$0xff]
                %291 = vst [vmem:[%s271 + $0x48] sm:$0xff] %v290
                %v292 = vld [vmem:[%s270 + $0xa0] sm:$0xff]
                %293 = vst [vmem:[%s271 + $0x50] sm:$0xff] %v292
                %v294 = vld [vmem:[%s270 + $0xb0] sm:$0xff]
                %295 = vst [vmem:[%s271 + $0x58] sm:$0xff] %v294
                %v296 = vld [vmem:[%s270 + $0xc0] sm:$0xff]
                %297 = vst [vmem:[%s271 + $0x60] sm:$0xff] %v296
                %v298 = vld [vmem:[%s270 + $0xd0] sm:$0xff]
                %299 = vst [vmem:[%s271 + $0x68] sm:$0xff] %v298
                %v300 = vld [vmem:[%s270 + $0xe0] sm:$0xff]
                %301 = vst [vmem:[%s271 + $0x70] sm:$0xff] %v300
                %v302 = vld [vmem:[%s270 + $0xf0] sm:$0xff]
                %303 = vst [vmem:[%s271 + $0x78] sm:$0xff] %v302
              $region57: #{swin_layer_forward.2} parent=51 // loop_footer
                %s269 = sadd.s32 1, %s265
              $region58: #{swin_layer_forward.2} parent=51 // loop_footer_branch
                %264 = sbr.rel target = $region54
              $region59: #{swin_layer_forward.2} parent=51 // loop_exit
                _
            $region52: #{swin_layer_forward.2} parent=43 // pred_fallthru
              _
          $region44: #{swin_layer_forward.2} parent=39 // pred_fallthru
            _
          %348 = vnop
        $region40: #{swin_layer_forward.2} parent=35 // pred_fallthru
          _
        // Predicated region
        $region75: #{swin_layer_forward.2} parent=35 // pred_check
          %p349 = pneg %p73
        $region76: #{swin_layer_forward.2} parent=35 // pred_check_branch
          %351 = sbr.rel (%p349) target = $region78
        $region77: #{swin_layer_forward.2} parent=35 // pred_region
          %p352 = scmp.lt.s32.totalorder %s21, 1
          %s353 = scalar_select %p352, %s21, 1
          %s354 = smul.addr %s353, 32
          %s355 = smul.addr %s354, 8
          %s356 = scalar_lea.vmem %s1, %s355
        $region78: #{swin_layer_forward.2} parent=35 // pred_fallthru
          _
      $region36: #{swin_layer_forward.2} parent=5 // pred_fallthru
        _
      %p357 = scmp.le.s32.totalorder 1, %s13
      %p358 = scmp.lt.s32.totalorder %s13, 5
      %p359 = pnand %p357, %p358
      %p360 = pneg %p359
      // Predicated region
      $region79: #{swin_layer_forward.2} parent=5 // pred_check
        _
      $region80: #{swin_layer_forward.2} parent=5 // pred_check_branch
        %362 = sbr.rel (%p359) target = $region82
      $region81: #{swin_layer_forward.2} parent=5 // pred_region
        %s363 = ssub.s32 %s13, 1
        %s364 = sand.u32 %s40, 1
        %s365 = sand.u32 %s40, 1
        %s366 = smul.addr %s365, 128
        %s367 = scalar_lea.vmem [#allocation2], %s366
        // Predicated region
        $region83: #{swin_layer_forward.2} parent=81 // pred_check
          %p368 = pneg %p53
        $region84: #{swin_layer_forward.2} parent=81 // pred_check_branch
          %370 = sbr.rel (%p368) target = $region86
        $region85: #{swin_layer_forward.2} parent=81 // pred_region
          _
        $region86: #{swin_layer_forward.2} parent=81 // pred_fallthru
          _
        %s371 = sand.u32 %s40, 1
        %s372 = sand.u32 %s40, 1
        %s373 = smul.addr %s372, 128
        %s374 = scalar_lea.vmem [#allocation2], %s373
        %p375 = pneg %p53
        %p376 = pneg %p50
        %p377 = scmp.lt.s32.totalorder %s23, 1
        %s378 = scalar_select %p377, %s23, 1
        %s379 = smul.addr %s378, 32
        %s380 = smul.addr %s379, 8
        %s381 = scalar_lea.vmem %s1, %s380
        %p382 = pneg %p79
        %p383 = pneg %p76
        %p384 = pneg %p100
        %p385 = pneg %p97
        %p386 = pneg %p121
        %p387 = pneg %p118
        %p388 = pneg %p142
        %p389 = pneg %p139
        %p390 = pneg %p163
        %p391 = pneg %p160
        %p392 = pneg %p184
        %p393 = pneg %p181
        %p394 = pneg %p212
        %p395 = pneg %p209
        %s396 = sand.u32 %s199, 1
        %s397 = sand.u32 %s199, 1
        %s398 = smul.addr %s397, 128
        %s399 = scalar_lea.vmem [#allocation3], %s398
        %p400 = scmp.lt.s32.totalorder %s23, 1
        %s401 = scalar_select %p400, %s23, 1
        %s402 = smul.addr %s401, 32
        %s403 = smul.addr %s402, 8
        %s404 = scalar_lea.vmem %s1, %s403
        %v405 = vld [vmem:[%s367] sm:$0xff]
        %v406 = vld [vmem:[%s367 + $0x8] sm:$0xff]
        %v407 = vld [vmem:[%s367 + $0x10] sm:$0xff]
        %v408 = vld [vmem:[%s367 + $0x18] sm:$0xff]
        %v409 = vld [vmem:[%s367 + $0x20] sm:$0xff]
        %v410 = vld [vmem:[%s367 + $0x28] sm:$0xff]
        %v411 = vld [vmem:[%s367 + $0x30] sm:$0xff]
        %v412 = vld [vmem:[%s367 + $0x38] sm:$0xff]
        %v413 = vld [vmem:[%s367 + $0x40] sm:$0xff]
        %v414 = vld [vmem:[%s367 + $0x48] sm:$0xff]
        %v415 = vld [vmem:[%s367 + $0x50] sm:$0xff]
        %v416 = vld [vmem:[%s367 + $0x58] sm:$0xff]
        %v417 = vld [vmem:[%s367 + $0x60] sm:$0xff]
        %v418 = vld [vmem:[%s367 + $0x68] sm:$0xff]
        %v419 = vld [vmem:[%s367 + $0x70] sm:$0xff]
        %v420 = vld [vmem:[%s367 + $0x78] sm:$0xff]
        %vm421 = vcmask 261120
        %v422 = vsel %vm421, %v405, 0.0
        %423 = vadd.xlane.f32.xlu0 %v422
        %v424 = vpop.xlane.xlu0 %423
        %v425 = vsel %vm421, %v406, 0.0
        %426 = vadd.xlane.f32.xlu0 %v425
        %v427 = vpop.xlane.xlu0 %426
        %v428 = vsel %vm421, %v407, 0.0
        %429 = vadd.xlane.f32.xlu0 %v428
        %v430 = vpop.xlane.xlu0 %429
        %v431 = vsel %vm421, %v408, 0.0
        %432 = vadd.xlane.f32.xlu0 %v431
        %v433 = vpop.xlane.xlu0 %432
        %v434 = vsel %vm421, %v409, 0.0
        %435 = vadd.xlane.f32.xlu0 %v434
        %v436 = vpop.xlane.xlu0 %435
        %v437 = vsel %vm421, %v410, 0.0
        %438 = vadd.xlane.f32.xlu0 %v437
        %v439 = vpop.xlane.xlu0 %438
        %v440 = vsel %vm421, %v411, 0.0
        %441 = vadd.xlane.f32.xlu0 %v440
        %v442 = vpop.xlane.xlu0 %441
        %v443 = vsel %vm421, %v412, 0.0
        %444 = vadd.xlane.f32.xlu0 %v443
        %v445 = vpop.xlane.xlu0 %444
        %v446 = vsel %vm421, %v413, 0.0
        %447 = vadd.xlane.f32.xlu0 %v446
        %v448 = vpop.xlane.xlu0 %447
        %v449 = vsel %vm421, %v414, 0.0
        %450 = vadd.xlane.f32.xlu0 %v449
        %v451 = vpop.xlane.xlu0 %450
        %v452 = vsel %vm421, %v415, 0.0
        %453 = vadd.xlane.f32.xlu0 %v452
        %v454 = vpop.xlane.xlu0 %453
        %v455 = vsel %vm421, %v416, 0.0
        %456 = vadd.xlane.f32.xlu0 %v455
        %v457 = vpop.xlane.xlu0 %456
        %v458 = vsel %vm421, %v417, 0.0
        %459 = vadd.xlane.f32.xlu0 %v458
        %v460 = vpop.xlane.xlu0 %459
        %v461 = vsel %vm421, %v418, 0.0
        %462 = vadd.xlane.f32.xlu0 %v461
        %v463 = vpop.xlane.xlu0 %462
        %v464 = vsel %vm421, %v419, 0.0
        %465 = vadd.xlane.f32.xlu0 %v464
        %v466 = vpop.xlane.xlu0 %465
        %v467 = vsel %vm421, %v420, 0.0
        %468 = vadd.xlane.f32.xlu0 %v467
        %v469 = vpop.xlane.xlu0 %468
        %v470 = vrcp.pop 32.0
        %v471 = vmul.f32 %v424, %v470
        %v472 = vmul.f32 %v427, %v470
        %v473 = vmul.f32 %v430, %v470
        %v474 = vmul.f32 %v433, %v470
        %v475 = vmul.f32 %v436, %v470
        %v476 = vmul.f32 %v439, %v470
        %v477 = vmul.f32 %v442, %v470
        %v478 = vmul.f32 %v445, %v470
        %v479 = vmul.f32 %v448, %v470
        %v480 = vmul.f32 %v451, %v470
        %v481 = vmul.f32 %v454, %v470
        %v482 = vmul.f32 %v457, %v470
        %v483 = vmul.f32 %v460, %v470
        %v484 = vmul.f32 %v463, %v470
        %v485 = vmul.f32 %v466, %v470
        %v486 = vmul.f32 %v469, %v470
        %v487 = vsub.f32 %v405, %v471
        %v488 = vsub.f32 %v406, %v472
        %v489 = vsub.f32 %v407, %v473
        %v490 = vsub.f32 %v408, %v474
        %v491 = vsub.f32 %v409, %v475
        %v492 = vsub.f32 %v410, %v476
        %v493 = vsub.f32 %v411, %v477
        %v494 = vsub.f32 %v412, %v478
        %v495 = vsub.f32 %v413, %v479
        %v496 = vsub.f32 %v414, %v480
        %v497 = vsub.f32 %v415, %v481
        %v498 = vsub.f32 %v416, %v482
        %v499 = vsub.f32 %v417, %v483
        %v500 = vsub.f32 %v418, %v484
        %v501 = vsub.f32 %v419, %v485
        %v502 = vsub.f32 %v420, %v486
        %v503 = vmul.f32 %v487, %v487
        %v504 = vmul.f32 %v488, %v488
        %v505 = vmul.f32 %v489, %v489
        %v506 = vmul.f32 %v490, %v490
        %v507 = vmul.f32 %v491, %v491
        %v508 = vmul.f32 %v492, %v492
        %v509 = vmul.f32 %v493, %v493
        %v510 = vmul.f32 %v494, %v494
        %v511 = vmul.f32 %v495, %v495
        %v512 = vmul.f32 %v496, %v496
        %v513 = vmul.f32 %v497, %v497
        %v514 = vmul.f32 %v498, %v498
        %v515 = vmul.f32 %v499, %v499
        %v516 = vmul.f32 %v500, %v500
        %v517 = vmul.f32 %v501, %v501
        %v518 = vmul.f32 %v502, %v502
        %v519 = vsel %vm421, %v503, 0.0
        %520 = vadd.xlane.f32.xlu0 %v519
        %v521 = vpop.xlane.xlu0 %520
        %v522 = vsel %vm421, %v504, 0.0
        %523 = vadd.xlane.f32.xlu0 %v522
        %v524 = vpop.xlane.xlu0 %523
        %v525 = vsel %vm421, %v505, 0.0
        %526 = vadd.xlane.f32.xlu0 %v525
        %v527 = vpop.xlane.xlu0 %526
        %v528 = vsel %vm421, %v506, 0.0
        %529 = vadd.xlane.f32.xlu0 %v528
        %v530 = vpop.xlane.xlu0 %529
        %v531 = vsel %vm421, %v507, 0.0
        %532 = vadd.xlane.f32.xlu0 %v531
        %v533 = vpop.xlane.xlu0 %532
        %v534 = vsel %vm421, %v508, 0.0
        %535 = vadd.xlane.f32.xlu0 %v534
        %v536 = vpop.xlane.xlu0 %535
        %v537 = vsel %vm421, %v509, 0.0
        %538 = vadd.xlane.f32.xlu0 %v537
        %v539 = vpop.xlane.xlu0 %538
        %v540 = vsel %vm421, %v510, 0.0
        %541 = vadd.xlane.f32.xlu0 %v540
        %v542 = vpop.xlane.xlu0 %541
        %v543 = vsel %vm421, %v511, 0.0
        %544 = vadd.xlane.f32.xlu0 %v543
        %v545 = vpop.xlane.xlu0 %544
        %v546 = vsel %vm421, %v512, 0.0
        %547 = vadd.xlane.f32.xlu0 %v546
        %v548 = vpop.xlane.xlu0 %547
        %v549 = vsel %vm421, %v513, 0.0
        %550 = vadd.xlane.f32.xlu0 %v549
        %v551 = vpop.xlane.xlu0 %550
        %v552 = vsel %vm421, %v514, 0.0
        %553 = vadd.xlane.f32.xlu0 %v552
        %v554 = vpop.xlane.xlu0 %553
        %v555 = vsel %vm421, %v515, 0.0
        %556 = vadd.xlane.f32.xlu0 %v555
        %v557 = vpop.xlane.xlu0 %556
        %v558 = vsel %vm421, %v516, 0.0
        %559 = vadd.xlane.f32.xlu0 %v558
        %v560 = vpop.xlane.xlu0 %559
        %v561 = vsel %vm421, %v517, 0.0
        %562 = vadd.xlane.f32.xlu0 %v561
        %v563 = vpop.xlane.xlu0 %562
        %v564 = vsel %vm421, %v518, 0.0
        %565 = vadd.xlane.f32.xlu0 %v564
        %v566 = vpop.xlane.xlu0 %565
        %v567 = vmul.f32 %v521, %v470
        %v568 = vmul.f32 %v524, %v470
        %v569 = vmul.f32 %v527, %v470
        %v570 = vmul.f32 %v530, %v470
        %v571 = vmul.f32 %v533, %v470
        %v572 = vmul.f32 %v536, %v470
        %v573 = vmul.f32 %v539, %v470
        %v574 = vmul.f32 %v542, %v470
        %v575 = vmul.f32 %v545, %v470
        %v576 = vmul.f32 %v548, %v470
        %v577 = vmul.f32 %v551, %v470
        %v578 = vmul.f32 %v554, %v470
        %v579 = vmul.f32 %v557, %v470
        %v580 = vmul.f32 %v560, %v470
        %v581 = vmul.f32 %v563, %v470
        %v582 = vmul.f32 %v566, %v470
        %v583 = vadd.f32 %v567, 1e-05
        %v584 = vadd.f32 %v568, 1e-05
        %v585 = vadd.f32 %v569, 1e-05
        %v586 = vadd.f32 %v570, 1e-05
        %v587 = vadd.f32 %v571, 1e-05
        %v588 = vadd.f32 %v572, 1e-05
        %v589 = vadd.f32 %v573, 1e-05
        %v590 = vadd.f32 %v574, 1e-05
        %v591 = vadd.f32 %v575, 1e-05
        %v592 = vadd.f32 %v576, 1e-05
        %v593 = vadd.f32 %v577, 1e-05
        %v594 = vadd.f32 %v578, 1e-05
        %v595 = vadd.f32 %v579, 1e-05
        %v596 = vadd.f32 %v580, 1e-05
        %v597 = vadd.f32 %v581, 1e-05
        %v598 = vadd.f32 %v582, 1e-05
        %v599 = vrsqrt.pop %v583
        %v600 = vrsqrt.pop %v584
        %v601 = vrsqrt.pop %v585
        %v602 = vrsqrt.pop %v586
        %v603 = vrsqrt.pop %v587
        %v604 = vrsqrt.pop %v588
        %v605 = vrsqrt.pop %v589
        %v606 = vrsqrt.pop %v590
        %v607 = vrsqrt.pop %v591
        %v608 = vrsqrt.pop %v592
        %v609 = vrsqrt.pop %v593
        %v610 = vrsqrt.pop %v594
        %v611 = vrsqrt.pop %v595
        %v612 = vrsqrt.pop %v596
        %v613 = vrsqrt.pop %v597
        %v614 = vrsqrt.pop %v598
        %v615 = vmul.f32 %v487, %v599
        %v616 = vmul.f32 %v488, %v600
        %v617 = vmul.f32 %v489, %v601
        %v618 = vmul.f32 %v490, %v602
        %v619 = vmul.f32 %v491, %v603
        %v620 = vmul.f32 %v492, %v604
        %v621 = vmul.f32 %v493, %v605
        %v622 = vmul.f32 %v494, %v606
        %v623 = vmul.f32 %v495, %v607
        %v624 = vmul.f32 %v496, %v608
        %v625 = vmul.f32 %v497, %v609
        %v626 = vmul.f32 %v498, %v610
        %v627 = vmul.f32 %v499, %v611
        %v628 = vmul.f32 %v500, %v612
        %v629 = vmul.f32 %v501, %v613
        %v630 = vmul.f32 %v502, %v614
        %v631 = vld [vmem:[%s2] sm:$0x1]
        %v633 = vlaneseq
        %v634 = vshrl.u32 %v633, 7
        %v635 = vsub.s32 0, %v634
        %v636 = vrot.slane %v631, %v635
        %v638 = vmul.f32 %v615, %v636
        %v639 = vmul.f32 %v616, %v636
        %v640 = vmul.f32 %v617, %v636
        %v641 = vmul.f32 %v618, %v636
        %v642 = vmul.f32 %v619, %v636
        %v643 = vmul.f32 %v620, %v636
        %v644 = vmul.f32 %v621, %v636
        %v645 = vmul.f32 %v622, %v636
        %v646 = vmul.f32 %v623, %v636
        %v647 = vmul.f32 %v624, %v636
        %v648 = vmul.f32 %v625, %v636
        %v649 = vmul.f32 %v626, %v636
        %v650 = vmul.f32 %v627, %v636
        %v651 = vmul.f32 %v628, %v636
        %v652 = vmul.f32 %v629, %v636
        %v653 = vmul.f32 %v630, %v636
        %v654 = vld [vmem:[%s3] sm:$0x1]
        %v656 = vlaneseq
        %v657 = vshrl.u32 %v656, 7
        %v658 = vsub.s32 0, %v657
        %v659 = vrot.slane %v654, %v658
        %v661 = vadd.f32 %v638, %v659
        %v662 = vadd.f32 %v639, %v659
        %v663 = vadd.f32 %v640, %v659
        %v664 = vadd.f32 %v641, %v659
        %v665 = vadd.f32 %v642, %v659
        %v666 = vadd.f32 %v643, %v659
        %v667 = vadd.f32 %v644, %v659
        %v668 = vadd.f32 %v645, %v659
        %v669 = vadd.f32 %v646, %v659
        %v670 = vadd.f32 %v647, %v659
        %v671 = vadd.f32 %v648, %v659
        %v672 = vadd.f32 %v649, %v659
        %v673 = vadd.f32 %v650, %v659
        %v674 = vadd.f32 %v651, %v659
        %v675 = vadd.f32 %v652, %v659
        %v676 = vadd.f32 %v653, %v659
        %v677 = vld [vmem:[%s4] sm:$0xff]
        %v678 = vld [vmem:[%s4 + $0x8] sm:$0xff]
        %v679 = vld [vmem:[%s4 + $0x10] sm:$0xff]
        %v680 = vld [vmem:[%s4 + $0x18] sm:$0xff]
        %v682 = vsel %vm421, %v661, 0
        %v685 = vsel %vm421, %v662, 0
        %v688 = vsel %vm421, %v663, 0
        %v691 = vsel %vm421, %v664, 0
        %v694 = vsel %vm421, %v665, 0
        %v697 = vsel %vm421, %v666, 0
        %v700 = vsel %vm421, %v667, 0
        %v703 = vsel %vm421, %v668, 0
        %v706 = vsel %vm421, %v669, 0
        %v709 = vsel %vm421, %v670, 0
        %v712 = vsel %vm421, %v671, 0
        %v715 = vsel %vm421, %v672, 0
        %v718 = vsel %vm421, %v673, 0
        %v721 = vsel %vm421, %v674, 0
        %v724 = vsel %vm421, %v675, 0
        %v727 = vsel %vm421, %v676, 0
        %729 = vmatprep.subr.mxu0 0.0
        %730 = vmatpush1.msra.mxu0 %v677
        %731 = vmatprep.subr.mxu0 0.0
        %732 = vmatpush1.msra.mxu0 %v678
        %733 = vmatprep.subr.mxu0 0.0
        %734 = vmatpush1.msra.mxu0 %v679
        %735 = vmatprep.subr.mxu0 0.0
        %736 = vmatpush1.msra.mxu0 %v680
        %737 = vmatprep.subr.mxu0 0.0
        %738 = vmatpush1.msra.mxu0 0.0
        %739 = vmatprep.subr.mxu0 0.0
        %740 = vmatpush1.msra.mxu0 0.0
        %741 = vmatprep.subr.mxu0 0.0
        %742 = vmatpush1.msra.mxu0 0.0
        %743 = vmatprep.subr.mxu0 0.0
        %744 = vmatpush1.msra.mxu0 0.0
        %745 = vmatprep.subr.mxu0 0.0
        %746 = vmatpush1.msra.mxu0 0.0
        %747 = vmatprep.subr.mxu0 0.0
        %748 = vmatpush1.msra.mxu0 0.0
        %749 = vmatprep.subr.mxu0 0.0
        %750 = vmatpush1.msra.mxu0 0.0
        %751 = vmatprep.subr.mxu0 0.0
        %752 = vmatpush1.msra.mxu0 0.0
        %753 = vmatprep.subr.mxu0 0.0
        %754 = vmatpush1.msra.mxu0 0.0
        %755 = vmatprep.subr.mxu0 0.0
        %756 = vmatpush1.msra.mxu0 0.0
        %757 = vmatprep.subr.mxu0 0.0
        %758 = vmatpush1.msra.mxu0 0.0
        %759 = vmatprep.subr.mxu0 0.0
        %760 = vmatpush1.msra.mxu0 0.0
        %761 = vmatprep.subr.mxu0 0.0
        %762 = vmatpush1.msra.mxu0 0.0
        %763 = vmatprep.subr.mxu0 0.0
        %764 = vmatpush1.msra.mxu0 0.0
        %765 = vmatprep.subr.mxu0 0.0
        %766 = vmatpush1.msra.mxu0 0.0
        %767 = vmatprep.subr.mxu0 0.0
        %768 = vmatpush1.msra.mxu0 0.0
        %769 = vmatprep.subr.mxu0 0.0
        %770 = vmatpush1.msra.mxu0 0.0
        %771 = vmatprep.subr.mxu0 0.0
        %772 = vmatpush1.msra.mxu0 0.0
        %773 = vmatprep.subr.mxu0 0.0
        %774 = vmatpush1.msra.mxu0 0.0
        %775 = vmatprep.subr.mxu0 0.0
        %776 = vmatpush1.msra.mxu0 0.0
        %777 = vmatprep.subr.mxu0 0.0
        %778 = vmatpush1.msra.mxu0 0.0
        %779 = vmatprep.subr.mxu0 0.0
        %780 = vmatpush1.msra.mxu0 0.0
        %781 = vmatprep.subr.mxu0 0.0
        %782 = vmatpush1.msra.mxu0 0.0
        %783 = vmatprep.subr.mxu0 0.0
        %784 = vmatpush1.msra.mxu0 0.0
        %785 = vmatprep.subr.mxu0 0.0
        %786 = vmatpush1.msra.mxu0 0.0
        %787 = vmatprep.subr.mxu0 0.0
        %788 = vmatpush1.msra.mxu0 0.0
        %789 = vmatprep.subr.mxu0 0.0
        %790 = vmatpush1.msra.mxu0 0.0
        %791 = vmatprep.subr.mxu0 0.0
        %792 = vmatpush1.msra.mxu0 0.0
        %793 = vmatprep.mubr.f32.mxu0 0.0
        %794 = vmatmul.mubr.f32.gmra.mrb[0].mxu0 %v682
        %v795 = vpop.f32.mrb[0].mxu0
        %v796 = vadd.f32 0.0, %v795
        %v797 = vpop.f32.mrb[0].mxu0
        %798 = vmatprep.mubr.f32.mxu0 0.0
        %799 = vmatmul.mubr.f32.gmra.mrb[0].mxu0 %v685
        %v800 = vpop.f32.mrb[0].mxu0
        %v801 = vadd.f32 0.0, %v800
        %v802 = vpop.f32.mrb[0].mxu0
        %803 = vmatprep.mubr.f32.mxu0 0.0
        %804 = vmatmul.mubr.f32.gmra.mrb[0].mxu0 %v688
        %v805 = vpop.f32.mrb[0].mxu0
        %v806 = vadd.f32 0.0, %v805
        %v807 = vpop.f32.mrb[0].mxu0
        %808 = vmatprep.mubr.f32.mxu0 0.0
        %809 = vmatmul.mubr.f32.gmra.mrb[0].mxu0 %v691
        %v810 = vpop.f32.mrb[0].mxu0
        %v811 = vadd.f32 0.0, %v810
        %v812 = vpop.f32.mrb[0].mxu0
        %813 = vmatprep.mubr.f32.mxu0 0.0
        %814 = vmatmul.mubr.f32.gmra.mrb[0].mxu0 %v694
        %v815 = vpop.f32.mrb[0].mxu0
        %v816 = vadd.f32 0.0, %v815
        %v817 = vpop.f32.mrb[0].mxu0
        %818 = vmatprep.mubr.f32.mxu0 0.0
        %819 = vmatmul.mubr.f32.gmra.mrb[0].mxu0 %v697
        %v820 = vpop.f32.mrb[0].mxu0
        %v821 = vadd.f32 0.0, %v820
        %v822 = vpop.f32.mrb[0].mxu0
        %823 = vmatprep.mubr.f32.mxu0 0.0
        %824 = vmatmul.mubr.f32.gmra.mrb[0].mxu0 %v700
        %v825 = vpop.f32.mrb[0].mxu0
        %v826 = vadd.f32 0.0, %v825
        %v827 = vpop.f32.mrb[0].mxu0
        %828 = vmatprep.mubr.f32.mxu0 0.0
        %829 = vmatmul.mubr.f32.gmra.mrb[0].mxu0 %v703
        %v830 = vpop.f32.mrb[0].mxu0
        %v831 = vadd.f32 0.0, %v830
        %v832 = vpop.f32.mrb[0].mxu0
        %833 = vmatprep.mubr.f32.mxu0 0.0
        %834 = vmatmul.mubr.f32.gmra.mrb[0].mxu0 %v706
        %v835 = vpop.f32.mrb[0].mxu0
        %v836 = vadd.f32 0.0, %v835
        %v837 = vpop.f32.mrb[0].mxu0
        %838 = vmatprep.mubr.f32.mxu0 0.0
        %839 = vmatmul.mubr.f32.gmra.mrb[0].mxu0 %v709
        %v840 = vpop.f32.mrb[0].mxu0
        %v841 = vadd.f32 0.0, %v840
        %v842 = vpop.f32.mrb[0].mxu0
        %843 = vmatprep.mubr.f32.mxu0 0.0
        %844 = vmatmul.mubr.f32.gmra.mrb[0].mxu0 %v712
        %v845 = vpop.f32.mrb[0].mxu0
        %v846 = vadd.f32 0.0, %v845
        %v847 = vpop.f32.mrb[0].mxu0
        %848 = vmatprep.mubr.f32.mxu0 0.0
        %849 = vmatmul.mubr.f32.gmra.mrb[0].mxu0 %v715
        %v850 = vpop.f32.mrb[0].mxu0
        %v851 = vadd.f32 0.0, %v850
        %v852 = vpop.f32.mrb[0].mxu0
        %853 = vmatprep.mubr.f32.mxu0 0.0
        %854 = vmatmul.mubr.f32.gmra.mrb[0].mxu0 %v718
        %v855 = vpop.f32.mrb[0].mxu0
        %v856 = vadd.f32 0.0, %v855
        %v857 = vpop.f32.mrb[0].mxu0
        %858 = vmatprep.mubr.f32.mxu0 0.0
        %859 = vmatmul.mubr.f32.gmra.mrb[0].mxu0 %v721
        %v860 = vpop.f32.mrb[0].mxu0
        %v861 = vadd.f32 0.0, %v860
        %v862 = vpop.f32.mrb[0].mxu0
        %863 = vmatprep.mubr.f32.mxu0 0.0
        %864 = vmatmul.mubr.f32.gmra.mrb[0].mxu0 %v724
        %v865 = vpop.f32.mrb[0].mxu0
        %v866 = vadd.f32 0.0, %v865
        %v867 = vpop.f32.mrb[0].mxu0
        %868 = vmatprep.mubr.f32.mxu0 0.0
        %869 = vmatmul.mubr.f32.gmra.mrb[0].mxu0 %v727
        %v870 = vpop.f32.mrb[0].mxu0
        %v871 = vadd.f32 0.0, %v870
        %v872 = vpop.f32.mrb[0].mxu0
        %873 = vdwg.mxu0
        %v874 = vld [vmem:[%s404] sm:$0xff]
        %v875 = vld [vmem:[%s404 + $0x8] sm:$0xff]
        %v876 = vld [vmem:[%s404 + $0x10] sm:$0xff]
        %v877 = vld [vmem:[%s404 + $0x18] sm:$0xff]
        %v878 = vld [vmem:[%s404 + $0x20] sm:$0xff]
        %v879 = vld [vmem:[%s404 + $0x28] sm:$0xff]
        %v880 = vld [vmem:[%s404 + $0x30] sm:$0xff]
        %v881 = vld [vmem:[%s404 + $0x38] sm:$0xff]
        %v882 = vld [vmem:[%s404 + $0x40] sm:$0xff]
        %v883 = vld [vmem:[%s404 + $0x48] sm:$0xff]
        %v884 = vld [vmem:[%s404 + $0x50] sm:$0xff]
        %v885 = vld [vmem:[%s404 + $0x58] sm:$0xff]
        %v886 = vld [vmem:[%s404 + $0x60] sm:$0xff]
        %v887 = vld [vmem:[%s404 + $0x68] sm:$0xff]
        %v888 = vld [vmem:[%s404 + $0x70] sm:$0xff]
        %v889 = vld [vmem:[%s404 + $0x78] sm:$0xff]
        %v890 = vld [vmem:[%s404 + $0x80] sm:$0xff]
        %v891 = vld [vmem:[%s404 + $0x88] sm:$0xff]
        %v892 = vld [vmem:[%s404 + $0x90] sm:$0xff]
        %v893 = vld [vmem:[%s404 + $0x98] sm:$0xff]
        %v894 = vld [vmem:[%s404 + $0xa0] sm:$0xff]
        %v895 = vld [vmem:[%s404 + $0xa8] sm:$0xff]
        %v896 = vld [vmem:[%s404 + $0xb0] sm:$0xff]
        %v897 = vld [vmem:[%s404 + $0xb8] sm:$0xff]
        %v898 = vld [vmem:[%s404 + $0xc0] sm:$0xff]
        %v899 = vld [vmem:[%s404 + $0xc8] sm:$0xff]
        %v900 = vld [vmem:[%s404 + $0xd0] sm:$0xff]
        %v901 = vld [vmem:[%s404 + $0xd8] sm:$0xff]
        %v902 = vld [vmem:[%s404 + $0xe0] sm:$0xff]
        %v903 = vld [vmem:[%s404 + $0xe8] sm:$0xff]
        %v904 = vld [vmem:[%s404 + $0xf0] sm:$0xff]
        %v905 = vld [vmem:[%s404 + $0xf8] sm:$0xff]
        %v906 = vld [vmem:[%s5] sm:$0xff]
        %v907 = vld [vmem:[%s5 + $0x8] sm:$0xff]
        %v908 = vld [vmem:[%s5 + $0x10] sm:$0xff]
        %v909 = vld [vmem:[%s5 + $0x18] sm:$0xff]
        %v910 = vmul.f32 %v796, 0.25
        %v911 = vmul.f32 %v801, 0.25
        %v912 = vmul.f32 %v806, 0.25
        %v913 = vmul.f32 %v811, 0.25
        %v914 = vmul.f32 %v816, 0.25
        %v915 = vmul.f32 %v821, 0.25
        %v916 = vmul.f32 %v826, 0.25
        %v917 = vmul.f32 %v831, 0.25
        %v918 = vmul.f32 %v836, 0.25
        %v919 = vmul.f32 %v841, 0.25
        %v920 = vmul.f32 %v846, 0.25
        %v921 = vmul.f32 %v851, 0.25
        %v922 = vmul.f32 %v856, 0.25
        %v923 = vmul.f32 %v861, 0.25
        %v924 = vmul.f32 %v866, 0.25
        %v925 = vmul.f32 %v871, 0.25
        %934 = vrot.lane.b32.xlu0 %v796, 96
        %v935 = vpop.permute.xlu0 %934
        %936 = vrot.lane.b32.xlu0 %v801, 96
        %v937 = vpop.permute.xlu0 %936
        %938 = vrot.lane.b32.xlu0 %v806, 96
        %v939 = vpop.permute.xlu0 %938
        %940 = vrot.lane.b32.xlu0 %v811, 96
        %v941 = vpop.permute.xlu0 %940
        %942 = vrot.lane.b32.xlu0 %v816, 96
        %v943 = vpop.permute.xlu0 %942
        %944 = vrot.lane.b32.xlu0 %v821, 96
        %v945 = vpop.permute.xlu0 %944
        %946 = vrot.lane.b32.xlu0 %v826, 96
        %v947 = vpop.permute.xlu0 %946
        %948 = vrot.lane.b32.xlu0 %v831, 96
        %v949 = vpop.permute.xlu0 %948
        %vm950 = vcmask 130048
        %v952 = vsel %vm950, %v910, 0
        %v955 = vsel %vm950, %v911, 0
        %v958 = vsel %vm950, %v912, 0
        %v961 = vsel %vm950, %v913, 0
        %v964 = vsel %vm950, %v914, 0
        %v967 = vsel %vm950, %v915, 0
        %v970 = vsel %vm950, %v916, 0
        %v973 = vsel %vm950, %v917, 0
        %v975 = vsel %vm950, %v935, 0
        %v977 = vsel %vm950, %v937, 0
        %v979 = vsel %vm950, %v939, 0
        %v981 = vsel %vm950, %v941, 0
        %v983 = vsel %vm950, %v943, 0
        %v985 = vsel %vm950, %v945, 0
        %v987 = vsel %vm950, %v947, 0
        %v989 = vsel %vm950, %v949, 0
        %991 = vmatprep.subr.mxu0 0.0
        %992 = vmatpush1.xpose.msra.mxu0 %v975
        %993 = vmatprep.subr.mxu0 0.0
        %994 = vmatpush1.xpose.msra.mxu0 %v977
        %995 = vmatprep.subr.mxu0 0.0
        %996 = vmatpush1.xpose.msra.mxu0 %v979
        %997 = vmatprep.subr.mxu0 0.0
        %998 = vmatpush1.xpose.msra.mxu0 %v981
        %999 = vmatprep.subr.mxu0 0.0
        %1000 = vmatpush1.xpose.msra.mxu0 %v983
        %1001 = vmatprep.subr.mxu0 0.0
        %1002 = vmatpush1.xpose.msra.mxu0 %v985
        %1003 = vmatprep.subr.mxu0 0.0
        %1004 = vmatpush1.xpose.msra.mxu0 %v987
        %1005 = vmatprep.subr.mxu0 0.0
        %1006 = vmatpush1.xpose.msra.mxu0 %v989
        %1007 = vmatprep.subr.mxu0 0.0
        %1008 = vmatpush1.xpose.msra.mxu0 0.0
        %1009 = vmatprep.subr.mxu0 0.0
        %1010 = vmatpush1.xpose.msra.mxu0 0.0
        %1011 = vmatprep.subr.mxu0 0.0
        %1012 = vmatpush1.xpose.msra.mxu0 0.0
        %1013 = vmatprep.subr.mxu0 0.0
        %1014 = vmatpush1.xpose.msra.mxu0 0.0
        %1015 = vmatprep.subr.mxu0 0.0
        %1016 = vmatpush1.xpose.msra.mxu0 0.0
        %1017 = vmatprep.subr.mxu0 0.0
        %1018 = vmatpush1.xpose.msra.mxu0 0.0
        %1019 = vmatprep.subr.mxu0 0.0
        %1020 = vmatpush1.xpose.msra.mxu0 0.0
        %1021 = vmatprep.subr.mxu0 0.0
        %1022 = vmatpush1.xpose.msra.mxu0 0.0
        %1023 = vmatprep.subr.mxu0 0.0
        %1024 = vmatpush1.xpose.msra.mxu0 0.0
        %1025 = vmatprep.subr.mxu0 0.0
        %1026 = vmatpush1.xpose.msra.mxu0 0.0
        %1027 = vmatprep.subr.mxu0 0.0
        %1028 = vmatpush1.xpose.msra.mxu0 0.0
        %1029 = vmatprep.subr.mxu0 0.0
        %1030 = vmatpush1.xpose.msra.mxu0 0.0
        %1031 = vmatprep.subr.mxu0 0.0
        %1032 = vmatpush1.xpose.msra.mxu0 0.0
        %1033 = vmatprep.subr.mxu0 0.0
        %1034 = vmatpush1.xpose.msra.mxu0 0.0
        %1035 = vmatprep.subr.mxu0 0.0
        %1036 = vmatpush1.xpose.msra.mxu0 0.0
        %1037 = vmatprep.subr.mxu0 0.0
        %1038 = vmatpush1.xpose.msra.mxu0 0.0
        %1039 = vmatprep.subr.mxu0 0.0
        %1040 = vmatpush1.xpose.msra.mxu0 0.0
        %1041 = vmatprep.subr.mxu0 0.0
        %1042 = vmatpush1.xpose.msra.mxu0 0.0
        %1043 = vmatprep.subr.mxu0 0.0
        %1044 = vmatpush1.xpose.msra.mxu0 0.0
        %1045 = vmatprep.subr.mxu0 0.0
        %1046 = vmatpush1.xpose.msra.mxu0 0.0
        %1047 = vmatprep.subr.mxu0 0.0
        %1048 = vmatpush1.xpose.msra.mxu0 0.0
        %1049 = vmatprep.subr.mxu0 0.0
        %1050 = vmatpush1.xpose.msra.mxu0 0.0
        %1051 = vmatprep.subr.mxu0 0.0
        %1052 = vmatpush1.xpose.msra.mxu0 0.0
        %1053 = vmatprep.subr.mxu0 0.0
        %1054 = vmatpush1.xpose.msra.mxu0 0.0
        %1055 = vmatprep.mubr.f32.mxu0 0.0
        %1056 = vmatmul.mubr.f32.gmra.mrb[0].mxu0 %v952
        %v1057 = vpop.f32.mrb[0].mxu0
        %v1058 = vadd.f32 %v874, %v1057
        %v1059 = vpop.f32.mrb[0].mxu0
        %1060 = vmatprep.mubr.f32.mxu0 0.0
        %1061 = vmatmul.mubr.f32.gmra.mrb[0].mxu0 %v955
        %v1062 = vpop.f32.mrb[0].mxu0
        %v1063 = vadd.f32 %v875, %v1062
        %v1064 = vpop.f32.mrb[0].mxu0
        %1065 = vmatprep.mubr.f32.mxu0 0.0
        %1066 = vmatmul.mubr.f32.gmra.mrb[0].mxu0 %v958
        %v1067 = vpop.f32.mrb[0].mxu0
        %v1068 = vadd.f32 %v876, %v1067
        %v1069 = vpop.f32.mrb[0].mxu0
        %1070 = vmatprep.mubr.f32.mxu0 0.0
        %1071 = vmatmul.mubr.f32.gmra.mrb[0].mxu0 %v961
        %v1072 = vpop.f32.mrb[0].mxu0
        %v1073 = vadd.f32 %v877, %v1072
        %v1074 = vpop.f32.mrb[0].mxu0
        %1075 = vmatprep.mubr.f32.mxu0 0.0
        %1076 = vmatmul.mubr.f32.gmra.mrb[0].mxu0 %v964
        %v1077 = vpop.f32.mrb[0].mxu0
        %v1078 = vadd.f32 %v878, %v1077
        %v1079 = vpop.f32.mrb[0].mxu0
        %1080 = vmatprep.mubr.f32.mxu0 0.0
        %1081 = vmatmul.mubr.f32.gmra.mrb[0].mxu0 %v967
        %v1082 = vpop.f32.mrb[0].mxu0
        %v1083 = vadd.f32 %v879, %v1082
        %v1084 = vpop.f32.mrb[0].mxu0
        %1085 = vmatprep.mubr.f32.mxu0 0.0
        %1086 = vmatmul.mubr.f32.gmra.mrb[0].mxu0 %v970
        %v1087 = vpop.f32.mrb[0].mxu0
        %v1088 = vadd.f32 %v880, %v1087
        %v1089 = vpop.f32.mrb[0].mxu0
        %1090 = vmatprep.mubr.f32.mxu0 0.0
        %1091 = vmatmul.mubr.f32.gmra.mrb[0].mxu0 %v973
        %v1092 = vpop.f32.mrb[0].mxu0
        %v1093 = vadd.f32 %v881, %v1092
        %v1094 = vpop.f32.mrb[0].mxu0
        %1095 = vdwg.mxu0
        %1104 = vrot.lane.b32.xlu0 %v836, 96
        %v1105 = vpop.permute.xlu0 %1104
        %1106 = vrot.lane.b32.xlu0 %v841, 96
        %v1107 = vpop.permute.xlu0 %1106
        %1108 = vrot.lane.b32.xlu0 %v846, 96
        %v1109 = vpop.permute.xlu0 %1108
        %1110 = vrot.lane.b32.xlu0 %v851, 96
        %v1111 = vpop.permute.xlu0 %1110
        %1112 = vrot.lane.b32.xlu0 %v856, 96
        %v1113 = vpop.permute.xlu0 %1112
        %1114 = vrot.lane.b32.xlu0 %v861, 96
        %v1115 = vpop.permute.xlu0 %1114
        %1116 = vrot.lane.b32.xlu0 %v866, 96
        %v1117 = vpop.permute.xlu0 %1116
        %1118 = vrot.lane.b32.xlu0 %v871, 96
        %v1119 = vpop.permute.xlu0 %1118
        %v1121 = vsel %vm950, %v918, 0
        %v1124 = vsel %vm950, %v919, 0
        %v1127 = vsel %vm950, %v920, 0
        %v1130 = vsel %vm950, %v921, 0
        %v1133 = vsel %vm950, %v922, 0
        %v1136 = vsel %vm950, %v923, 0
        %v1139 = vsel %vm950, %v924, 0
        %v1142 = vsel %vm950, %v925, 0
        %v1144 = vsel %vm950, %v1105, 0
        %v1146 = vsel %vm950, %v1107, 0
        %v1148 = vsel %vm950, %v1109, 0
        %v1150 = vsel %vm950, %v1111, 0
        %v1152 = vsel %vm950, %v1113, 0
        %v1154 = vsel %vm950, %v1115, 0
        %v1156 = vsel %vm950, %v1117, 0
        %v1158 = vsel %vm950, %v1119, 0
        %1160 = vmatprep.subr.mxu0 0.0
        %1161 = vmatpush1.xpose.msra.mxu0 %v1144
        %1162 = vmatprep.subr.mxu0 0.0
        %1163 = vmatpush1.xpose.msra.mxu0 %v1146
        %1164 = vmatprep.subr.mxu0 0.0
        %1165 = vmatpush1.xpose.msra.mxu0 %v1148
        %1166 = vmatprep.subr.mxu0 0.0
        %1167 = vmatpush1.xpose.msra.mxu0 %v1150
        %1168 = vmatprep.subr.mxu0 0.0
        %1169 = vmatpush1.xpose.msra.mxu0 %v1152
        %1170 = vmatprep.subr.mxu0 0.0
        %1171 = vmatpush1.xpose.msra.mxu0 %v1154
        %1172 = vmatprep.subr.mxu0 0.0
        %1173 = vmatpush1.xpose.msra.mxu0 %v1156
        %1174 = vmatprep.subr.mxu0 0.0
        %1175 = vmatpush1.xpose.msra.mxu0 %v1158
        %1176 = vmatprep.subr.mxu0 0.0
        %1177 = vmatpush1.xpose.msra.mxu0 0.0
        %1178 = vmatprep.subr.mxu0 0.0
        %1179 = vmatpush1.xpose.msra.mxu0 0.0
        %1180 = vmatprep.subr.mxu0 0.0
        %1181 = vmatpush1.xpose.msra.mxu0 0.0
        %1182 = vmatprep.subr.mxu0 0.0
        %1183 = vmatpush1.xpose.msra.mxu0 0.0
        %1184 = vmatprep.subr.mxu0 0.0
        %1185 = vmatpush1.xpose.msra.mxu0 0.0
        %1186 = vmatprep.subr.mxu0 0.0
        %1187 = vmatpush1.xpose.msra.mxu0 0.0
        %1188 = vmatprep.subr.mxu0 0.0
        %1189 = vmatpush1.xpose.msra.mxu0 0.0
        %1190 = vmatprep.subr.mxu0 0.0
        %1191 = vmatpush1.xpose.msra.mxu0 0.0
        %1192 = vmatprep.subr.mxu0 0.0
        %1193 = vmatpush1.xpose.msra.mxu0 0.0
        %1194 = vmatprep.subr.mxu0 0.0
        %1195 = vmatpush1.xpose.msra.mxu0 0.0
        %1196 = vmatprep.subr.mxu0 0.0
        %1197 = vmatpush1.xpose.msra.mxu0 0.0
        %1198 = vmatprep.subr.mxu0 0.0
        %1199 = vmatpush1.xpose.msra.mxu0 0.0
        %1200 = vmatprep.subr.mxu0 0.0
        %1201 = vmatpush1.xpose.msra.mxu0 0.0
        %1202 = vmatprep.subr.mxu0 0.0
        %1203 = vmatpush1.xpose.msra.mxu0 0.0
        %1204 = vmatprep.subr.mxu0 0.0
        %1205 = vmatpush1.xpose.msra.mxu0 0.0
        %1206 = vmatprep.subr.mxu0 0.0
        %1207 = vmatpush1.xpose.msra.mxu0 0.0
        %1208 = vmatprep.subr.mxu0 0.0
        %1209 = vmatpush1.xpose.msra.mxu0 0.0
        %1210 = vmatprep.subr.mxu0 0.0
        %1211 = vmatpush1.xpose.msra.mxu0 0.0
        %1212 = vmatprep.subr.mxu0 0.0
        %1213 = vmatpush1.xpose.msra.mxu0 0.0
        %1214 = vmatprep.subr.mxu0 0.0
        %1215 = vmatpush1.xpose.msra.mxu0 0.0
        %1216 = vmatprep.subr.mxu0 0.0
        %1217 = vmatpush1.xpose.msra.mxu0 0.0
        %1218 = vmatprep.subr.mxu0 0.0
        %1219 = vmatpush1.xpose.msra.mxu0 0.0
        %1220 = vmatprep.subr.mxu0 0.0
        %1221 = vmatpush1.xpose.msra.mxu0 0.0
        %1222 = vmatprep.subr.mxu0 0.0
        %1223 = vmatpush1.xpose.msra.mxu0 0.0
        %1224 = vmatprep.mubr.f32.mxu0 0.0
        %1225 = vmatmul.mubr.f32.gmra.mrb[0].mxu0 %v1121
        %v1226 = vpop.f32.mrb[0].mxu0
        %v1227 = vadd.f32 %v882, %v1226
        %v1228 = vpop.f32.mrb[0].mxu0
        %1229 = vmatprep.mubr.f32.mxu0 0.0
        %1230 = vmatmul.mubr.f32.gmra.mrb[0].mxu0 %v1124
        %v1231 = vpop.f32.mrb[0].mxu0
        %v1232 = vadd.f32 %v883, %v1231
        %v1233 = vpop.f32.mrb[0].mxu0
        %1234 = vmatprep.mubr.f32.mxu0 0.0
        %1235 = vmatmul.mubr.f32.gmra.mrb[0].mxu0 %v1127
        %v1236 = vpop.f32.mrb[0].mxu0
        %v1237 = vadd.f32 %v884, %v1236
        %v1238 = vpop.f32.mrb[0].mxu0
        %1239 = vmatprep.mubr.f32.mxu0 0.0
        %1240 = vmatmul.mubr.f32.gmra.mrb[0].mxu0 %v1130
        %v1241 = vpop.f32.mrb[0].mxu0
        %v1242 = vadd.f32 %v885, %v1241
        %v1243 = vpop.f32.mrb[0].mxu0
        %1244 = vmatprep.mubr.f32.mxu0 0.0
        %1245 = vmatmul.mubr.f32.gmra.mrb[0].mxu0 %v1133
        %v1246 = vpop.f32.mrb[0].mxu0
        %v1247 = vadd.f32 %v886, %v1246
        %v1248 = vpop.f32.mrb[0].mxu0
        %1249 = vmatprep.mubr.f32.mxu0 0.0
        %1250 = vmatmul.mubr.f32.gmra.mrb[0].mxu0 %v1136
        %v1251 = vpop.f32.mrb[0].mxu0
        %v1252 = vadd.f32 %v887, %v1251
        %v1253 = vpop.f32.mrb[0].mxu0
        %1254 = vmatprep.mubr.f32.mxu0 0.0
        %1255 = vmatmul.mubr.f32.gmra.mrb[0].mxu0 %v1139
        %v1256 = vpop.f32.mrb[0].mxu0
        %v1257 = vadd.f32 %v888, %v1256
        %v1258 = vpop.f32.mrb[0].mxu0
        %1259 = vmatprep.mubr.f32.mxu0 0.0
        %1260 = vmatmul.mubr.f32.gmra.mrb[0].mxu0 %v1142
        %v1261 = vpop.f32.mrb[0].mxu0
        %v1262 = vadd.f32 %v889, %v1261
        %v1263 = vpop.f32.mrb[0].mxu0
        %1264 = vdwg.mxu0
        %vm1265 = vcmask 523264
        %v1266 = vsel %vm1265, %v1058, -inf
        %1267 = vmax.xlane.f32.xlu0 %v1266
        %v1268 = vpop.xlane.xlu0 %1267
        %v1269 = vsel %vm1265, %v1063, -inf
        %1270 = vmax.xlane.f32.xlu0 %v1269
        %v1271 = vpop.xlane.xlu0 %1270
        %v1272 = vsel %vm1265, %v1068, -inf
        %1273 = vmax.xlane.f32.xlu0 %v1272
        %v1274 = vpop.xlane.xlu0 %1273
        %v1275 = vsel %vm1265, %v1073, -inf
        %1276 = vmax.xlane.f32.xlu0 %v1275
        %v1277 = vpop.xlane.xlu0 %1276
        %v1278 = vsel %vm1265, %v1078, -inf
        %1279 = vmax.xlane.f32.xlu0 %v1278
        %v1280 = vpop.xlane.xlu0 %1279
        %v1281 = vsel %vm1265, %v1083, -inf
        %1282 = vmax.xlane.f32.xlu0 %v1281
        %v1283 = vpop.xlane.xlu0 %1282
        %v1284 = vsel %vm1265, %v1088, -inf
        %1285 = vmax.xlane.f32.xlu0 %v1284
        %v1286 = vpop.xlane.xlu0 %1285
        %v1287 = vsel %vm1265, %v1093, -inf
        %1288 = vmax.xlane.f32.xlu0 %v1287
        %v1289 = vpop.xlane.xlu0 %1288
        %v1290 = vsel %vm1265, %v1227, -inf
        %1291 = vmax.xlane.f32.xlu0 %v1290
        %v1292 = vpop.xlane.xlu0 %1291
        %v1293 = vsel %vm1265, %v1232, -inf
        %1294 = vmax.xlane.f32.xlu0 %v1293
        %v1295 = vpop.xlane.xlu0 %1294
        %v1296 = vsel %vm1265, %v1237, -inf
        %1297 = vmax.xlane.f32.xlu0 %v1296
        %v1298 = vpop.xlane.xlu0 %1297
        %v1299 = vsel %vm1265, %v1242, -inf
        %1300 = vmax.xlane.f32.xlu0 %v1299
        %v1301 = vpop.xlane.xlu0 %1300
        %v1302 = vsel %vm1265, %v1247, -inf
        %1303 = vmax.xlane.f32.xlu0 %v1302
        %v1304 = vpop.xlane.xlu0 %1303
        %v1305 = vsel %vm1265, %v1252, -inf
        %1306 = vmax.xlane.f32.xlu0 %v1305
        %v1307 = vpop.xlane.xlu0 %1306
        %v1308 = vsel %vm1265, %v1257, -inf
        %1309 = vmax.xlane.f32.xlu0 %v1308
        %v1310 = vpop.xlane.xlu0 %1309
        %v1311 = vsel %vm1265, %v1262, -inf
        %1312 = vmax.xlane.f32.xlu0 %v1311
        %v1313 = vpop.xlane.xlu0 %1312
        %v1314 = vsub.f32 %v1058, %v1268
        %v1315 = vsub.f32 %v1063, %v1271
        %v1316 = vsub.f32 %v1068, %v1274
        %v1317 = vsub.f32 %v1073, %v1277
        %v1318 = vsub.f32 %v1078, %v1280
        %v1319 = vsub.f32 %v1083, %v1283
        %v1320 = vsub.f32 %v1088, %v1286
        %v1321 = vsub.f32 %v1093, %v1289
        %v1322 = vsub.f32 %v1227, %v1292
        %v1323 = vsub.f32 %v1232, %v1295
        %v1324 = vsub.f32 %v1237, %v1298
        %v1325 = vsub.f32 %v1242, %v1301
        %v1326 = vsub.f32 %v1247, %v1304
        %v1327 = vsub.f32 %v1252, %v1307
        %v1328 = vsub.f32 %v1257, %v1310
        %v1329 = vsub.f32 %v1262, %v1313
        %v1330 = vmul.f32 %v1314, 1.442695
        %v1331 = vpow.pop %v1330
        %v1332 = vmul.f32 %v1315, 1.442695
        %v1333 = vpow.pop %v1332
        %v1334 = vmul.f32 %v1316, 1.442695
        %v1335 = vpow.pop %v1334
        %v1336 = vmul.f32 %v1317, 1.442695
        %v1337 = vpow.pop %v1336
        %v1338 = vmul.f32 %v1318, 1.442695
        %v1339 = vpow.pop %v1338
        %v1340 = vmul.f32 %v1319, 1.442695
        %v1341 = vpow.pop %v1340
        %v1342 = vmul.f32 %v1320, 1.442695
        %v1343 = vpow.pop %v1342
        %v1344 = vmul.f32 %v1321, 1.442695
        %v1345 = vpow.pop %v1344
        %v1346 = vmul.f32 %v1322, 1.442695
        %v1347 = vpow.pop %v1346
        %v1348 = vmul.f32 %v1323, 1.442695
        %v1349 = vpow.pop %v1348
        %v1350 = vmul.f32 %v1324, 1.442695
        %v1351 = vpow.pop %v1350
        %v1352 = vmul.f32 %v1325, 1.442695
        %v1353 = vpow.pop %v1352
        %v1354 = vmul.f32 %v1326, 1.442695
        %v1355 = vpow.pop %v1354
        %v1356 = vmul.f32 %v1327, 1.442695
        %v1357 = vpow.pop %v1356
        %v1358 = vmul.f32 %v1328, 1.442695
        %v1359 = vpow.pop %v1358
        %v1360 = vmul.f32 %v1329, 1.442695
        %v1361 = vpow.pop %v1360
        %v1362 = vsel %vm1265, %v1331, 0.0
        %1363 = vadd.xlane.f32.xlu0 %v1362
        %v1364 = vpop.xlane.xlu0 %1363
        %v1365 = vsel %vm1265, %v1333, 0.0
        %1366 = vadd.xlane.f32.xlu0 %v1365
        %v1367 = vpop.xlane.xlu0 %1366
        %v1368 = vsel %vm1265, %v1335, 0.0
        %1369 = vadd.xlane.f32.xlu0 %v1368
        %v1370 = vpop.xlane.xlu0 %1369
        %v1371 = vsel %vm1265, %v1337, 0.0
        %1372 = vadd.xlane.f32.xlu0 %v1371
        %v1373 = vpop.xlane.xlu0 %1372
        %v1374 = vsel %vm1265, %v1339, 0.0
        %1375 = vadd.xlane.f32.xlu0 %v1374
        %v1376 = vpop.xlane.xlu0 %1375
        %v1377 = vsel %vm1265, %v1341, 0.0
        %1378 = vadd.xlane.f32.xlu0 %v1377
        %v1379 = vpop.xlane.xlu0 %1378
        %v1380 = vsel %vm1265, %v1343, 0.0
        %1381 = vadd.xlane.f32.xlu0 %v1380
        %v1382 = vpop.xlane.xlu0 %1381
        %v1383 = vsel %vm1265, %v1345, 0.0
        %1384 = vadd.xlane.f32.xlu0 %v1383
        %v1385 = vpop.xlane.xlu0 %1384
        %v1386 = vsel %vm1265, %v1347, 0.0
        %1387 = vadd.xlane.f32.xlu0 %v1386
        %v1388 = vpop.xlane.xlu0 %1387
        %v1389 = vsel %vm1265, %v1349, 0.0
        %1390 = vadd.xlane.f32.xlu0 %v1389
        %v1391 = vpop.xlane.xlu0 %1390
        %v1392 = vsel %vm1265, %v1351, 0.0
        %1393 = vadd.xlane.f32.xlu0 %v1392
        %v1394 = vpop.xlane.xlu0 %1393
        %v1395 = vsel %vm1265, %v1353, 0.0
        %1396 = vadd.xlane.f32.xlu0 %v1395
        %v1397 = vpop.xlane.xlu0 %1396
        %v1398 = vsel %vm1265, %v1355, 0.0
        %1399 = vadd.xlane.f32.xlu0 %v1398
        %v1400 = vpop.xlane.xlu0 %1399
        %v1401 = vsel %vm1265, %v1357, 0.0
        %1402 = vadd.xlane.f32.xlu0 %v1401
        %v1403 = vpop.xlane.xlu0 %1402
        %v1404 = vsel %vm1265, %v1359, 0.0
        %1405 = vadd.xlane.f32.xlu0 %v1404
        %v1406 = vpop.xlane.xlu0 %1405
        %v1407 = vsel %vm1265, %v1361, 0.0
        %1408 = vadd.xlane.f32.xlu0 %v1407
        %v1409 = vpop.xlane.xlu0 %1408
        %v1410 = vrcp.pop %v1364
        %v1411 = vmul.f32 %v1331, %v1410
        %v1412 = vrcp.pop %v1367
        %v1413 = vmul.f32 %v1333, %v1412
        %v1414 = vrcp.pop %v1370
        %v1415 = vmul.f32 %v1335, %v1414
        %v1416 = vrcp.pop %v1373
        %v1417 = vmul.f32 %v1337, %v1416
        %v1418 = vrcp.pop %v1376
        %v1419 = vmul.f32 %v1339, %v1418
        %v1420 = vrcp.pop %v1379
        %v1421 = vmul.f32 %v1341, %v1420
        %v1422 = vrcp.pop %v1382
        %v1423 = vmul.f32 %v1343, %v1422
        %v1424 = vrcp.pop %v1385
        %v1425 = vmul.f32 %v1345, %v1424
        %v1426 = vrcp.pop %v1388
        %v1427 = vmul.f32 %v1347, %v1426
        %v1428 = vrcp.pop %v1391
        %v1429 = vmul.f32 %v1349, %v1428
        %v1430 = vrcp.pop %v1394
        %v1431 = vmul.f32 %v1351, %v1430
        %v1432 = vrcp.pop %v1397
        %v1433 = vmul.f32 %v1353, %v1432
        %v1434 = vrcp.pop %v1400
        %v1435 = vmul.f32 %v1355, %v1434
        %v1436 = vrcp.pop %v1403
        %v1437 = vmul.f32 %v1357, %v1436
        %v1438 = vrcp.pop %v1406
        %v1439 = vmul.f32 %v1359, %v1438
        %v1440 = vrcp.pop %v1409
        %v1441 = vmul.f32 %v1361, %v1440
        %1442 = vrot.lane.b32.xlu0 %v796, 64
        %v1443 = vpop.permute.xlu0 %1442
        %1444 = vrot.lane.b32.xlu0 %v801, 64
        %v1445 = vpop.permute.xlu0 %1444
        %1446 = vrot.lane.b32.xlu0 %v806, 64
        %v1447 = vpop.permute.xlu0 %1446
        %1448 = vrot.lane.b32.xlu0 %v811, 64
        %v1449 = vpop.permute.xlu0 %1448
        %1450 = vrot.lane.b32.xlu0 %v816, 64
        %v1451 = vpop.permute.xlu0 %1450
        %1452 = vrot.lane.b32.xlu0 %v821, 64
        %v1453 = vpop.permute.xlu0 %1452
        %1454 = vrot.lane.b32.xlu0 %v826, 64
        %v1455 = vpop.permute.xlu0 %1454
        %1456 = vrot.lane.b32.xlu0 %v831, 64
        %v1457 = vpop.permute.xlu0 %1456
        %v1467 = vsel %vm1265, %v1411, 0
        %v1470 = vsel %vm1265, %v1413, 0
        %v1473 = vsel %vm1265, %v1415, 0
        %v1476 = vsel %vm1265, %v1417, 0
        %v1479 = vsel %vm1265, %v1419, 0
        %v1482 = vsel %vm1265, %v1421, 0
        %v1485 = vsel %vm1265, %v1423, 0
        %v1488 = vsel %vm1265, %v1425, 0
        %1490 = vmatprep.subr.mxu0 0.0
        %1491 = vmatpush1.msra.mxu0 %v1443
        %1492 = vmatprep.subr.mxu0 0.0
        %1493 = vmatpush1.msra.mxu0 %v1445
        %1494 = vmatprep.subr.mxu0 0.0
        %1495 = vmatpush1.msra.mxu0 %v1447
        %1496 = vmatprep.subr.mxu0 0.0
        %1497 = vmatpush1.msra.mxu0 %v1449
        %1498 = vmatprep.subr.mxu0 0.0
        %1499 = vmatpush1.msra.mxu0 %v1451
        %1500 = vmatprep.subr.mxu0 0.0
        %1501 = vmatpush1.msra.mxu0 %v1453
        %1502 = vmatprep.subr.mxu0 0.0
        %1503 = vmatpush1.msra.mxu0 %v1455
        %1504 = vmatprep.subr.mxu0 0.0
        %1505 = vmatpush1.msra.mxu0 %v1457
        %1506 = vmatprep.subr.mxu0 0.0
        %1507 = vmatpush1.msra.mxu0 0.0
        %1508 = vmatprep.subr.mxu0 0.0
        %1509 = vmatpush1.msra.mxu0 0.0
        %1510 = vmatprep.subr.mxu0 0.0
        %1511 = vmatpush1.msra.mxu0 0.0
        %1512 = vmatprep.subr.mxu0 0.0
        %1513 = vmatpush1.msra.mxu0 0.0
        %1514 = vmatprep.subr.mxu0 0.0
        %1515 = vmatpush1.msra.mxu0 0.0
        %1516 = vmatprep.subr.mxu0 0.0
        %1517 = vmatpush1.msra.mxu0 0.0
        %1518 = vmatprep.subr.mxu0 0.0
        %1519 = vmatpush1.msra.mxu0 0.0
        %1520 = vmatprep.subr.mxu0 0.0
        %1521 = vmatpush1.msra.mxu0 0.0
        %1522 = vmatprep.subr.mxu0 0.0
        %1523 = vmatpush1.msra.mxu0 0.0
        %1524 = vmatprep.subr.mxu0 0.0
        %1525 = vmatpush1.msra.mxu0 0.0
        %1526 = vmatprep.subr.mxu0 0.0
        %1527 = vmatpush1.msra.mxu0 0.0
        %1528 = vmatprep.subr.mxu0 0.0
        %1529 = vmatpush1.msra.mxu0 0.0
        %1530 = vmatprep.subr.mxu0 0.0
        %1531 = vmatpush1.msra.mxu0 0.0
        %1532 = vmatprep.subr.mxu0 0.0
        %1533 = vmatpush1.msra.mxu0 0.0
        %1534 = vmatprep.subr.mxu0 0.0
        %1535 = vmatpush1.msra.mxu0 0.0
        %1536 = vmatprep.subr.mxu0 0.0
        %1537 = vmatpush1.msra.mxu0 0.0
        %1538 = vmatprep.subr.mxu0 0.0
        %1539 = vmatpush1.msra.mxu0 0.0
        %1540 = vmatprep.subr.mxu0 0.0
        %1541 = vmatpush1.msra.mxu0 0.0
        %1542 = vmatprep.subr.mxu0 0.0
        %1543 = vmatpush1.msra.mxu0 0.0
        %1544 = vmatprep.subr.mxu0 0.0
        %1545 = vmatpush1.msra.mxu0 0.0
        %1546 = vmatprep.subr.mxu0 0.0
        %1547 = vmatpush1.msra.mxu0 0.0
        %1548 = vmatprep.subr.mxu0 0.0
        %1549 = vmatpush1.msra.mxu0 0.0
        %1550 = vmatprep.subr.mxu0 0.0
        %1551 = vmatpush1.msra.mxu0 0.0
        %1552 = vmatprep.subr.mxu0 0.0
        %1553 = vmatpush1.msra.mxu0 0.0
        %1554 = vmatprep.mubr.f32.mxu0 0.0
        %1555 = vmatmul.mubr.f32.gmra.mrb[0].mxu0 %v1467
        %v1556 = vpop.f32.mrb[0].mxu0
        %v1557 = vadd.f32 0.0, %v1556
        %v1558 = vpop.f32.mrb[0].mxu0
        %1559 = vmatprep.mubr.f32.mxu0 0.0
        %1560 = vmatmul.mubr.f32.gmra.mrb[0].mxu0 %v1470
        %v1561 = vpop.f32.mrb[0].mxu0
        %v1562 = vadd.f32 0.0, %v1561
        %v1563 = vpop.f32.mrb[0].mxu0
        %1564 = vmatprep.mubr.f32.mxu0 0.0
        %1565 = vmatmul.mubr.f32.gmra.mrb[0].mxu0 %v1473
        %v1566 = vpop.f32.mrb[0].mxu0
        %v1567 = vadd.f32 0.0, %v1566
        %v1568 = vpop.f32.mrb[0].mxu0
        %1569 = vmatprep.mubr.f32.mxu0 0.0
        %1570 = vmatmul.mubr.f32.gmra.mrb[0].mxu0 %v1476
        %v1571 = vpop.f32.mrb[0].mxu0
        %v1572 = vadd.f32 0.0, %v1571
        %v1573 = vpop.f32.mrb[0].mxu0
        %1574 = vmatprep.mubr.f32.mxu0 0.0
        %1575 = vmatmul.mubr.f32.gmra.mrb[0].mxu0 %v1479
        %v1576 = vpop.f32.mrb[0].mxu0
        %v1577 = vadd.f32 0.0, %v1576
        %v1578 = vpop.f32.mrb[0].mxu0
        %1579 = vmatprep.mubr.f32.mxu0 0.0
        %1580 = vmatmul.mubr.f32.gmra.mrb[0].mxu0 %v1482
        %v1581 = vpop.f32.mrb[0].mxu0
        %v1582 = vadd.f32 0.0, %v1581
        %v1583 = vpop.f32.mrb[0].mxu0
        %1584 = vmatprep.mubr.f32.mxu0 0.0
        %1585 = vmatmul.mubr.f32.gmra.mrb[0].mxu0 %v1485
        %v1586 = vpop.f32.mrb[0].mxu0
        %v1587 = vadd.f32 0.0, %v1586
        %v1588 = vpop.f32.mrb[0].mxu0
        %1589 = vmatprep.mubr.f32.mxu0 0.0
        %1590 = vmatmul.mubr.f32.gmra.mrb[0].mxu0 %v1488
        %v1591 = vpop.f32.mrb[0].mxu0
        %v1592 = vadd.f32 0.0, %v1591
        %v1593 = vpop.f32.mrb[0].mxu0
        %1594 = vdwg.mxu0
        %1595 = vrot.lane.b32.xlu0 %v836, 64
        %v1596 = vpop.permute.xlu0 %1595
        %1597 = vrot.lane.b32.xlu0 %v841, 64
        %v1598 = vpop.permute.xlu0 %1597
        %1599 = vrot.lane.b32.xlu0 %v846, 64
        %v1600 = vpop.permute.xlu0 %1599
        %1601 = vrot.lane.b32.xlu0 %v851, 64
        %v1602 = vpop.permute.xlu0 %1601
        %1603 = vrot.lane.b32.xlu0 %v856, 64
        %v1604 = vpop.permute.xlu0 %1603
        %1605 = vrot.lane.b32.xlu0 %v861, 64
        %v1606 = vpop.permute.xlu0 %1605
        %1607 = vrot.lane.b32.xlu0 %v866, 64
        %v1608 = vpop.permute.xlu0 %1607
        %1609 = vrot.lane.b32.xlu0 %v871, 64
        %v1610 = vpop.permute.xlu0 %1609
        %v1620 = vsel %vm1265, %v1427, 0
        %v1623 = vsel %vm1265, %v1429, 0
        %v1626 = vsel %vm1265, %v1431, 0
        %v1629 = vsel %vm1265, %v1433, 0
        %v1632 = vsel %vm1265, %v1435, 0
        %v1635 = vsel %vm1265, %v1437, 0
        %v1638 = vsel %vm1265, %v1439, 0
        %v1641 = vsel %vm1265, %v1441, 0
        %1643 = vmatprep.subr.mxu0 0.0
        %1644 = vmatpush1.msra.mxu0 %v1596
        %1645 = vmatprep.subr.mxu0 0.0
        %1646 = vmatpush1.msra.mxu0 %v1598
        %1647 = vmatprep.subr.mxu0 0.0
        %1648 = vmatpush1.msra.mxu0 %v1600
        %1649 = vmatprep.subr.mxu0 0.0
        %1650 = vmatpush1.msra.mxu0 %v1602
        %1651 = vmatprep.subr.mxu0 0.0
        %1652 = vmatpush1.msra.mxu0 %v1604
        %1653 = vmatprep.subr.mxu0 0.0
        %1654 = vmatpush1.msra.mxu0 %v1606
        %1655 = vmatprep.subr.mxu0 0.0
        %1656 = vmatpush1.msra.mxu0 %v1608
        %1657 = vmatprep.subr.mxu0 0.0
        %1658 = vmatpush1.msra.mxu0 %v1610
        %1659 = vmatprep.subr.mxu0 0.0
        %1660 = vmatpush1.msra.mxu0 0.0
        %1661 = vmatprep.subr.mxu0 0.0
        %1662 = vmatpush1.msra.mxu0 0.0
        %1663 = vmatprep.subr.mxu0 0.0
        %1664 = vmatpush1.msra.mxu0 0.0
        %1665 = vmatprep.subr.mxu0 0.0
        %1666 = vmatpush1.msra.mxu0 0.0
        %1667 = vmatprep.subr.mxu0 0.0
        %1668 = vmatpush1.msra.mxu0 0.0
        %1669 = vmatprep.subr.mxu0 0.0
        %1670 = vmatpush1.msra.mxu0 0.0
        %1671 = vmatprep.subr.mxu0 0.0
        %1672 = vmatpush1.msra.mxu0 0.0
        %1673 = vmatprep.subr.mxu0 0.0
        %1674 = vmatpush1.msra.mxu0 0.0
        %1675 = vmatprep.subr.mxu0 0.0
        %1676 = vmatpush1.msra.mxu0 0.0
        %1677 = vmatprep.subr.mxu0 0.0
        %1678 = vmatpush1.msra.mxu0 0.0
        %1679 = vmatprep.subr.mxu0 0.0
        %1680 = vmatpush1.msra.mxu0 0.0
        %1681 = vmatprep.subr.mxu0 0.0
        %1682 = vmatpush1.msra.mxu0 0.0
        %1683 = vmatprep.subr.mxu0 0.0
        %1684 = vmatpush1.msra.mxu0 0.0
        %1685 = vmatprep.subr.mxu0 0.0
        %1686 = vmatpush1.msra.mxu0 0.0
        %1687 = vmatprep.subr.mxu0 0.0
        %1688 = vmatpush1.msra.mxu0 0.0
        %1689 = vmatprep.subr.mxu0 0.0
        %1690 = vmatpush1.msra.mxu0 0.0
        %1691 = vmatprep.subr.mxu0 0.0
        %1692 = vmatpush1.msra.mxu0 0.0
        %1693 = vmatprep.subr.mxu0 0.0
        %1694 = vmatpush1.msra.mxu0 0.0
        %1695 = vmatprep.subr.mxu0 0.0
        %1696 = vmatpush1.msra.mxu0 0.0
        %1697 = vmatprep.subr.mxu0 0.0
        %1698 = vmatpush1.msra.mxu0 0.0
        %1699 = vmatprep.subr.mxu0 0.0
        %1700 = vmatpush1.msra.mxu0 0.0
        %1701 = vmatprep.subr.mxu0 0.0
        %1702 = vmatpush1.msra.mxu0 0.0
        %1703 = vmatprep.subr.mxu0 0.0
        %1704 = vmatpush1.msra.mxu0 0.0
        %1705 = vmatprep.subr.mxu0 0.0
        %1706 = vmatpush1.msra.mxu0 0.0
        %1707 = vmatprep.mubr.f32.mxu0 0.0
        %1708 = vmatmul.mubr.f32.gmra.mrb[0].mxu0 %v1620
        %v1709 = vpop.f32.mrb[0].mxu0
        %v1710 = vadd.f32 0.0, %v1709
        %v1711 = vpop.f32.mrb[0].mxu0
        %1712 = vmatprep.mubr.f32.mxu0 0.0
        %1713 = vmatmul.mubr.f32.gmra.mrb[0].mxu0 %v1623
        %v1714 = vpop.f32.mrb[0].mxu0
        %v1715 = vadd.f32 0.0, %v1714
        %v1716 = vpop.f32.mrb[0].mxu0
        %1717 = vmatprep.mubr.f32.mxu0 0.0
        %1718 = vmatmul.mubr.f32.gmra.mrb[0].mxu0 %v1626
        %v1719 = vpop.f32.mrb[0].mxu0
        %v1720 = vadd.f32 0.0, %v1719
        %v1721 = vpop.f32.mrb[0].mxu0
        %1722 = vmatprep.mubr.f32.mxu0 0.0
        %1723 = vmatmul.mubr.f32.gmra.mrb[0].mxu0 %v1629
        %v1724 = vpop.f32.mrb[0].mxu0
        %v1725 = vadd.f32 0.0, %v1724
        %v1726 = vpop.f32.mrb[0].mxu0
        %1727 = vmatprep.mubr.f32.mxu0 0.0
        %1728 = vmatmul.mubr.f32.gmra.mrb[0].mxu0 %v1632
        %v1729 = vpop.f32.mrb[0].mxu0
        %v1730 = vadd.f32 0.0, %v1729
        %v1731 = vpop.f32.mrb[0].mxu0
        %1732 = vmatprep.mubr.f32.mxu0 0.0
        %1733 = vmatmul.mubr.f32.gmra.mrb[0].mxu0 %v1635
        %v1734 = vpop.f32.mrb[0].mxu0
        %v1735 = vadd.f32 0.0, %v1734
        %v1736 = vpop.f32.mrb[0].mxu0
        %1737 = vmatprep.mubr.f32.mxu0 0.0
        %1738 = vmatmul.mubr.f32.gmra.mrb[0].mxu0 %v1638
        %v1739 = vpop.f32.mrb[0].mxu0
        %v1740 = vadd.f32 0.0, %v1739
        %v1741 = vpop.f32.mrb[0].mxu0
        %1742 = vmatprep.mubr.f32.mxu0 0.0
        %1743 = vmatmul.mubr.f32.gmra.mrb[0].mxu0 %v1641
        %v1744 = vpop.f32.mrb[0].mxu0
        %v1745 = vadd.f32 0.0, %v1744
        %v1746 = vpop.f32.mrb[0].mxu0
        %1747 = vdwg.mxu0
        %1748 = vrot.lane.b32.xlu0 %v910, 112
        %v1749 = vpop.permute.xlu0 %1748
        %1750 = vrot.lane.b32.xlu0 %v911, 112
        %v1751 = vpop.permute.xlu0 %1750
        %1752 = vrot.lane.b32.xlu0 %v912, 112
        %v1753 = vpop.permute.xlu0 %1752
        %1754 = vrot.lane.b32.xlu0 %v913, 112
        %v1755 = vpop.permute.xlu0 %1754
        %1756 = vrot.lane.b32.xlu0 %v914, 112
        %v1757 = vpop.permute.xlu0 %1756
        %1758 = vrot.lane.b32.xlu0 %v915, 112
        %v1759 = vpop.permute.xlu0 %1758
        %1760 = vrot.lane.b32.xlu0 %v916, 112
        %v1761 = vpop.permute.xlu0 %1760
        %1762 = vrot.lane.b32.xlu0 %v917, 112
        %v1763 = vpop.permute.xlu0 %1762
        %1764 = vrot.lane.b32.xlu0 %v796, 80
        %v1765 = vpop.permute.xlu0 %1764
        %1766 = vrot.lane.b32.xlu0 %v801, 80
        %v1767 = vpop.permute.xlu0 %1766
        %1768 = vrot.lane.b32.xlu0 %v806, 80
        %v1769 = vpop.permute.xlu0 %1768
        %1770 = vrot.lane.b32.xlu0 %v811, 80
        %v1771 = vpop.permute.xlu0 %1770
        %1772 = vrot.lane.b32.xlu0 %v816, 80
        %v1773 = vpop.permute.xlu0 %1772
        %1774 = vrot.lane.b32.xlu0 %v821, 80
        %v1775 = vpop.permute.xlu0 %1774
        %1776 = vrot.lane.b32.xlu0 %v826, 80
        %v1777 = vpop.permute.xlu0 %1776
        %1778 = vrot.lane.b32.xlu0 %v831, 80
        %v1779 = vpop.permute.xlu0 %1778
        %v1780 = vsel %vm950, %v1749, 0
        %v1782 = vsel %vm950, %v1751, 0
        %v1784 = vsel %vm950, %v1753, 0
        %v1786 = vsel %vm950, %v1755, 0
        %v1788 = vsel %vm950, %v1757, 0
        %v1790 = vsel %vm950, %v1759, 0
        %v1792 = vsel %vm950, %v1761, 0
        %v1794 = vsel %vm950, %v1763, 0
        %v1796 = vsel %vm950, %v1765, 0
        %v1798 = vsel %vm950, %v1767, 0
        %v1800 = vsel %vm950, %v1769, 0
        %v1802 = vsel %vm950, %v1771, 0
        %v1804 = vsel %vm950, %v1773, 0
        %v1806 = vsel %vm950, %v1775, 0
        %v1808 = vsel %vm950, %v1777, 0
        %v1810 = vsel %vm950, %v1779, 0
        %1812 = vmatprep.subr.mxu0 0.0
        %1813 = vmatpush1.xpose.msra.mxu0 %v1796
        %1814 = vmatprep.subr.mxu0 0.0
        %1815 = vmatpush1.xpose.msra.mxu0 %v1798
        %1816 = vmatprep.subr.mxu0 0.0
        %1817 = vmatpush1.xpose.msra.mxu0 %v1800
        %1818 = vmatprep.subr.mxu0 0.0
        %1819 = vmatpush1.xpose.msra.mxu0 %v1802
        %1820 = vmatprep.subr.mxu0 0.0
        %1821 = vmatpush1.xpose.msra.mxu0 %v1804
        %1822 = vmatprep.subr.mxu0 0.0
        %1823 = vmatpush1.xpose.msra.mxu0 %v1806
        %1824 = vmatprep.subr.mxu0 0.0
        %1825 = vmatpush1.xpose.msra.mxu0 %v1808
        %1826 = vmatprep.subr.mxu0 0.0
        %1827 = vmatpush1.xpose.msra.mxu0 %v1810
        %1828 = vmatprep.subr.mxu0 0.0
        %1829 = vmatpush1.xpose.msra.mxu0 0.0
        %1830 = vmatprep.subr.mxu0 0.0
        %1831 = vmatpush1.xpose.msra.mxu0 0.0
        %1832 = vmatprep.subr.mxu0 0.0
        %1833 = vmatpush1.xpose.msra.mxu0 0.0
        %1834 = vmatprep.subr.mxu0 0.0
        %1835 = vmatpush1.xpose.msra.mxu0 0.0
        %1836 = vmatprep.subr.mxu0 0.0
        %1837 = vmatpush1.xpose.msra.mxu0 0.0
        %1838 = vmatprep.subr.mxu0 0.0
        %1839 = vmatpush1.xpose.msra.mxu0 0.0
        %1840 = vmatprep.subr.mxu0 0.0
        %1841 = vmatpush1.xpose.msra.mxu0 0.0
        %1842 = vmatprep.subr.mxu0 0.0
        %1843 = vmatpush1.xpose.msra.mxu0 0.0
        %1844 = vmatprep.subr.mxu0 0.0
        %1845 = vmatpush1.xpose.msra.mxu0 0.0
        %1846 = vmatprep.subr.mxu0 0.0
        %1847 = vmatpush1.xpose.msra.mxu0 0.0
        %1848 = vmatprep.subr.mxu0 0.0
        %1849 = vmatpush1.xpose.msra.mxu0 0.0
        %1850 = vmatprep.subr.mxu0 0.0
        %1851 = vmatpush1.xpose.msra.mxu0 0.0
        %1852 = vmatprep.subr.mxu0 0.0
        %1853 = vmatpush1.xpose.msra.mxu0 0.0
        %1854 = vmatprep.subr.mxu0 0.0
        %1855 = vmatpush1.xpose.msra.mxu0 0.0
        %1856 = vmatprep.subr.mxu0 0.0
        %1857 = vmatpush1.xpose.msra.mxu0 0.0
        %1858 = vmatprep.subr.mxu0 0.0
        %1859 = vmatpush1.xpose.msra.mxu0 0.0
        %1860 = vmatprep.subr.mxu0 0.0
        %1861 = vmatpush1.xpose.msra.mxu0 0.0
        %1862 = vmatprep.subr.mxu0 0.0
        %1863 = vmatpush1.xpose.msra.mxu0 0.0
        %1864 = vmatprep.subr.mxu0 0.0
        %1865 = vmatpush1.xpose.msra.mxu0 0.0
        %1866 = vmatprep.subr.mxu0 0.0
        %1867 = vmatpush1.xpose.msra.mxu0 0.0
        %1868 = vmatprep.subr.mxu0 0.0
        %1869 = vmatpush1.xpose.msra.mxu0 0.0
        %1870 = vmatprep.subr.mxu0 0.0
        %1871 = vmatpush1.xpose.msra.mxu0 0.0
        %1872 = vmatprep.subr.mxu0 0.0
        %1873 = vmatpush1.xpose.msra.mxu0 0.0
        %1874 = vmatprep.subr.mxu0 0.0
        %1875 = vmatpush1.xpose.msra.mxu0 0.0
        %1876 = vmatprep.mubr.f32.mxu0 0.0
        %1877 = vmatmul.mubr.f32.gmra.mrb[0].mxu0 %v1780
        %v1878 = vpop.f32.mrb[0].mxu0
        %v1879 = vadd.f32 %v890, %v1878
        %v1880 = vpop.f32.mrb[0].mxu0
        %1881 = vmatprep.mubr.f32.mxu0 0.0
        %1882 = vmatmul.mubr.f32.gmra.mrb[0].mxu0 %v1782
        %v1883 = vpop.f32.mrb[0].mxu0
        %v1884 = vadd.f32 %v891, %v1883
        %v1885 = vpop.f32.mrb[0].mxu0
        %1886 = vmatprep.mubr.f32.mxu0 0.0
        %1887 = vmatmul.mubr.f32.gmra.mrb[0].mxu0 %v1784
        %v1888 = vpop.f32.mrb[0].mxu0
        %v1889 = vadd.f32 %v892, %v1888
        %v1890 = vpop.f32.mrb[0].mxu0
        %1891 = vmatprep.mubr.f32.mxu0 0.0
        %1892 = vmatmul.mubr.f32.gmra.mrb[0].mxu0 %v1786
        %v1893 = vpop.f32.mrb[0].mxu0
        %v1894 = vadd.f32 %v893, %v1893
        %v1895 = vpop.f32.mrb[0].mxu0
        %1896 = vmatprep.mubr.f32.mxu0 0.0
        %1897 = vmatmul.mubr.f32.gmra.mrb[0].mxu0 %v1788
        %v1898 = vpop.f32.mrb[0].mxu0
        %v1899 = vadd.f32 %v894, %v1898
        %v1900 = vpop.f32.mrb[0].mxu0
        %1901 = vmatprep.mubr.f32.mxu0 0.0
        %1902 = vmatmul.mubr.f32.gmra.mrb[0].mxu0 %v1790
        %v1903 = vpop.f32.mrb[0].mxu0
        %v1904 = vadd.f32 %v895, %v1903
        %v1905 = vpop.f32.mrb[0].mxu0
        %1906 = vmatprep.mubr.f32.mxu0 0.0
        %1907 = vmatmul.mubr.f32.gmra.mrb[0].mxu0 %v1792
        %v1908 = vpop.f32.mrb[0].mxu0
        %v1909 = vadd.f32 %v896, %v1908
        %v1910 = vpop.f32.mrb[0].mxu0
        %1911 = vmatprep.mubr.f32.mxu0 0.0
        %1912 = vmatmul.mubr.f32.gmra.mrb[0].mxu0 %v1794
        %v1913 = vpop.f32.mrb[0].mxu0
        %v1914 = vadd.f32 %v897, %v1913
        %v1915 = vpop.f32.mrb[0].mxu0
        %1916 = vdwg.mxu0
        %1917 = vrot.lane.b32.xlu0 %v918, 112
        %v1918 = vpop.permute.xlu0 %1917
        %1919 = vrot.lane.b32.xlu0 %v919, 112
        %v1920 = vpop.permute.xlu0 %1919
        %1921 = vrot.lane.b32.xlu0 %v920, 112
        %v1922 = vpop.permute.xlu0 %1921
        %1923 = vrot.lane.b32.xlu0 %v921, 112
        %v1924 = vpop.permute.xlu0 %1923
        %1925 = vrot.lane.b32.xlu0 %v922, 112
        %v1926 = vpop.permute.xlu0 %1925
        %1927 = vrot.lane.b32.xlu0 %v923, 112
        %v1928 = vpop.permute.xlu0 %1927
        %1929 = vrot.lane.b32.xlu0 %v924, 112
        %v1930 = vpop.permute.xlu0 %1929
        %1931 = vrot.lane.b32.xlu0 %v925, 112
        %v1932 = vpop.permute.xlu0 %1931
        %1933 = vrot.lane.b32.xlu0 %v836, 80
        %v1934 = vpop.permute.xlu0 %1933
        %1935 = vrot.lane.b32.xlu0 %v841, 80
        %v1936 = vpop.permute.xlu0 %1935
        %1937 = vrot.lane.b32.xlu0 %v846, 80
        %v1938 = vpop.permute.xlu0 %1937
        %1939 = vrot.lane.b32.xlu0 %v851, 80
        %v1940 = vpop.permute.xlu0 %1939
        %1941 = vrot.lane.b32.xlu0 %v856, 80
        %v1942 = vpop.permute.xlu0 %1941
        %1943 = vrot.lane.b32.xlu0 %v861, 80
        %v1944 = vpop.permute.xlu0 %1943
        %1945 = vrot.lane.b32.xlu0 %v866, 80
        %v1946 = vpop.permute.xlu0 %1945
        %1947 = vrot.lane.b32.xlu0 %v871, 80
        %v1948 = vpop.permute.xlu0 %1947
        %v1949 = vsel %vm950, %v1918, 0
        %v1951 = vsel %vm950, %v1920, 0
        %v1953 = vsel %vm950, %v1922, 0
        %v1955 = vsel %vm950, %v1924, 0
        %v1957 = vsel %vm950, %v1926, 0
        %v1959 = vsel %vm950, %v1928, 0
        %v1961 = vsel %vm950, %v1930, 0
        %v1963 = vsel %vm950, %v1932, 0
        %v1965 = vsel %vm950, %v1934, 0
        %v1967 = vsel %vm950, %v1936, 0
        %v1969 = vsel %vm950, %v1938, 0
        %v1971 = vsel %vm950, %v1940, 0
        %v1973 = vsel %vm950, %v1942, 0
        %v1975 = vsel %vm950, %v1944, 0
        %v1977 = vsel %vm950, %v1946, 0
        %v1979 = vsel %vm950, %v1948, 0
        %1981 = vmatprep.subr.mxu0 0.0
        %1982 = vmatpush1.xpose.msra.mxu0 %v1965
        %1983 = vmatprep.subr.mxu0 0.0
        %1984 = vmatpush1.xpose.msra.mxu0 %v1967
        %1985 = vmatprep.subr.mxu0 0.0
        %1986 = vmatpush1.xpose.msra.mxu0 %v1969
        %1987 = vmatprep.subr.mxu0 0.0
        %1988 = vmatpush1.xpose.msra.mxu0 %v1971
        %1989 = vmatprep.subr.mxu0 0.0
        %1990 = vmatpush1.xpose.msra.mxu0 %v1973
        %1991 = vmatprep.subr.mxu0 0.0
        %1992 = vmatpush1.xpose.msra.mxu0 %v1975
        %1993 = vmatprep.subr.mxu0 0.0
        %1994 = vmatpush1.xpose.msra.mxu0 %v1977
        %1995 = vmatprep.subr.mxu0 0.0
        %1996 = vmatpush1.xpose.msra.mxu0 %v1979
        %1997 = vmatprep.subr.mxu0 0.0
        %1998 = vmatpush1.xpose.msra.mxu0 0.0
        %1999 = vmatprep.subr.mxu0 0.0
        %2000 = vmatpush1.xpose.msra.mxu0 0.0
        %2001 = vmatprep.subr.mxu0 0.0
        %2002 = vmatpush1.xpose.msra.mxu0 0.0
        %2003 = vmatprep.subr.mxu0 0.0
        %2004 = vmatpush1.xpose.msra.mxu0 0.0
        %2005 = vmatprep.subr.mxu0 0.0
        %2006 = vmatpush1.xpose.msra.mxu0 0.0
        %2007 = vmatprep.subr.mxu0 0.0
        %2008 = vmatpush1.xpose.msra.mxu0 0.0
        %2009 = vmatprep.subr.mxu0 0.0
        %2010 = vmatpush1.xpose.msra.mxu0 0.0
        %2011 = vmatprep.subr.mxu0 0.0
        %2012 = vmatpush1.xpose.msra.mxu0 0.0
        %2013 = vmatprep.subr.mxu0 0.0
        %2014 = vmatpush1.xpose.msra.mxu0 0.0
        %2015 = vmatprep.subr.mxu0 0.0
        %2016 = vmatpush1.xpose.msra.mxu0 0.0
        %2017 = vmatprep.subr.mxu0 0.0
        %2018 = vmatpush1.xpose.msra.mxu0 0.0
        %2019 = vmatprep.subr.mxu0 0.0
        %2020 = vmatpush1.xpose.msra.mxu0 0.0
        %2021 = vmatprep.subr.mxu0 0.0
        %2022 = vmatpush1.xpose.msra.mxu0 0.0
        %2023 = vmatprep.subr.mxu0 0.0
        %2024 = vmatpush1.xpose.msra.mxu0 0.0
        %2025 = vmatprep.subr.mxu0 0.0
        %2026 = vmatpush1.xpose.msra.mxu0 0.0
        %2027 = vmatprep.subr.mxu0 0.0
        %2028 = vmatpush1.xpose.msra.mxu0 0.0
        %2029 = vmatprep.subr.mxu0 0.0
        %2030 = vmatpush1.xpose.msra.mxu0 0.0
        %2031 = vmatprep.subr.mxu0 0.0
        %2032 = vmatpush1.xpose.msra.mxu0 0.0
        %2033 = vmatprep.subr.mxu0 0.0
        %2034 = vmatpush1.xpose.msra.mxu0 0.0
        %2035 = vmatprep.subr.mxu0 0.0
        %2036 = vmatpush1.xpose.msra.mxu0 0.0
        %2037 = vmatprep.subr.mxu0 0.0
        %2038 = vmatpush1.xpose.msra.mxu0 0.0
        %2039 = vmatprep.subr.mxu0 0.0
        %2040 = vmatpush1.xpose.msra.mxu0 0.0
        %2041 = vmatprep.subr.mxu0 0.0
        %2042 = vmatpush1.xpose.msra.mxu0 0.0
        %2043 = vmatprep.subr.mxu0 0.0
        %2044 = vmatpush1.xpose.msra.mxu0 0.0
        %2045 = vmatprep.mubr.f32.mxu0 0.0
        %2046 = vmatmul.mubr.f32.gmra.mrb[0].mxu0 %v1949
        %v2047 = vpop.f32.mrb[0].mxu0
        %v2048 = vadd.f32 %v898, %v2047
        %v2049 = vpop.f32.mrb[0].mxu0
        %2050 = vmatprep.mubr.f32.mxu0 0.0
        %2051 = vmatmul.mubr.f32.gmra.mrb[0].mxu0 %v1951
        %v2052 = vpop.f32.mrb[0].mxu0
        %v2053 = vadd.f32 %v899, %v2052
        %v2054 = vpop.f32.mrb[0].mxu0
        %2055 = vmatprep.mubr.f32.mxu0 0.0
        %2056 = vmatmul.mubr.f32.gmra.mrb[0].mxu0 %v1953
        %v2057 = vpop.f32.mrb[0].mxu0
        %v2058 = vadd.f32 %v900, %v2057
        %v2059 = vpop.f32.mrb[0].mxu0
        %2060 = vmatprep.mubr.f32.mxu0 0.0
        %2061 = vmatmul.mubr.f32.gmra.mrb[0].mxu0 %v1955
        %v2062 = vpop.f32.mrb[0].mxu0
        %v2063 = vadd.f32 %v901, %v2062
        %v2064 = vpop.f32.mrb[0].mxu0
        %2065 = vmatprep.mubr.f32.mxu0 0.0
        %2066 = vmatmul.mubr.f32.gmra.mrb[0].mxu0 %v1957
        %v2067 = vpop.f32.mrb[0].mxu0
        %v2068 = vadd.f32 %v902, %v2067
        %v2069 = vpop.f32.mrb[0].mxu0
        %2070 = vmatprep.mubr.f32.mxu0 0.0
        %2071 = vmatmul.mubr.f32.gmra.mrb[0].mxu0 %v1959
        %v2072 = vpop.f32.mrb[0].mxu0
        %v2073 = vadd.f32 %v903, %v2072
        %v2074 = vpop.f32.mrb[0].mxu0
        %2075 = vmatprep.mubr.f32.mxu0 0.0
        %2076 = vmatmul.mubr.f32.gmra.mrb[0].mxu0 %v1961
        %v2077 = vpop.f32.mrb[0].mxu0
        %v2078 = vadd.f32 %v904, %v2077
        %v2079 = vpop.f32.mrb[0].mxu0
        %2080 = vmatprep.mubr.f32.mxu0 0.0
        %2081 = vmatmul.mubr.f32.gmra.mrb[0].mxu0 %v1963
        %v2082 = vpop.f32.mrb[0].mxu0
        %v2083 = vadd.f32 %v905, %v2082
        %v2084 = vpop.f32.mrb[0].mxu0
        %2085 = vdwg.mxu0
        %v2086 = vsel %vm1265, %v1879, -inf
        %2087 = vmax.xlane.f32.xlu0 %v2086
        %v2088 = vpop.xlane.xlu0 %2087
        %v2089 = vsel %vm1265, %v1884, -inf
        %2090 = vmax.xlane.f32.xlu0 %v2089
        %v2091 = vpop.xlane.xlu0 %2090
        %v2092 = vsel %vm1265, %v1889, -inf
        %2093 = vmax.xlane.f32.xlu0 %v2092
        %v2094 = vpop.xlane.xlu0 %2093
        %v2095 = vsel %vm1265, %v1894, -inf
        %2096 = vmax.xlane.f32.xlu0 %v2095
        %v2097 = vpop.xlane.xlu0 %2096
        %v2098 = vsel %vm1265, %v1899, -inf
        %2099 = vmax.xlane.f32.xlu0 %v2098
        %v2100 = vpop.xlane.xlu0 %2099
        %v2101 = vsel %vm1265, %v1904, -inf
        %2102 = vmax.xlane.f32.xlu0 %v2101
        %v2103 = vpop.xlane.xlu0 %2102
        %v2104 = vsel %vm1265, %v1909, -inf
        %2105 = vmax.xlane.f32.xlu0 %v2104
        %v2106 = vpop.xlane.xlu0 %2105
        %v2107 = vsel %vm1265, %v1914, -inf
        %2108 = vmax.xlane.f32.xlu0 %v2107
        %v2109 = vpop.xlane.xlu0 %2108
        %v2110 = vsel %vm1265, %v2048, -inf
        %2111 = vmax.xlane.f32.xlu0 %v2110
        %v2112 = vpop.xlane.xlu0 %2111
        %v2113 = vsel %vm1265, %v2053, -inf
        %2114 = vmax.xlane.f32.xlu0 %v2113
        %v2115 = vpop.xlane.xlu0 %2114
        %v2116 = vsel %vm1265, %v2058, -inf
        %2117 = vmax.xlane.f32.xlu0 %v2116
        %v2118 = vpop.xlane.xlu0 %2117
        %v2119 = vsel %vm1265, %v2063, -inf
        %2120 = vmax.xlane.f32.xlu0 %v2119
        %v2121 = vpop.xlane.xlu0 %2120
        %v2122 = vsel %vm1265, %v2068, -inf
        %2123 = vmax.xlane.f32.xlu0 %v2122
        %v2124 = vpop.xlane.xlu0 %2123
        %v2125 = vsel %vm1265, %v2073, -inf
        %2126 = vmax.xlane.f32.xlu0 %v2125
        %v2127 = vpop.xlane.xlu0 %2126
        %v2128 = vsel %vm1265, %v2078, -inf
        %2129 = vmax.xlane.f32.xlu0 %v2128
        %v2130 = vpop.xlane.xlu0 %2129
        %v2131 = vsel %vm1265, %v2083, -inf
        %2132 = vmax.xlane.f32.xlu0 %v2131
        %v2133 = vpop.xlane.xlu0 %2132
        %v2134 = vsub.f32 %v1879, %v2088
        %v2135 = vsub.f32 %v1884, %v2091
        %v2136 = vsub.f32 %v1889, %v2094
        %v2137 = vsub.f32 %v1894, %v2097
        %v2138 = vsub.f32 %v1899, %v2100
        %v2139 = vsub.f32 %v1904, %v2103
        %v2140 = vsub.f32 %v1909, %v2106
        %v2141 = vsub.f32 %v1914, %v2109
        %v2142 = vsub.f32 %v2048, %v2112
        %v2143 = vsub.f32 %v2053, %v2115
        %v2144 = vsub.f32 %v2058, %v2118
        %v2145 = vsub.f32 %v2063, %v2121
        %v2146 = vsub.f32 %v2068, %v2124
        %v2147 = vsub.f32 %v2073, %v2127
        %v2148 = vsub.f32 %v2078, %v2130
        %v2149 = vsub.f32 %v2083, %v2133
        %v2150 = vmul.f32 %v2134, 1.442695
        %v2151 = vpow.pop %v2150
        %v2152 = vmul.f32 %v2135, 1.442695
        %v2153 = vpow.pop %v2152
        %v2154 = vmul.f32 %v2136, 1.442695
        %v2155 = vpow.pop %v2154
        %v2156 = vmul.f32 %v2137, 1.442695
        %v2157 = vpow.pop %v2156
        %v2158 = vmul.f32 %v2138, 1.442695
        %v2159 = vpow.pop %v2158
        %v2160 = vmul.f32 %v2139, 1.442695
        %v2161 = vpow.pop %v2160
        %v2162 = vmul.f32 %v2140, 1.442695
        %v2163 = vpow.pop %v2162
        %v2164 = vmul.f32 %v2141, 1.442695
        %v2165 = vpow.pop %v2164
        %v2166 = vmul.f32 %v2142, 1.442695
        %v2167 = vpow.pop %v2166
        %v2168 = vmul.f32 %v2143, 1.442695
        %v2169 = vpow.pop %v2168
        %v2170 = vmul.f32 %v2144, 1.442695
        %v2171 = vpow.pop %v2170
        %v2172 = vmul.f32 %v2145, 1.442695
        %v2173 = vpow.pop %v2172
        %v2174 = vmul.f32 %v2146, 1.442695
        %v2175 = vpow.pop %v2174
        %v2176 = vmul.f32 %v2147, 1.442695
        %v2177 = vpow.pop %v2176
        %v2178 = vmul.f32 %v2148, 1.442695
        %v2179 = vpow.pop %v2178
        %v2180 = vmul.f32 %v2149, 1.442695
        %v2181 = vpow.pop %v2180
        %v2182 = vsel %vm1265, %v2151, 0.0
        %2183 = vadd.xlane.f32.xlu0 %v2182
        %v2184 = vpop.xlane.xlu0 %2183
        %v2185 = vsel %vm1265, %v2153, 0.0
        %2186 = vadd.xlane.f32.xlu0 %v2185
        %v2187 = vpop.xlane.xlu0 %2186
        %v2188 = vsel %vm1265, %v2155, 0.0
        %2189 = vadd.xlane.f32.xlu0 %v2188
        %v2190 = vpop.xlane.xlu0 %2189
        %v2191 = vsel %vm1265, %v2157, 0.0
        %2192 = vadd.xlane.f32.xlu0 %v2191
        %v2193 = vpop.xlane.xlu0 %2192
        %v2194 = vsel %vm1265, %v2159, 0.0
        %2195 = vadd.xlane.f32.xlu0 %v2194
        %v2196 = vpop.xlane.xlu0 %2195
        %v2197 = vsel %vm1265, %v2161, 0.0
        %2198 = vadd.xlane.f32.xlu0 %v2197
        %v2199 = vpop.xlane.xlu0 %2198
        %v2200 = vsel %vm1265, %v2163, 0.0
        %2201 = vadd.xlane.f32.xlu0 %v2200
        %v2202 = vpop.xlane.xlu0 %2201
        %v2203 = vsel %vm1265, %v2165, 0.0
        %2204 = vadd.xlane.f32.xlu0 %v2203
        %v2205 = vpop.xlane.xlu0 %2204
        %v2206 = vsel %vm1265, %v2167, 0.0
        %2207 = vadd.xlane.f32.xlu0 %v2206
        %v2208 = vpop.xlane.xlu0 %2207
        %v2209 = vsel %vm1265, %v2169, 0.0
        %2210 = vadd.xlane.f32.xlu0 %v2209
        %v2211 = vpop.xlane.xlu0 %2210
        %v2212 = vsel %vm1265, %v2171, 0.0
        %2213 = vadd.xlane.f32.xlu0 %v2212
        %v2214 = vpop.xlane.xlu0 %2213
        %v2215 = vsel %vm1265, %v2173, 0.0
        %2216 = vadd.xlane.f32.xlu0 %v2215
        %v2217 = vpop.xlane.xlu0 %2216
        %v2218 = vsel %vm1265, %v2175, 0.0
        %2219 = vadd.xlane.f32.xlu0 %v2218
        %v2220 = vpop.xlane.xlu0 %2219
        %v2221 = vsel %vm1265, %v2177, 0.0
        %2222 = vadd.xlane.f32.xlu0 %v2221
        %v2223 = vpop.xlane.xlu0 %2222
        %v2224 = vsel %vm1265, %v2179, 0.0
        %2225 = vadd.xlane.f32.xlu0 %v2224
        %v2226 = vpop.xlane.xlu0 %2225
        %v2227 = vsel %vm1265, %v2181, 0.0
        %2228 = vadd.xlane.f32.xlu0 %v2227
        %v2229 = vpop.xlane.xlu0 %2228
        %v2230 = vrcp.pop %v2184
        %v2231 = vmul.f32 %v2151, %v2230
        %v2232 = vrcp.pop %v2187
        %v2233 = vmul.f32 %v2153, %v2232
        %v2234 = vrcp.pop %v2190
        %v2235 = vmul.f32 %v2155, %v2234
        %v2236 = vrcp.pop %v2193
        %v2237 = vmul.f32 %v2157, %v2236
        %v2238 = vrcp.pop %v2196
        %v2239 = vmul.f32 %v2159, %v2238
        %v2240 = vrcp.pop %v2199
        %v2241 = vmul.f32 %v2161, %v2240
        %v2242 = vrcp.pop %v2202
        %v2243 = vmul.f32 %v2163, %v2242
        %v2244 = vrcp.pop %v2205
        %v2245 = vmul.f32 %v2165, %v2244
        %v2246 = vrcp.pop %v2208
        %v2247 = vmul.f32 %v2167, %v2246
        %v2248 = vrcp.pop %v2211
        %v2249 = vmul.f32 %v2169, %v2248
        %v2250 = vrcp.pop %v2214
        %v2251 = vmul.f32 %v2171, %v2250
        %v2252 = vrcp.pop %v2217
        %v2253 = vmul.f32 %v2173, %v2252
        %v2254 = vrcp.pop %v2220
        %v2255 = vmul.f32 %v2175, %v2254
        %v2256 = vrcp.pop %v2223
        %v2257 = vmul.f32 %v2177, %v2256
        %v2258 = vrcp.pop %v2226
        %v2259 = vmul.f32 %v2179, %v2258
        %v2260 = vrcp.pop %v2229
        %v2261 = vmul.f32 %v2181, %v2260
        %2262 = vrot.lane.b32.xlu0 %v796, 48
        %v2263 = vpop.permute.xlu0 %2262
        %2264 = vrot.lane.b32.xlu0 %v801, 48
        %v2265 = vpop.permute.xlu0 %2264
        %2266 = vrot.lane.b32.xlu0 %v806, 48
        %v2267 = vpop.permute.xlu0 %2266
        %2268 = vrot.lane.b32.xlu0 %v811, 48
        %v2269 = vpop.permute.xlu0 %2268
        %2270 = vrot.lane.b32.xlu0 %v816, 48
        %v2271 = vpop.permute.xlu0 %2270
        %2272 = vrot.lane.b32.xlu0 %v821, 48
        %v2273 = vpop.permute.xlu0 %2272
        %2274 = vrot.lane.b32.xlu0 %v826, 48
        %v2275 = vpop.permute.xlu0 %2274
        %2276 = vrot.lane.b32.xlu0 %v831, 48
        %v2277 = vpop.permute.xlu0 %2276
        %v2287 = vsel %vm1265, %v2231, 0
        %v2290 = vsel %vm1265, %v2233, 0
        %v2293 = vsel %vm1265, %v2235, 0
        %v2296 = vsel %vm1265, %v2237, 0
        %v2299 = vsel %vm1265, %v2239, 0
        %v2302 = vsel %vm1265, %v2241, 0
        %v2305 = vsel %vm1265, %v2243, 0
        %v2308 = vsel %vm1265, %v2245, 0
        %2310 = vmatprep.subr.mxu0 0.0
        %2311 = vmatpush1.msra.mxu0 %v2263
        %2312 = vmatprep.subr.mxu0 0.0
        %2313 = vmatpush1.msra.mxu0 %v2265
        %2314 = vmatprep.subr.mxu0 0.0
        %2315 = vmatpush1.msra.mxu0 %v2267
        %2316 = vmatprep.subr.mxu0 0.0
        %2317 = vmatpush1.msra.mxu0 %v2269
        %2318 = vmatprep.subr.mxu0 0.0
        %2319 = vmatpush1.msra.mxu0 %v2271
        %2320 = vmatprep.subr.mxu0 0.0
        %2321 = vmatpush1.msra.mxu0 %v2273
        %2322 = vmatprep.subr.mxu0 0.0
        %2323 = vmatpush1.msra.mxu0 %v2275
        %2324 = vmatprep.subr.mxu0 0.0
        %2325 = vmatpush1.msra.mxu0 %v2277
        %2326 = vmatprep.subr.mxu0 0.0
        %2327 = vmatpush1.msra.mxu0 0.0
        %2328 = vmatprep.subr.mxu0 0.0
        %2329 = vmatpush1.msra.mxu0 0.0
        %2330 = vmatprep.subr.mxu0 0.0
        %2331 = vmatpush1.msra.mxu0 0.0
        %2332 = vmatprep.subr.mxu0 0.0
        %2333 = vmatpush1.msra.mxu0 0.0
        %2334 = vmatprep.subr.mxu0 0.0
        %2335 = vmatpush1.msra.mxu0 0.0
        %2336 = vmatprep.subr.mxu0 0.0
        %2337 = vmatpush1.msra.mxu0 0.0
        %2338 = vmatprep.subr.mxu0 0.0
        %2339 = vmatpush1.msra.mxu0 0.0
        %2340 = vmatprep.subr.mxu0 0.0
        %2341 = vmatpush1.msra.mxu0 0.0
        %2342 = vmatprep.subr.mxu0 0.0
        %2343 = vmatpush1.msra.mxu0 0.0
        %2344 = vmatprep.subr.mxu0 0.0
        %2345 = vmatpush1.msra.mxu0 0.0
        %2346 = vmatprep.subr.mxu0 0.0
        %2347 = vmatpush1.msra.mxu0 0.0
        %2348 = vmatprep.subr.mxu0 0.0
        %2349 = vmatpush1.msra.mxu0 0.0
        %2350 = vmatprep.subr.mxu0 0.0
        %2351 = vmatpush1.msra.mxu0 0.0
        %2352 = vmatprep.subr.mxu0 0.0
        %2353 = vmatpush1.msra.mxu0 0.0
        %2354 = vmatprep.subr.mxu0 0.0
        %2355 = vmatpush1.msra.mxu0 0.0
        %2356 = vmatprep.subr.mxu0 0.0
        %2357 = vmatpush1.msra.mxu0 0.0
        %2358 = vmatprep.subr.mxu0 0.0
        %2359 = vmatpush1.msra.mxu0 0.0
        %2360 = vmatprep.subr.mxu0 0.0
        %2361 = vmatpush1.msra.mxu0 0.0
        %2362 = vmatprep.subr.mxu0 0.0
        %2363 = vmatpush1.msra.mxu0 0.0
        %2364 = vmatprep.subr.mxu0 0.0
        %2365 = vmatpush1.msra.mxu0 0.0
        %2366 = vmatprep.subr.mxu0 0.0
        %2367 = vmatpush1.msra.mxu0 0.0
        %2368 = vmatprep.subr.mxu0 0.0
        %2369 = vmatpush1.msra.mxu0 0.0
        %2370 = vmatprep.subr.mxu0 0.0
        %2371 = vmatpush1.msra.mxu0 0.0
        %2372 = vmatprep.subr.mxu0 0.0
        %2373 = vmatpush1.msra.mxu0 0.0
        %2374 = vmatprep.mubr.f32.mxu0 0.0
        %2375 = vmatmul.mubr.f32.gmra.mrb[0].mxu0 %v2287
        %v2376 = vpop.f32.mrb[0].mxu0
        %v2377 = vadd.f32 0.0, %v2376
        %v2378 = vpop.f32.mrb[0].mxu0
        %2379 = vmatprep.mubr.f32.mxu0 0.0
        %2380 = vmatmul.mubr.f32.gmra.mrb[0].mxu0 %v2290
        %v2381 = vpop.f32.mrb[0].mxu0
        %v2382 = vadd.f32 0.0, %v2381
        %v2383 = vpop.f32.mrb[0].mxu0
        %2384 = vmatprep.mubr.f32.mxu0 0.0
        %2385 = vmatmul.mubr.f32.gmra.mrb[0].mxu0 %v2293
        %v2386 = vpop.f32.mrb[0].mxu0
        %v2387 = vadd.f32 0.0, %v2386
        %v2388 = vpop.f32.mrb[0].mxu0
        %2389 = vmatprep.mubr.f32.mxu0 0.0
        %2390 = vmatmul.mubr.f32.gmra.mrb[0].mxu0 %v2296
        %v2391 = vpop.f32.mrb[0].mxu0
        %v2392 = vadd.f32 0.0, %v2391
        %v2393 = vpop.f32.mrb[0].mxu0
        %2394 = vmatprep.mubr.f32.mxu0 0.0
        %2395 = vmatmul.mubr.f32.gmra.mrb[0].mxu0 %v2299
        %v2396 = vpop.f32.mrb[0].mxu0
        %v2397 = vadd.f32 0.0, %v2396
        %v2398 = vpop.f32.mrb[0].mxu0
        %2399 = vmatprep.mubr.f32.mxu0 0.0
        %2400 = vmatmul.mubr.f32.gmra.mrb[0].mxu0 %v2302
        %v2401 = vpop.f32.mrb[0].mxu0
        %v2402 = vadd.f32 0.0, %v2401
        %v2403 = vpop.f32.mrb[0].mxu0
        %2404 = vmatprep.mubr.f32.mxu0 0.0
        %2405 = vmatmul.mubr.f32.gmra.mrb[0].mxu0 %v2305
        %v2406 = vpop.f32.mrb[0].mxu0
        %v2407 = vadd.f32 0.0, %v2406
        %v2408 = vpop.f32.mrb[0].mxu0
        %2409 = vmatprep.mubr.f32.mxu0 0.0
        %2410 = vmatmul.mubr.f32.gmra.mrb[0].mxu0 %v2308
        %v2411 = vpop.f32.mrb[0].mxu0
        %v2412 = vadd.f32 0.0, %v2411
        %v2413 = vpop.f32.mrb[0].mxu0
        %2414 = vdwg.mxu0
        %2415 = vrot.lane.b32.xlu0 %v836, 48
        %v2416 = vpop.permute.xlu0 %2415
        %2417 = vrot.lane.b32.xlu0 %v841, 48
        %v2418 = vpop.permute.xlu0 %2417
        %2419 = vrot.lane.b32.xlu0 %v846, 48
        %v2420 = vpop.permute.xlu0 %2419
        %2421 = vrot.lane.b32.xlu0 %v851, 48
        %v2422 = vpop.permute.xlu0 %2421
        %2423 = vrot.lane.b32.xlu0 %v856, 48
        %v2424 = vpop.permute.xlu0 %2423
        %2425 = vrot.lane.b32.xlu0 %v861, 48
        %v2426 = vpop.permute.xlu0 %2425
        %2427 = vrot.lane.b32.xlu0 %v866, 48
        %v2428 = vpop.permute.xlu0 %2427
        %2429 = vrot.lane.b32.xlu0 %v871, 48
        %v2430 = vpop.permute.xlu0 %2429
        %v2440 = vsel %vm1265, %v2247, 0
        %v2443 = vsel %vm1265, %v2249, 0
        %v2446 = vsel %vm1265, %v2251, 0
        %v2449 = vsel %vm1265, %v2253, 0
        %v2452 = vsel %vm1265, %v2255, 0
        %v2455 = vsel %vm1265, %v2257, 0
        %v2458 = vsel %vm1265, %v2259, 0
        %v2461 = vsel %vm1265, %v2261, 0
        %2463 = vmatprep.subr.mxu0 0.0
        %2464 = vmatpush1.msra.mxu0 %v2416
        %2465 = vmatprep.subr.mxu0 0.0
        %2466 = vmatpush1.msra.mxu0 %v2418
        %2467 = vmatprep.subr.mxu0 0.0
        %2468 = vmatpush1.msra.mxu0 %v2420
        %2469 = vmatprep.subr.mxu0 0.0
        %2470 = vmatpush1.msra.mxu0 %v2422
        %2471 = vmatprep.subr.mxu0 0.0
        %2472 = vmatpush1.msra.mxu0 %v2424
        %2473 = vmatprep.subr.mxu0 0.0
        %2474 = vmatpush1.msra.mxu0 %v2426
        %2475 = vmatprep.subr.mxu0 0.0
        %2476 = vmatpush1.msra.mxu0 %v2428
        %2477 = vmatprep.subr.mxu0 0.0
        %2478 = vmatpush1.msra.mxu0 %v2430
        %2479 = vmatprep.subr.mxu0 0.0
        %2480 = vmatpush1.msra.mxu0 0.0
        %2481 = vmatprep.subr.mxu0 0.0
        %2482 = vmatpush1.msra.mxu0 0.0
        %2483 = vmatprep.subr.mxu0 0.0
        %2484 = vmatpush1.msra.mxu0 0.0
        %2485 = vmatprep.subr.mxu0 0.0
        %2486 = vmatpush1.msra.mxu0 0.0
        %2487 = vmatprep.subr.mxu0 0.0
        %2488 = vmatpush1.msra.mxu0 0.0
        %2489 = vmatprep.subr.mxu0 0.0
        %2490 = vmatpush1.msra.mxu0 0.0
        %2491 = vmatprep.subr.mxu0 0.0
        %2492 = vmatpush1.msra.mxu0 0.0
        %2493 = vmatprep.subr.mxu0 0.0
        %2494 = vmatpush1.msra.mxu0 0.0
        %2495 = vmatprep.subr.mxu0 0.0
        %2496 = vmatpush1.msra.mxu0 0.0
        %2497 = vmatprep.subr.mxu0 0.0
        %2498 = vmatpush1.msra.mxu0 0.0
        %2499 = vmatprep.subr.mxu0 0.0
        %2500 = vmatpush1.msra.mxu0 0.0
        %2501 = vmatprep.subr.mxu0 0.0
        %2502 = vmatpush1.msra.mxu0 0.0
        %2503 = vmatprep.subr.mxu0 0.0
        %2504 = vmatpush1.msra.mxu0 0.0
        %2505 = vmatprep.subr.mxu0 0.0
        %2506 = vmatpush1.msra.mxu0 0.0
        %2507 = vmatprep.subr.mxu0 0.0
        %2508 = vmatpush1.msra.mxu0 0.0
        %2509 = vmatprep.subr.mxu0 0.0
        %2510 = vmatpush1.msra.mxu0 0.0
        %2511 = vmatprep.subr.mxu0 0.0
        %2512 = vmatpush1.msra.mxu0 0.0
        %2513 = vmatprep.subr.mxu0 0.0
        %2514 = vmatpush1.msra.mxu0 0.0
        %2515 = vmatprep.subr.mxu0 0.0
        %2516 = vmatpush1.msra.mxu0 0.0
        %2517 = vmatprep.subr.mxu0 0.0
        %2518 = vmatpush1.msra.mxu0 0.0
        %2519 = vmatprep.subr.mxu0 0.0
        %2520 = vmatpush1.msra.mxu0 0.0
        %2521 = vmatprep.subr.mxu0 0.0
        %2522 = vmatpush1.msra.mxu0 0.0
        %2523 = vmatprep.subr.mxu0 0.0
        %2524 = vmatpush1.msra.mxu0 0.0
        %2525 = vmatprep.subr.mxu0 0.0
        %2526 = vmatpush1.msra.mxu0 0.0
        %2527 = vmatprep.mubr.f32.mxu0 0.0
        %2528 = vmatmul.mubr.f32.gmra.mrb[0].mxu0 %v2440
        %v2529 = vpop.f32.mrb[0].mxu0
        %v2530 = vadd.f32 0.0, %v2529
        %v2531 = vpop.f32.mrb[0].mxu0
        %2532 = vmatprep.mubr.f32.mxu0 0.0
        %2533 = vmatmul.mubr.f32.gmra.mrb[0].mxu0 %v2443
        %v2534 = vpop.f32.mrb[0].mxu0
        %v2535 = vadd.f32 0.0, %v2534
        %v2536 = vpop.f32.mrb[0].mxu0
        %2537 = vmatprep.mubr.f32.mxu0 0.0
        %2538 = vmatmul.mubr.f32.gmra.mrb[0].mxu0 %v2446
        %v2539 = vpop.f32.mrb[0].mxu0
        %v2540 = vadd.f32 0.0, %v2539
        %v2541 = vpop.f32.mrb[0].mxu0
        %2542 = vmatprep.mubr.f32.mxu0 0.0
        %2543 = vmatmul.mubr.f32.gmra.mrb[0].mxu0 %v2449
        %v2544 = vpop.f32.mrb[0].mxu0
        %v2545 = vadd.f32 0.0, %v2544
        %v2546 = vpop.f32.mrb[0].mxu0
        %2547 = vmatprep.mubr.f32.mxu0 0.0
        %2548 = vmatmul.mubr.f32.gmra.mrb[0].mxu0 %v2452
        %v2549 = vpop.f32.mrb[0].mxu0
        %v2550 = vadd.f32 0.0, %v2549
        %v2551 = vpop.f32.mrb[0].mxu0
        %2552 = vmatprep.mubr.f32.mxu0 0.0
        %2553 = vmatmul.mubr.f32.gmra.mrb[0].mxu0 %v2455
        %v2554 = vpop.f32.mrb[0].mxu0
        %v2555 = vadd.f32 0.0, %v2554
        %v2556 = vpop.f32.mrb[0].mxu0
        %2557 = vmatprep.mubr.f32.mxu0 0.0
        %2558 = vmatmul.mubr.f32.gmra.mrb[0].mxu0 %v2458
        %v2559 = vpop.f32.mrb[0].mxu0
        %v2560 = vadd.f32 0.0, %v2559
        %v2561 = vpop.f32.mrb[0].mxu0
        %2562 = vmatprep.mubr.f32.mxu0 0.0
        %2563 = vmatmul.mubr.f32.gmra.mrb[0].mxu0 %v2461
        %v2564 = vpop.f32.mrb[0].mxu0
        %v2565 = vadd.f32 0.0, %v2564
        %v2566 = vpop.f32.mrb[0].mxu0
        %2567 = vdwg.mxu0
        %v2569 = vsel %vm950, %v2377, 0
        %v2572 = vsel %vm950, %v2382, 0
        %v2575 = vsel %vm950, %v2387, 0
        %v2578 = vsel %vm950, %v2392, 0
        %v2581 = vsel %vm950, %v2397, 0
        %v2584 = vsel %vm950, %v2402, 0
        %v2587 = vsel %vm950, %v2407, 0
        %v2590 = vsel %vm950, %v2412, 0
        %v2593 = vsel %vm950, %v2530, 0
        %v2596 = vsel %vm950, %v2535, 0
        %v2599 = vsel %vm950, %v2540, 0
        %v2602 = vsel %vm950, %v2545, 0
        %v2605 = vsel %vm950, %v2550, 0
        %v2608 = vsel %vm950, %v2555, 0
        %v2611 = vsel %vm950, %v2560, 0
        %v2614 = vsel %vm950, %v2565, 0
        %2616 = vmatprep.subr.mxu0 0.0
        %2617 = vmatpush1.msra.mxu0 %v908
        %2618 = vmatprep.subr.mxu0 0.0
        %2619 = vmatpush1.msra.mxu0 %v909
        %2620 = vmatprep.subr.mxu0 0.0
        %2621 = vmatpush1.msra.mxu0 0.0
        %2622 = vmatprep.subr.mxu0 0.0
        %2623 = vmatpush1.msra.mxu0 0.0
        %2624 = vmatprep.subr.mxu0 0.0
        %2625 = vmatpush1.msra.mxu0 0.0
        %2626 = vmatprep.subr.mxu0 0.0
        %2627 = vmatpush1.msra.mxu0 0.0
        %2628 = vmatprep.subr.mxu0 0.0
        %2629 = vmatpush1.msra.mxu0 0.0
        %2630 = vmatprep.subr.mxu0 0.0
        %2631 = vmatpush1.msra.mxu0 0.0
        %2632 = vmatprep.subr.mxu0 0.0
        %2633 = vmatpush1.msra.mxu0 0.0
        %2634 = vmatprep.subr.mxu0 0.0
        %2635 = vmatpush1.msra.mxu0 0.0
        %2636 = vmatprep.subr.mxu0 0.0
        %2637 = vmatpush1.msra.mxu0 0.0
        %2638 = vmatprep.subr.mxu0 0.0
        %2639 = vmatpush1.msra.mxu0 0.0
        %2640 = vmatprep.subr.mxu0 0.0
        %2641 = vmatpush1.msra.mxu0 0.0
        %2642 = vmatprep.subr.mxu0 0.0
        %2643 = vmatpush1.msra.mxu0 0.0
        %2644 = vmatprep.subr.mxu0 0.0
        %2645 = vmatpush1.msra.mxu0 0.0
        %2646 = vmatprep.subr.mxu0 0.0
        %2647 = vmatpush1.msra.mxu0 0.0
        %2648 = vmatprep.subr.mxu0 0.0
        %2649 = vmatpush1.msra.mxu0 0.0
        %2650 = vmatprep.subr.mxu0 0.0
        %2651 = vmatpush1.msra.mxu0 0.0
        %2652 = vmatprep.subr.mxu0 0.0
        %2653 = vmatpush1.msra.mxu0 0.0
        %2654 = vmatprep.subr.mxu0 0.0
        %2655 = vmatpush1.msra.mxu0 0.0
        %2656 = vmatprep.subr.mxu0 0.0
        %2657 = vmatpush1.msra.mxu0 0.0
        %2658 = vmatprep.subr.mxu0 0.0
        %2659 = vmatpush1.msra.mxu0 0.0
        %2660 = vmatprep.subr.mxu0 0.0
        %2661 = vmatpush1.msra.mxu0 0.0
        %2662 = vmatprep.subr.mxu0 0.0
        %2663 = vmatpush1.msra.mxu0 0.0
        %2664 = vmatprep.subr.mxu0 0.0
        %2665 = vmatpush1.msra.mxu0 0.0
        %2666 = vmatprep.subr.mxu0 0.0
        %2667 = vmatpush1.msra.mxu0 0.0
        %2668 = vmatprep.subr.mxu0 0.0
        %2669 = vmatpush1.msra.mxu0 0.0
        %2670 = vmatprep.subr.mxu0 0.0
        %2671 = vmatpush1.msra.mxu0 0.0
        %2672 = vmatprep.subr.mxu0 0.0
        %2673 = vmatpush1.msra.mxu0 0.0
        %2674 = vmatprep.subr.mxu0 0.0
        %2675 = vmatpush1.msra.mxu0 0.0
        %2676 = vmatprep.subr.mxu0 0.0
        %2677 = vmatpush1.msra.mxu0 0.0
        %2678 = vmatprep.subr.mxu0 0.0
        %2679 = vmatpush1.msra.mxu0 0.0
        %2680 = vmatprep.mubr.f32.mxu0 0.0
        %2681 = vmatmul.mubr.f32.gmra.mrb[0].mxu0 %v2569
        %v2682 = vpop.f32.mrb[0].mxu0
        %v2683 = vadd.f32 0.0, %v2682
        %v2684 = vpop.f32.mrb[0].mxu0
        %2685 = vmatprep.mubr.f32.mxu0 0.0
        %2686 = vmatmul.mubr.f32.gmra.mrb[0].mxu0 %v2572
        %v2687 = vpop.f32.mrb[0].mxu0
        %v2688 = vadd.f32 0.0, %v2687
        %v2689 = vpop.f32.mrb[0].mxu0
        %2690 = vmatprep.mubr.f32.mxu0 0.0
        %2691 = vmatmul.mubr.f32.gmra.mrb[0].mxu0 %v2575
        %v2692 = vpop.f32.mrb[0].mxu0
        %v2693 = vadd.f32 0.0, %v2692
        %v2694 = vpop.f32.mrb[0].mxu0
        %2695 = vmatprep.mubr.f32.mxu0 0.0
        %2696 = vmatmul.mubr.f32.gmra.mrb[0].mxu0 %v2578
        %v2697 = vpop.f32.mrb[0].mxu0
        %v2698 = vadd.f32 0.0, %v2697
        %v2699 = vpop.f32.mrb[0].mxu0
        %2700 = vmatprep.mubr.f32.mxu0 0.0
        %2701 = vmatmul.mubr.f32.gmra.mrb[0].mxu0 %v2581
        %v2702 = vpop.f32.mrb[0].mxu0
        %v2703 = vadd.f32 0.0, %v2702
        %v2704 = vpop.f32.mrb[0].mxu0
        %2705 = vmatprep.mubr.f32.mxu0 0.0
        %2706 = vmatmul.mubr.f32.gmra.mrb[0].mxu0 %v2584
        %v2707 = vpop.f32.mrb[0].mxu0
        %v2708 = vadd.f32 0.0, %v2707
        %v2709 = vpop.f32.mrb[0].mxu0
        %2710 = vmatprep.mubr.f32.mxu0 0.0
        %2711 = vmatmul.mubr.f32.gmra.mrb[0].mxu0 %v2587
        %v2712 = vpop.f32.mrb[0].mxu0
        %v2713 = vadd.f32 0.0, %v2712
        %v2714 = vpop.f32.mrb[0].mxu0
        %2715 = vmatprep.mubr.f32.mxu0 0.0
        %2716 = vmatmul.mubr.f32.gmra.mrb[0].mxu0 %v2590
        %v2717 = vpop.f32.mrb[0].mxu0
        %v2718 = vadd.f32 0.0, %v2717
        %v2719 = vpop.f32.mrb[0].mxu0
        %2720 = vmatprep.mubr.f32.mxu0 0.0
        %2721 = vmatmul.mubr.f32.gmra.mrb[0].mxu0 %v2593
        %v2722 = vpop.f32.mrb[0].mxu0
        %v2723 = vadd.f32 0.0, %v2722
        %v2724 = vpop.f32.mrb[0].mxu0
        %2725 = vmatprep.mubr.f32.mxu0 0.0
        %2726 = vmatmul.mubr.f32.gmra.mrb[0].mxu0 %v2596
        %v2727 = vpop.f32.mrb[0].mxu0
        %v2728 = vadd.f32 0.0, %v2727
        %v2729 = vpop.f32.mrb[0].mxu0
        %2730 = vmatprep.mubr.f32.mxu0 0.0
        %2731 = vmatmul.mubr.f32.gmra.mrb[0].mxu0 %v2599
        %v2732 = vpop.f32.mrb[0].mxu0
        %v2733 = vadd.f32 0.0, %v2732
        %v2734 = vpop.f32.mrb[0].mxu0
        %2735 = vmatprep.mubr.f32.mxu0 0.0
        %2736 = vmatmul.mubr.f32.gmra.mrb[0].mxu0 %v2602
        %v2737 = vpop.f32.mrb[0].mxu0
        %v2738 = vadd.f32 0.0, %v2737
        %v2739 = vpop.f32.mrb[0].mxu0
        %2740 = vmatprep.mubr.f32.mxu0 0.0
        %2741 = vmatmul.mubr.f32.gmra.mrb[0].mxu0 %v2605
        %v2742 = vpop.f32.mrb[0].mxu0
        %v2743 = vadd.f32 0.0, %v2742
        %v2744 = vpop.f32.mrb[0].mxu0
        %2745 = vmatprep.mubr.f32.mxu0 0.0
        %2746 = vmatmul.mubr.f32.gmra.mrb[0].mxu0 %v2608
        %v2747 = vpop.f32.mrb[0].mxu0
        %v2748 = vadd.f32 0.0, %v2747
        %v2749 = vpop.f32.mrb[0].mxu0
        %2750 = vmatprep.mubr.f32.mxu0 0.0
        %2751 = vmatmul.mubr.f32.gmra.mrb[0].mxu0 %v2611
        %v2752 = vpop.f32.mrb[0].mxu0
        %v2753 = vadd.f32 0.0, %v2752
        %v2754 = vpop.f32.mrb[0].mxu0
        %2755 = vmatprep.mubr.f32.mxu0 0.0
        %2756 = vmatmul.mubr.f32.gmra.mrb[0].mxu0 %v2614
        %v2757 = vpop.f32.mrb[0].mxu0
        %v2758 = vadd.f32 0.0, %v2757
        %v2759 = vpop.f32.mrb[0].mxu0
        %2760 = vdwg.mxu0
        %v2762 = vsel %vm950, %v1557, 0
        %v2765 = vsel %vm950, %v1562, 0
        %v2768 = vsel %vm950, %v1567, 0
        %v2771 = vsel %vm950, %v1572, 0
        %v2774 = vsel %vm950, %v1577, 0
        %v2777 = vsel %vm950, %v1582, 0
        %v2780 = vsel %vm950, %v1587, 0
        %v2783 = vsel %vm950, %v1592, 0
        %v2786 = vsel %vm950, %v1710, 0
        %v2789 = vsel %vm950, %v1715, 0
        %v2792 = vsel %vm950, %v1720, 0
        %v2795 = vsel %vm950, %v1725, 0
        %v2798 = vsel %vm950, %v1730, 0
        %v2801 = vsel %vm950, %v1735, 0
        %v2804 = vsel %vm950, %v1740, 0
        %v2807 = vsel %vm950, %v1745, 0
        %2809 = vmatprep.subr.mxu0 0.0
        %2810 = vmatpush1.msra.mxu0 %v906
        %2811 = vmatprep.subr.mxu0 0.0
        %2812 = vmatpush1.msra.mxu0 %v907
        %2813 = vmatprep.subr.mxu0 0.0
        %2814 = vmatpush1.msra.mxu0 0.0
        %2815 = vmatprep.subr.mxu0 0.0
        %2816 = vmatpush1.msra.mxu0 0.0
        %2817 = vmatprep.subr.mxu0 0.0
        %2818 = vmatpush1.msra.mxu0 0.0
        %2819 = vmatprep.subr.mxu0 0.0
        %2820 = vmatpush1.msra.mxu0 0.0
        %2821 = vmatprep.subr.mxu0 0.0
        %2822 = vmatpush1.msra.mxu0 0.0
        %2823 = vmatprep.subr.mxu0 0.0
        %2824 = vmatpush1.msra.mxu0 0.0
        %2825 = vmatprep.subr.mxu0 0.0
        %2826 = vmatpush1.msra.mxu0 0.0
        %2827 = vmatprep.subr.mxu0 0.0
        %2828 = vmatpush1.msra.mxu0 0.0
        %2829 = vmatprep.subr.mxu0 0.0
        %2830 = vmatpush1.msra.mxu0 0.0
        %2831 = vmatprep.subr.mxu0 0.0
        %2832 = vmatpush1.msra.mxu0 0.0
        %2833 = vmatprep.subr.mxu0 0.0
        %2834 = vmatpush1.msra.mxu0 0.0
        %2835 = vmatprep.subr.mxu0 0.0
        %2836 = vmatpush1.msra.mxu0 0.0
        %2837 = vmatprep.subr.mxu0 0.0
        %2838 = vmatpush1.msra.mxu0 0.0
        %2839 = vmatprep.subr.mxu0 0.0
        %2840 = vmatpush1.msra.mxu0 0.0
        %2841 = vmatprep.subr.mxu0 0.0
        %2842 = vmatpush1.msra.mxu0 0.0
        %2843 = vmatprep.subr.mxu0 0.0
        %2844 = vmatpush1.msra.mxu0 0.0
        %2845 = vmatprep.subr.mxu0 0.0
        %2846 = vmatpush1.msra.mxu0 0.0
        %2847 = vmatprep.subr.mxu0 0.0
        %2848 = vmatpush1.msra.mxu0 0.0
        %2849 = vmatprep.subr.mxu0 0.0
        %2850 = vmatpush1.msra.mxu0 0.0
        %2851 = vmatprep.subr.mxu0 0.0
        %2852 = vmatpush1.msra.mxu0 0.0
        %2853 = vmatprep.subr.mxu0 0.0
        %2854 = vmatpush1.msra.mxu0 0.0
        %2855 = vmatprep.subr.mxu0 0.0
        %2856 = vmatpush1.msra.mxu0 0.0
        %2857 = vmatprep.subr.mxu0 0.0
        %2858 = vmatpush1.msra.mxu0 0.0
        %2859 = vmatprep.subr.mxu0 0.0
        %2860 = vmatpush1.msra.mxu0 0.0
        %2861 = vmatprep.subr.mxu0 0.0
        %2862 = vmatpush1.msra.mxu0 0.0
        %2863 = vmatprep.subr.mxu0 0.0
        %2864 = vmatpush1.msra.mxu0 0.0
        %2865 = vmatprep.subr.mxu0 0.0
        %2866 = vmatpush1.msra.mxu0 0.0
        %2867 = vmatprep.subr.mxu0 0.0
        %2868 = vmatpush1.msra.mxu0 0.0
        %2869 = vmatprep.subr.mxu0 0.0
        %2870 = vmatpush1.msra.mxu0 0.0
        %2871 = vmatprep.subr.mxu0 0.0
        %2872 = vmatpush1.msra.mxu0 0.0
        %2873 = vmatprep.mubr.f32.mxu0 0.0
        %2874 = vmatmul.mubr.f32.gmra.mrb[0].mxu0 %v2762
        %v2875 = vpop.f32.mrb[0].mxu0
        %v2876 = vadd.f32 %v2683, %v2875
        %v2877 = vpop.f32.mrb[0].mxu0
        %2878 = vmatprep.mubr.f32.mxu0 0.0
        %2879 = vmatmul.mubr.f32.gmra.mrb[0].mxu0 %v2765
        %v2880 = vpop.f32.mrb[0].mxu0
        %v2881 = vadd.f32 %v2688, %v2880
        %v2882 = vpop.f32.mrb[0].mxu0
        %2883 = vmatprep.mubr.f32.mxu0 0.0
        %2884 = vmatmul.mubr.f32.gmra.mrb[0].mxu0 %v2768
        %v2885 = vpop.f32.mrb[0].mxu0
        %v2886 = vadd.f32 %v2693, %v2885
        %v2887 = vpop.f32.mrb[0].mxu0
        %2888 = vmatprep.mubr.f32.mxu0 0.0
        %2889 = vmatmul.mubr.f32.gmra.mrb[0].mxu0 %v2771
        %v2890 = vpop.f32.mrb[0].mxu0
        %v2891 = vadd.f32 %v2698, %v2890
        %v2892 = vpop.f32.mrb[0].mxu0
        %2893 = vmatprep.mubr.f32.mxu0 0.0
        %2894 = vmatmul.mubr.f32.gmra.mrb[0].mxu0 %v2774
        %v2895 = vpop.f32.mrb[0].mxu0
        %v2896 = vadd.f32 %v2703, %v2895
        %v2897 = vpop.f32.mrb[0].mxu0
        %2898 = vmatprep.mubr.f32.mxu0 0.0
        %2899 = vmatmul.mubr.f32.gmra.mrb[0].mxu0 %v2777
        %v2900 = vpop.f32.mrb[0].mxu0
        %v2901 = vadd.f32 %v2708, %v2900
        %v2902 = vpop.f32.mrb[0].mxu0
        %2903 = vmatprep.mubr.f32.mxu0 0.0
        %2904 = vmatmul.mubr.f32.gmra.mrb[0].mxu0 %v2780
        %v2905 = vpop.f32.mrb[0].mxu0
        %v2906 = vadd.f32 %v2713, %v2905
        %v2907 = vpop.f32.mrb[0].mxu0
        %2908 = vmatprep.mubr.f32.mxu0 0.0
        %2909 = vmatmul.mubr.f32.gmra.mrb[0].mxu0 %v2783
        %v2910 = vpop.f32.mrb[0].mxu0
        %v2911 = vadd.f32 %v2718, %v2910
        %v2912 = vpop.f32.mrb[0].mxu0
        %2913 = vmatprep.mubr.f32.mxu0 0.0
        %2914 = vmatmul.mubr.f32.gmra.mrb[0].mxu0 %v2786
        %v2915 = vpop.f32.mrb[0].mxu0
        %v2916 = vadd.f32 %v2723, %v2915
        %v2917 = vpop.f32.mrb[0].mxu0
        %2918 = vmatprep.mubr.f32.mxu0 0.0
        %2919 = vmatmul.mubr.f32.gmra.mrb[0].mxu0 %v2789
        %v2920 = vpop.f32.mrb[0].mxu0
        %v2921 = vadd.f32 %v2728, %v2920
        %v2922 = vpop.f32.mrb[0].mxu0
        %2923 = vmatprep.mubr.f32.mxu0 0.0
        %2924 = vmatmul.mubr.f32.gmra.mrb[0].mxu0 %v2792
        %v2925 = vpop.f32.mrb[0].mxu0
        %v2926 = vadd.f32 %v2733, %v2925
        %v2927 = vpop.f32.mrb[0].mxu0
        %2928 = vmatprep.mubr.f32.mxu0 0.0
        %2929 = vmatmul.mubr.f32.gmra.mrb[0].mxu0 %v2795
        %v2930 = vpop.f32.mrb[0].mxu0
        %v2931 = vadd.f32 %v2738, %v2930
        %v2932 = vpop.f32.mrb[0].mxu0
        %2933 = vmatprep.mubr.f32.mxu0 0.0
        %2934 = vmatmul.mubr.f32.gmra.mrb[0].mxu0 %v2798
        %v2935 = vpop.f32.mrb[0].mxu0
        %v2936 = vadd.f32 %v2743, %v2935
        %v2937 = vpop.f32.mrb[0].mxu0
        %2938 = vmatprep.mubr.f32.mxu0 0.0
        %2939 = vmatmul.mubr.f32.gmra.mrb[0].mxu0 %v2801
        %v2940 = vpop.f32.mrb[0].mxu0
        %v2941 = vadd.f32 %v2748, %v2940
        %v2942 = vpop.f32.mrb[0].mxu0
        %2943 = vmatprep.mubr.f32.mxu0 0.0
        %2944 = vmatmul.mubr.f32.gmra.mrb[0].mxu0 %v2804
        %v2945 = vpop.f32.mrb[0].mxu0
        %v2946 = vadd.f32 %v2753, %v2945
        %v2947 = vpop.f32.mrb[0].mxu0
        %2948 = vmatprep.mubr.f32.mxu0 0.0
        %2949 = vmatmul.mubr.f32.gmra.mrb[0].mxu0 %v2807
        %v2950 = vpop.f32.mrb[0].mxu0
        %v2951 = vadd.f32 %v2758, %v2950
        %v2952 = vpop.f32.mrb[0].mxu0
        %2953 = vdwg.mxu0
        %v2954 = vld [vmem:[%s6] sm:$0x1]
        %v2956 = vlaneseq
        %v2957 = vshrl.u32 %v2956, 7
        %v2958 = vsub.s32 0, %v2957
        %v2959 = vrot.slane %v2954, %v2958
        %v2961 = vadd.f32 %v2876, %v2959
        %v2962 = vadd.f32 %v2881, %v2959
        %v2963 = vadd.f32 %v2886, %v2959
        %v2964 = vadd.f32 %v2891, %v2959
        %v2965 = vadd.f32 %v2896, %v2959
        %v2966 = vadd.f32 %v2901, %v2959
        %v2967 = vadd.f32 %v2906, %v2959
        %v2968 = vadd.f32 %v2911, %v2959
        %v2969 = vadd.f32 %v2916, %v2959
        %v2970 = vadd.f32 %v2921, %v2959
        %v2971 = vadd.f32 %v2926, %v2959
        %v2972 = vadd.f32 %v2931, %v2959
        %v2973 = vadd.f32 %v2936, %v2959
        %v2974 = vadd.f32 %v2941, %v2959
        %v2975 = vadd.f32 %v2946, %v2959
        %v2976 = vadd.f32 %v2951, %v2959
        %2977 = vst.msk [vmem:[%s399] sm:$0xff] %vm421, %v2961
        %2978 = vst.msk [vmem:[%s399 + $0x8] sm:$0xff] %vm421, %v2962
        %2979 = vst.msk [vmem:[%s399 + $0x10] sm:$0xff] %vm421, %v2963
        %2980 = vst.msk [vmem:[%s399 + $0x18] sm:$0xff] %vm421, %v2964
        %2981 = vst.msk [vmem:[%s399 + $0x20] sm:$0xff] %vm421, %v2965
        %2982 = vst.msk [vmem:[%s399 + $0x28] sm:$0xff] %vm421, %v2966
        %2983 = vst.msk [vmem:[%s399 + $0x30] sm:$0xff] %vm421, %v2967
        %2984 = vst.msk [vmem:[%s399 + $0x38] sm:$0xff] %vm421, %v2968
        %2985 = vst.msk [vmem:[%s399 + $0x40] sm:$0xff] %vm421, %v2969
        %2986 = vst.msk [vmem:[%s399 + $0x48] sm:$0xff] %vm421, %v2970
        %2987 = vst.msk [vmem:[%s399 + $0x50] sm:$0xff] %vm421, %v2971
        %2988 = vst.msk [vmem:[%s399 + $0x58] sm:$0xff] %vm421, %v2972
        %2989 = vst.msk [vmem:[%s399 + $0x60] sm:$0xff] %vm421, %v2973
        %2990 = vst.msk [vmem:[%s399 + $0x68] sm:$0xff] %vm421, %v2974
        %2991 = vst.msk [vmem:[%s399 + $0x70] sm:$0xff] %vm421, %v2975
        %2992 = vst.msk [vmem:[%s399 + $0x78] sm:$0xff] %vm421, %v2976
        %s2993 = sand.u32 %s199, 1
        %s2994 = sand.u32 %s199, 1
        %s2995 = smul.addr %s2994, 128
        %s2996 = scalar_lea.vmem [#allocation3], %s2995
        // Predicated region
        $region87: #{swin_layer_forward.2} parent=81 // pred_check
          %p2997 = pneg %p209
        $region88: #{swin_layer_forward.2} parent=81 // pred_check_branch
          %2999 = sbr.rel (%p2997) target = $region90
        $region89: #{swin_layer_forward.2} parent=81 // pred_region
          %s3000 = smul.addr %s22, 32
          %s3001 = sadd.s32 %s23, %s3000
          %s3002 = smul.addr %s3001, 8
          %s3003 = scalar_lea.vmem %s7, %s3002
          // Predicated region
          $region91: #{swin_layer_forward.2} parent=89 // pred_check
            _
          $region92: #{swin_layer_forward.2} parent=89 // pred_check_branch
            %3005 = sbr.rel (0) target = $region94
          $region93: #{swin_layer_forward.2} parent=89 // pred_region
            // Predicated region
            $region95: #{swin_layer_forward.2} parent=93 // pred_check
              _
            $region96: #{swin_layer_forward.2} parent=93 // pred_check_branch
              %3007 = sbr.rel (0) target = $region98
            $region97: #{swin_layer_forward.2} parent=93 // pred_region
              // Predicated region
              $region110: #{swin_layer_forward.2} parent=97 // pred_check
                _
              $region111: #{swin_layer_forward.2} parent=97 // pred_check_branch
                %3052 = sbr.rel (0) target = $region113
              $region112: #{swin_layer_forward.2} parent=97 // pred_region
                loop: start=0, step=1, limit=1
                $region114: #{swin_layer_forward.2} parent=112 // loop_pre_header
                  _
                $region115: #{swin_layer_forward.2} parent=112 // loop_header
                  %s3054 = sphi 0, %s3058
                  %p3055 = scmp.ge.s32.totalorder %s3054, 1
                  %s3059 = sphi %s2996, %s2996
                  %s3060 = sphi %s3003, %s3003
                $region116: #{swin_layer_forward.2} parent=112 // loop_header_branch
                  %3057 = sbr.rel (%p3055) target = $region120
                $region117: #{swin_layer_forward.2} parent=112 // loop_body
                  %v3061 = vld [vmem:[%s3059] sm:$0xff]
                  %3062 = vst [vmem:[%s3060] sm:$0xff] %v3061
                  %v3063 = vld [vmem:[%s3059 + $0x8] sm:$0xff]
                  %3064 = vst [vmem:[%s3060 + $0x10] sm:$0xff] %v3063
                  %v3065 = vld [vmem:[%s3059 + $0x10] sm:$0xff]
                  %3066 = vst [vmem:[%s3060 + $0x20] sm:$0xff] %v3065
                  %v3067 = vld [vmem:[%s3059 + $0x18] sm:$0xff]
                  %3068 = vst [vmem:[%s3060 + $0x30] sm:$0xff] %v3067
                  %v3069 = vld [vmem:[%s3059 + $0x20] sm:$0xff]
                  %3070 = vst [vmem:[%s3060 + $0x40] sm:$0xff] %v3069
                  %v3071 = vld [vmem:[%s3059 + $0x28] sm:$0xff]
                  %3072 = vst [vmem:[%s3060 + $0x50] sm:$0xff] %v3071
                  %v3073 = vld [vmem:[%s3059 + $0x30] sm:$0xff]
                  %3074 = vst [vmem:[%s3060 + $0x60] sm:$0xff] %v3073
                  %v3075 = vld [vmem:[%s3059 + $0x38] sm:$0xff]
                  %3076 = vst [vmem:[%s3060 + $0x70] sm:$0xff] %v3075
                  %v3077 = vld [vmem:[%s3059 + $0x40] sm:$0xff]
                  %3078 = vst [vmem:[%s3060 + $0x80] sm:$0xff] %v3077
                  %v3079 = vld [vmem:[%s3059 + $0x48] sm:$0xff]
                  %3080 = vst [vmem:[%s3060 + $0x90] sm:$0xff] %v3079
                  %v3081 = vld [vmem:[%s3059 + $0x50] sm:$0xff]
                  %3082 = vst [vmem:[%s3060 + $0xa0] sm:$0xff] %v3081
                  %v3083 = vld [vmem:[%s3059 + $0x58] sm:$0xff]
                  %3084 = vst [vmem:[%s3060 + $0xb0] sm:$0xff] %v3083
                  %v3085 = vld [vmem:[%s3059 + $0x60] sm:$0xff]
                  %3086 = vst [vmem:[%s3060 + $0xc0] sm:$0xff] %v3085
                  %v3087 = vld [vmem:[%s3059 + $0x68] sm:$0xff]
                  %3088 = vst [vmem:[%s3060 + $0xd0] sm:$0xff] %v3087
                  %v3089 = vld [vmem:[%s3059 + $0x70] sm:$0xff]
                  %3090 = vst [vmem:[%s3060 + $0xe0] sm:$0xff] %v3089
                  %v3091 = vld [vmem:[%s3059 + $0x78] sm:$0xff]
                  %3092 = vst [vmem:[%s3060 + $0xf0] sm:$0xff] %v3091
                $region118: #{swin_layer_forward.2} parent=112 // loop_footer
                  %s3058 = sadd.s32 1, %s3054
                $region119: #{swin_layer_forward.2} parent=112 // loop_footer_branch
                  %3053 = sbr.rel target = $region115
                $region120: #{swin_layer_forward.2} parent=112 // loop_exit
                  _
              $region113: #{swin_layer_forward.2} parent=97 // pred_fallthru
                _
              // Predicated region
              $region121: #{swin_layer_forward.2} parent=97 // pred_check
                _
              $region122: #{swin_layer_forward.2} parent=97 // pred_check_branch
                %3094 = sbr.rel target = $region124
              $region123: #{swin_layer_forward.2} parent=97 // pred_region
                _
              $region124: #{swin_layer_forward.2} parent=97 // pred_fallthru
                _
            $region98: #{swin_layer_forward.2} parent=93 // pred_fallthru
              _
            // Predicated region
            $region99: #{swin_layer_forward.2} parent=93 // pred_check
              _
            $region100: #{swin_layer_forward.2} parent=93 // pred_check_branch
              %3009 = sbr.rel target = $region102
            $region101: #{swin_layer_forward.2} parent=93 // pred_region
              loop: start=0, step=1, limit=1
              $region103: #{swin_layer_forward.2} parent=101 // loop_pre_header
                _
              $region104: #{swin_layer_forward.2} parent=101 // loop_header
                %s3012 = sphi 0, %s3016
                %p3013 = scmp.ge.s32.totalorder %s3012, 1
                %s3017 = sphi %s2996, %s2996
                %s3018 = sphi %s3003, %s3003
              $region105: #{swin_layer_forward.2} parent=101 // loop_header_branch
                %3015 = sbr.rel (%p3013) target = $region109
              $region106: #{swin_layer_forward.2} parent=101 // loop_body
                %v3019 = vld [vmem:[%s3017] sm:$0xff]
                %3020 = vst [vmem:[%s3018] sm:$0xff] %v3019
                %v3021 = vld [vmem:[%s3017 + $0x8] sm:$0xff]
                %3022 = vst [vmem:[%s3018 + $0x10] sm:$0xff] %v3021
                %v3023 = vld [vmem:[%s3017 + $0x10] sm:$0xff]
                %3024 = vst [vmem:[%s3018 + $0x20] sm:$0xff] %v3023
                %v3025 = vld [vmem:[%s3017 + $0x18] sm:$0xff]
                %3026 = vst [vmem:[%s3018 + $0x30] sm:$0xff] %v3025
                %v3027 = vld [vmem:[%s3017 + $0x20] sm:$0xff]
                %3028 = vst [vmem:[%s3018 + $0x40] sm:$0xff] %v3027
                %v3029 = vld [vmem:[%s3017 + $0x28] sm:$0xff]
                %3030 = vst [vmem:[%s3018 + $0x50] sm:$0xff] %v3029
                %v3031 = vld [vmem:[%s3017 + $0x30] sm:$0xff]
                %3032 = vst [vmem:[%s3018 + $0x60] sm:$0xff] %v3031
                %v3033 = vld [vmem:[%s3017 + $0x38] sm:$0xff]
                %3034 = vst [vmem:[%s3018 + $0x70] sm:$0xff] %v3033
                %v3035 = vld [vmem:[%s3017 + $0x40] sm:$0xff]
                %3036 = vst [vmem:[%s3018 + $0x80] sm:$0xff] %v3035
                %v3037 = vld [vmem:[%s3017 + $0x48] sm:$0xff]
                %3038 = vst [vmem:[%s3018 + $0x90] sm:$0xff] %v3037
                %v3039 = vld [vmem:[%s3017 + $0x50] sm:$0xff]
                %3040 = vst [vmem:[%s3018 + $0xa0] sm:$0xff] %v3039
                %v3041 = vld [vmem:[%s3017 + $0x58] sm:$0xff]
                %3042 = vst [vmem:[%s3018 + $0xb0] sm:$0xff] %v3041
                %v3043 = vld [vmem:[%s3017 + $0x60] sm:$0xff]
                %3044 = vst [vmem:[%s3018 + $0xc0] sm:$0xff] %v3043
                %v3045 = vld [vmem:[%s3017 + $0x68] sm:$0xff]
                %3046 = vst [vmem:[%s3018 + $0xd0] sm:$0xff] %v3045
                %v3047 = vld [vmem:[%s3017 + $0x70] sm:$0xff]
                %3048 = vst [vmem:[%s3018 + $0xe0] sm:$0xff] %v3047
                %v3049 = vld [vmem:[%s3017 + $0x78] sm:$0xff]
                %3050 = vst [vmem:[%s3018 + $0xf0] sm:$0xff] %v3049
              $region107: #{swin_layer_forward.2} parent=101 // loop_footer
                %s3016 = sadd.s32 1, %s3012
              $region108: #{swin_layer_forward.2} parent=101 // loop_footer_branch
                %3011 = sbr.rel target = $region104
              $region109: #{swin_layer_forward.2} parent=101 // loop_exit
                _
            $region102: #{swin_layer_forward.2} parent=93 // pred_fallthru
              _
          $region94: #{swin_layer_forward.2} parent=89 // pred_fallthru
            _
          %3095 = vnop
        $region90: #{swin_layer_forward.2} parent=81 // pred_fallthru
          _
      $region82: #{swin_layer_forward.2} parent=5 // pred_fallthru
        _
      %p3096 = scmp.le.s32.totalorder 2, %s13
      // Predicated region
      $region125: #{swin_layer_forward.2} parent=5 // pred_check
        %p3097 = pneg %p3096
      $region126: #{swin_layer_forward.2} parent=5 // pred_check_branch
        %3099 = sbr.rel (%p3097) target = $region128
      $region127: #{swin_layer_forward.2} parent=5 // pred_region
        %s3100 = ssub.s32 %s13, 2
        // Predicated region
        $region129: #{swin_layer_forward.2} parent=127 // pred_check
          %p3101 = pneg %p215
        $region130: #{swin_layer_forward.2} parent=127 // pred_check_branch
          %3103 = sbr.rel (%p3101) target = $region132
        $region131: #{swin_layer_forward.2} parent=127 // pred_region
          %s3104 = sand.u32 %s200, 1
          %s3105 = sand.u32 %s200, 1
          %s3106 = smul.addr %s3105, 128
          %s3107 = scalar_lea.vmem [#allocation3], %s3106
        $region132: #{swin_layer_forward.2} parent=127 // pred_fallthru
          _
      $region128: #{swin_layer_forward.2} parent=5 // pred_fallthru
        _
    $region6: #{swin_layer_forward.2} parent=1 // loop_footer
      %s17 = sadd.s32 1, %s13
    $region7: #{swin_layer_forward.2} parent=1 // loop_footer_branch
      %12 = sbr.rel target = $region3
    $region8: #{swin_layer_forward.2} parent=1 // loop_exit
      _

// kernel: swin_layer_forward.3
$region0: #{swin_layer_forward.3}
  #allocation0 [shape = 'u32[]', space=smem, size = 0x4, offset = 0x4, fixed_abs, tag = 'smem constant byte address 0x4 - core index']
  #allocation1 [shape = 'u32[144,128]{1,0:T(1,128)}', space=vmem, size = 0x12000, scoped, tag = 'internal scratch']
  %s0 = inlined_call_operand.vmem [shape: f32[512,32], index: 0, kind: input, shape index: {}]
  %s1 = inlined_call_operand.vmem [shape: f32[512,32], index: 1, kind: input, shape index: {}]
  %s2 = inlined_call_operand.vmem [shape: f32[1,32], index: 2, kind: input, shape index: {}]
  %s3 = inlined_call_operand.vmem [shape: f32[1,32], index: 3, kind: input, shape index: {}]
  %s4 = inlined_call_operand.vmem [shape: f32[32,128], index: 4, kind: input, shape index: {}]
  %s5 = inlined_call_operand.vmem [shape: f32[1,128], index: 5, kind: input, shape index: {}]
  %s6 = inlined_call_operand.vmem [shape: f32[128,32], index: 6, kind: input, shape index: {}]
  %s7 = inlined_call_operand.vmem [shape: f32[1,32], index: 7, kind: input, shape index: {}]
  %s8 = inlined_call_operand.vmem [shape: f32[512,32], index: 8, kind: output, shape index: {}]
  %s9 = sld [smem:[#allocation0]]
  $region42: #{swin_layer_forward.3} parent=0
    _
  %s11 = ssub.s32 1, %s9
  %s12 = scalar_select 0, %s11, %s9
  // Predicated region
  $region2: #{swin_layer_forward.3} parent=0 // pred_check
    _
  $region3: #{swin_layer_forward.3} parent=0 // pred_check_branch
    %14 = sbr.rel (0) target = $region5
  $region4: #{swin_layer_forward.3} parent=0 // pred_region
    _
  $region5: #{swin_layer_forward.3} parent=0 // pred_fallthru
    _
  // Predicated region
  $region6: #{swin_layer_forward.3} parent=0 // pred_check
    _
  $region7: #{swin_layer_forward.3} parent=0 // pred_check_branch
    %16 = sbr.rel (0) target = $region9
  $region8: #{swin_layer_forward.3} parent=0 // pred_region
    _
  $region9: #{swin_layer_forward.3} parent=0 // pred_fallthru
    _
  // Predicated region
  $region10: #{swin_layer_forward.3} parent=0 // pred_check
    _
  $region11: #{swin_layer_forward.3} parent=0 // pred_check_branch
    %18 = sbr.rel (0) target = $region13
  $region12: #{swin_layer_forward.3} parent=0 // pred_region
    _
  $region13: #{swin_layer_forward.3} parent=0 // pred_fallthru
    _
  // Predicated region
  $region14: #{swin_layer_forward.3} parent=0 // pred_check
    _
  $region15: #{swin_layer_forward.3} parent=0 // pred_check_branch
    %20 = sbr.rel (0) target = $region17
  $region16: #{swin_layer_forward.3} parent=0 // pred_region
    _
  $region17: #{swin_layer_forward.3} parent=0 // pred_fallthru
    _
  // Predicated region
  $region18: #{swin_layer_forward.3} parent=0 // pred_check
    _
  $region19: #{swin_layer_forward.3} parent=0 // pred_check_branch
    %22 = sbr.rel (0) target = $region21
  $region20: #{swin_layer_forward.3} parent=0 // pred_region
    _
  $region21: #{swin_layer_forward.3} parent=0 // pred_fallthru
    _
  // Predicated region
  $region22: #{swin_layer_forward.3} parent=0 // pred_check
    _
  $region23: #{swin_layer_forward.3} parent=0 // pred_check_branch
    %24 = sbr.rel (0) target = $region25
  $region24: #{swin_layer_forward.3} parent=0 // pred_region
    _
  $region25: #{swin_layer_forward.3} parent=0 // pred_fallthru
    _
  // Predicated region
  $region26: #{swin_layer_forward.3} parent=0 // pred_check
    _
  $region27: #{swin_layer_forward.3} parent=0 // pred_check_branch
    %26 = sbr.rel (0) target = $region29
  $region28: #{swin_layer_forward.3} parent=0 // pred_region
    _
  $region29: #{swin_layer_forward.3} parent=0 // pred_fallthru
    _
  // Predicated region
  $region30: #{swin_layer_forward.3} parent=0 // pred_check
    _
  $region31: #{swin_layer_forward.3} parent=0 // pred_check_branch
    %28 = sbr.rel (0) target = $region33
  $region32: #{swin_layer_forward.3} parent=0 // pred_region
    _
  $region33: #{swin_layer_forward.3} parent=0 // pred_fallthru
    _
  %v29 = vld [vmem:[%s0] sm:$0xff]
  %v30 = vld [vmem:[%s0 + $0x8] sm:$0xff]
  %v31 = vld [vmem:[%s0 + $0x10] sm:$0xff]
  %v32 = vld [vmem:[%s0 + $0x18] sm:$0xff]
  %v33 = vld [vmem:[%s0 + $0x20] sm:$0xff]
  %v34 = vld [vmem:[%s0 + $0x28] sm:$0xff]
  %v35 = vld [vmem:[%s0 + $0x30] sm:$0xff]
  %v36 = vld [vmem:[%s0 + $0x38] sm:$0xff]
  %v37 = vld [vmem:[%s0 + $0x40] sm:$0xff]
  %v38 = vld [vmem:[%s0 + $0x48] sm:$0xff]
  %v39 = vld [vmem:[%s0 + $0x50] sm:$0xff]
  %v40 = vld [vmem:[%s0 + $0x58] sm:$0xff]
  %v41 = vld [vmem:[%s0 + $0x60] sm:$0xff]
  %v42 = vld [vmem:[%s0 + $0x68] sm:$0xff]
  %v43 = vld [vmem:[%s0 + $0x70] sm:$0xff]
  %v44 = vld [vmem:[%s0 + $0x78] sm:$0xff]
  %v45 = vld [vmem:[%s0 + $0x80] sm:$0xff]
  %v46 = vld [vmem:[%s0 + $0x88] sm:$0xff]
  %v47 = vld [vmem:[%s0 + $0x90] sm:$0xff]
  %v48 = vld [vmem:[%s0 + $0x98] sm:$0xff]
  %v49 = vld [vmem:[%s0 + $0xa0] sm:$0xff]
  %v50 = vld [vmem:[%s0 + $0xa8] sm:$0xff]
  %v51 = vld [vmem:[%s0 + $0xb0] sm:$0xff]
  %v52 = vld [vmem:[%s0 + $0xb8] sm:$0xff]
  %v53 = vld [vmem:[%s0 + $0xc0] sm:$0xff]
  %v54 = vld [vmem:[%s0 + $0xc8] sm:$0xff]
  %v55 = vld [vmem:[%s0 + $0xd0] sm:$0xff]
  %v56 = vld [vmem:[%s0 + $0xd8] sm:$0xff]
  %v57 = vld [vmem:[%s0 + $0xe0] sm:$0xff]
  %v58 = vld [vmem:[%s0 + $0xe8] sm:$0xff]
  %v59 = vld [vmem:[%s0 + $0xf0] sm:$0xff]
  %v60 = vld [vmem:[%s0 + $0xf8] sm:$0xff]
  %v61 = vld [vmem:[%s0 + $0x100] sm:$0xff]
  %v62 = vld [vmem:[%s0 + $0x108] sm:$0xff]
  %v63 = vld [vmem:[%s0 + $0x110] sm:$0xff]
  %v64 = vld [vmem:[%s0 + $0x118] sm:$0xff]
  %v65 = vld [vmem:[%s0 + $0x120] sm:$0xff]
  %v66 = vld [vmem:[%s0 + $0x128] sm:$0xff]
  %v67 = vld [vmem:[%s0 + $0x130] sm:$0xff]
  %v68 = vld [vmem:[%s0 + $0x138] sm:$0xff]
  %v69 = vld [vmem:[%s0 + $0x140] sm:$0xff]
  %v70 = vld [vmem:[%s0 + $0x148] sm:$0xff]
  %v71 = vld [vmem:[%s0 + $0x150] sm:$0xff]
  %v72 = vld [vmem:[%s0 + $0x158] sm:$0xff]
  %v73 = vld [vmem:[%s0 + $0x160] sm:$0xff]
  %v74 = vld [vmem:[%s0 + $0x168] sm:$0xff]
  %v75 = vld [vmem:[%s0 + $0x170] sm:$0xff]
  %v76 = vld [vmem:[%s0 + $0x178] sm:$0xff]
  %v77 = vld [vmem:[%s0 + $0x180] sm:$0xff]
  %v78 = vld [vmem:[%s0 + $0x188] sm:$0xff]
  %v79 = vld [vmem:[%s0 + $0x190] sm:$0xff]
  %v80 = vld [vmem:[%s0 + $0x198] sm:$0xff]
  %v81 = vld [vmem:[%s0 + $0x1a0] sm:$0xff]
  %v82 = vld [vmem:[%s0 + $0x1a8] sm:$0xff]
  %v83 = vld [vmem:[%s0 + $0x1b0] sm:$0xff]
  %v84 = vld [vmem:[%s0 + $0x1b8] sm:$0xff]
  %v85 = vld [vmem:[%s0 + $0x1c0] sm:$0xff]
  %v86 = vld [vmem:[%s0 + $0x1c8] sm:$0xff]
  %v87 = vld [vmem:[%s0 + $0x1d0] sm:$0xff]
  %v88 = vld [vmem:[%s0 + $0x1d8] sm:$0xff]
  %v89 = vld [vmem:[%s0 + $0x1e0] sm:$0xff]
  %v90 = vld [vmem:[%s0 + $0x1e8] sm:$0xff]
  %v91 = vld [vmem:[%s0 + $0x1f0] sm:$0xff]
  %v92 = vld [vmem:[%s0 + $0x1f8] sm:$0xff]
  %v93 = vld [vmem:[%s1] sm:$0xff]
  %v94 = vld [vmem:[%s1 + $0x8] sm:$0xff]
  %v95 = vld [vmem:[%s1 + $0x10] sm:$0xff]
  %v96 = vld [vmem:[%s1 + $0x18] sm:$0xff]
  %v97 = vld [vmem:[%s1 + $0x20] sm:$0xff]
  %v98 = vld [vmem:[%s1 + $0x28] sm:$0xff]
  %v99 = vld [vmem:[%s1 + $0x30] sm:$0xff]
  %v100 = vld [vmem:[%s1 + $0x38] sm:$0xff]
  %v101 = vld [vmem:[%s1 + $0x40] sm:$0xff]
  %v102 = vld [vmem:[%s1 + $0x48] sm:$0xff]
  %v103 = vld [vmem:[%s1 + $0x50] sm:$0xff]
  %v104 = vld [vmem:[%s1 + $0x58] sm:$0xff]
  %v105 = vld [vmem:[%s1 + $0x60] sm:$0xff]
  %v106 = vld [vmem:[%s1 + $0x68] sm:$0xff]
  %v107 = vld [vmem:[%s1 + $0x70] sm:$0xff]
  %v108 = vld [vmem:[%s1 + $0x78] sm:$0xff]
  %v109 = vld [vmem:[%s1 + $0x80] sm:$0xff]
  %v110 = vld [vmem:[%s1 + $0x88] sm:$0xff]
  %v111 = vld [vmem:[%s1 + $0x90] sm:$0xff]
  %v112 = vld [vmem:[%s1 + $0x98] sm:$0xff]
  %v113 = vld [vmem:[%s1 + $0xa0] sm:$0xff]
  %v114 = vld [vmem:[%s1 + $0xa8] sm:$0xff]
  %v115 = vld [vmem:[%s1 + $0xb0] sm:$0xff]
  %v116 = vld [vmem:[%s1 + $0xb8] sm:$0xff]
  %v117 = vld [vmem:[%s1 + $0xc0] sm:$0xff]
  %v118 = vld [vmem:[%s1 + $0xc8] sm:$0xff]
  %v119 = vld [vmem:[%s1 + $0xd0] sm:$0xff]
  %v120 = vld [vmem:[%s1 + $0xd8] sm:$0xff]
  %v121 = vld [vmem:[%s1 + $0xe0] sm:$0xff]
  %v122 = vld [vmem:[%s1 + $0xe8] sm:$0xff]
  %v123 = vld [vmem:[%s1 + $0xf0] sm:$0xff]
  %v124 = vld [vmem:[%s1 + $0xf8] sm:$0xff]
  %v125 = vld [vmem:[%s1 + $0x100] sm:$0xff]
  %v126 = vld [vmem:[%s1 + $0x108] sm:$0xff]
  %v127 = vld [vmem:[%s1 + $0x110] sm:$0xff]
  %v128 = vld [vmem:[%s1 + $0x118] sm:$0xff]
  %v129 = vld [vmem:[%s1 + $0x120] sm:$0xff]
  %v130 = vld [vmem:[%s1 + $0x128] sm:$0xff]
  %v131 = vld [vmem:[%s1 + $0x130] sm:$0xff]
  %v132 = vld [vmem:[%s1 + $0x138] sm:$0xff]
  %v133 = vld [vmem:[%s1 + $0x140] sm:$0xff]
  %v134 = vld [vmem:[%s1 + $0x148] sm:$0xff]
  %v135 = vld [vmem:[%s1 + $0x150] sm:$0xff]
  %v136 = vld [vmem:[%s1 + $0x158] sm:$0xff]
  %v137 = vld [vmem:[%s1 + $0x160] sm:$0xff]
  %v138 = vld [vmem:[%s1 + $0x168] sm:$0xff]
  %v139 = vld [vmem:[%s1 + $0x170] sm:$0xff]
  %v140 = vld [vmem:[%s1 + $0x178] sm:$0xff]
  %v141 = vld [vmem:[%s1 + $0x180] sm:$0xff]
  %v142 = vld [vmem:[%s1 + $0x188] sm:$0xff]
  %v143 = vld [vmem:[%s1 + $0x190] sm:$0xff]
  %v144 = vld [vmem:[%s1 + $0x198] sm:$0xff]
  %v145 = vld [vmem:[%s1 + $0x1a0] sm:$0xff]
  %v146 = vld [vmem:[%s1 + $0x1a8] sm:$0xff]
  %v147 = vld [vmem:[%s1 + $0x1b0] sm:$0xff]
  %v148 = vld [vmem:[%s1 + $0x1b8] sm:$0xff]
  %v149 = vld [vmem:[%s1 + $0x1c0] sm:$0xff]
  %v150 = vld [vmem:[%s1 + $0x1c8] sm:$0xff]
  %v151 = vld [vmem:[%s1 + $0x1d0] sm:$0xff]
  %v152 = vld [vmem:[%s1 + $0x1d8] sm:$0xff]
  %v153 = vld [vmem:[%s1 + $0x1e0] sm:$0xff]
  %v154 = vld [vmem:[%s1 + $0x1e8] sm:$0xff]
  %v155 = vld [vmem:[%s1 + $0x1f0] sm:$0xff]
  %v156 = vld [vmem:[%s1 + $0x1f8] sm:$0xff]
  %v157 = vadd.f32 %v29, %v93
  %v158 = vadd.f32 %v30, %v94
  %v159 = vadd.f32 %v31, %v95
  %v160 = vadd.f32 %v32, %v96
  %v161 = vadd.f32 %v33, %v97
  %v162 = vadd.f32 %v34, %v98
  %v163 = vadd.f32 %v35, %v99
  %v164 = vadd.f32 %v36, %v100
  %v165 = vadd.f32 %v37, %v101
  %v166 = vadd.f32 %v38, %v102
  %v167 = vadd.f32 %v39, %v103
  %v168 = vadd.f32 %v40, %v104
  %v169 = vadd.f32 %v41, %v105
  %v170 = vadd.f32 %v42, %v106
  %v171 = vadd.f32 %v43, %v107
  %v172 = vadd.f32 %v44, %v108
  %v173 = vadd.f32 %v45, %v109
  %v174 = vadd.f32 %v46, %v110
  %v175 = vadd.f32 %v47, %v111
  %v176 = vadd.f32 %v48, %v112
  %v177 = vadd.f32 %v49, %v113
  %v178 = vadd.f32 %v50, %v114
  %v179 = vadd.f32 %v51, %v115
  %v180 = vadd.f32 %v52, %v116
  %v181 = vadd.f32 %v53, %v117
  %v182 = vadd.f32 %v54, %v118
  %v183 = vadd.f32 %v55, %v119
  %v184 = vadd.f32 %v56, %v120
  %v185 = vadd.f32 %v57, %v121
  %v186 = vadd.f32 %v58, %v122
  %v187 = vadd.f32 %v59, %v123
  %v188 = vadd.f32 %v60, %v124
  %v189 = vadd.f32 %v61, %v125
  %v190 = vadd.f32 %v62, %v126
  %v191 = vadd.f32 %v63, %v127
  %v192 = vadd.f32 %v64, %v128
  %v193 = vadd.f32 %v65, %v129
  %v194 = vadd.f32 %v66, %v130
  %v195 = vadd.f32 %v67, %v131
  %v196 = vadd.f32 %v68, %v132
  %v197 = vadd.f32 %v69, %v133
  %v198 = vadd.f32 %v70, %v134
  %v199 = vadd.f32 %v71, %v135
  %v200 = vadd.f32 %v72, %v136
  %v201 = vadd.f32 %v73, %v137
  %v202 = vadd.f32 %v74, %v138
  %v203 = vadd.f32 %v75, %v139
  %v204 = vadd.f32 %v76, %v140
  %v205 = vadd.f32 %v77, %v141
  %v206 = vadd.f32 %v78, %v142
  %v207 = vadd.f32 %v79, %v143
  %v208 = vadd.f32 %v80, %v144
  %v209 = vadd.f32 %v81, %v145
  %v210 = vadd.f32 %v82, %v146
  %v211 = vadd.f32 %v83, %v147
  %v212 = vadd.f32 %v84, %v148
  %v213 = vadd.f32 %v85, %v149
  %v214 = vadd.f32 %v86, %v150
  %v215 = vadd.f32 %v87, %v151
  %v216 = vadd.f32 %v88, %v152
  %v217 = vadd.f32 %v89, %v153
  %v218 = vadd.f32 %v90, %v154
  %v219 = vadd.f32 %v91, %v155
  %v220 = vadd.f32 %v92, %v156
  %vm221 = vcmask 261120
  %v222 = vsel %vm221, %v157, 0.0
  %223 = vadd.xlane.f32.xlu0 %v222
  %v224 = vpop.xlane.xlu0 %223
  %v225 = vsel %vm221, %v158, 0.0
  %226 = vadd.xlane.f32.xlu0 %v225
  %v227 = vpop.xlane.xlu0 %226
  %v228 = vsel %vm221, %v159, 0.0
  %229 = vadd.xlane.f32.xlu0 %v228
  %v230 = vpop.xlane.xlu0 %229
  %v231 = vsel %vm221, %v160, 0.0
  %232 = vadd.xlane.f32.xlu0 %v231
  %v233 = vpop.xlane.xlu0 %232
  %v234 = vsel %vm221, %v161, 0.0
  %235 = vadd.xlane.f32.xlu0 %v234
  %v236 = vpop.xlane.xlu0 %235
  %v237 = vsel %vm221, %v162, 0.0
  %238 = vadd.xlane.f32.xlu0 %v237
  %v239 = vpop.xlane.xlu0 %238
  %v240 = vsel %vm221, %v163, 0.0
  %241 = vadd.xlane.f32.xlu0 %v240
  %v242 = vpop.xlane.xlu0 %241
  %v243 = vsel %vm221, %v164, 0.0
  %244 = vadd.xlane.f32.xlu0 %v243
  %v245 = vpop.xlane.xlu0 %244
  %v246 = vsel %vm221, %v165, 0.0
  %247 = vadd.xlane.f32.xlu0 %v246
  %v248 = vpop.xlane.xlu0 %247
  %v249 = vsel %vm221, %v166, 0.0
  %250 = vadd.xlane.f32.xlu0 %v249
  %v251 = vpop.xlane.xlu0 %250
  %v252 = vsel %vm221, %v167, 0.0
  %253 = vadd.xlane.f32.xlu0 %v252
  %v254 = vpop.xlane.xlu0 %253
  %v255 = vsel %vm221, %v168, 0.0
  %256 = vadd.xlane.f32.xlu0 %v255
  %v257 = vpop.xlane.xlu0 %256
  %v258 = vsel %vm221, %v169, 0.0
  %259 = vadd.xlane.f32.xlu0 %v258
  %v260 = vpop.xlane.xlu0 %259
  %v261 = vsel %vm221, %v170, 0.0
  %262 = vadd.xlane.f32.xlu0 %v261
  %v263 = vpop.xlane.xlu0 %262
  %v264 = vsel %vm221, %v171, 0.0
  %265 = vadd.xlane.f32.xlu0 %v264
  %v266 = vpop.xlane.xlu0 %265
  %v267 = vsel %vm221, %v172, 0.0
  %268 = vadd.xlane.f32.xlu0 %v267
  %v269 = vpop.xlane.xlu0 %268
  %v270 = vsel %vm221, %v173, 0.0
  %271 = vadd.xlane.f32.xlu0 %v270
  %v272 = vpop.xlane.xlu0 %271
  %v273 = vsel %vm221, %v174, 0.0
  %274 = vadd.xlane.f32.xlu0 %v273
  %v275 = vpop.xlane.xlu0 %274
  %v276 = vsel %vm221, %v175, 0.0
  %277 = vadd.xlane.f32.xlu0 %v276
  %v278 = vpop.xlane.xlu0 %277
  %v279 = vsel %vm221, %v176, 0.0
  %280 = vadd.xlane.f32.xlu0 %v279
  %v281 = vpop.xlane.xlu0 %280
  %v282 = vsel %vm221, %v177, 0.0
  %283 = vadd.xlane.f32.xlu0 %v282
  %v284 = vpop.xlane.xlu0 %283
  %v285 = vsel %vm221, %v178, 0.0
  %286 = vadd.xlane.f32.xlu0 %v285
  %v287 = vpop.xlane.xlu0 %286
  %v288 = vsel %vm221, %v179, 0.0
  %289 = vadd.xlane.f32.xlu0 %v288
  %v290 = vpop.xlane.xlu0 %289
  %v291 = vsel %vm221, %v180, 0.0
  %292 = vadd.xlane.f32.xlu0 %v291
  %v293 = vpop.xlane.xlu0 %292
  %v294 = vsel %vm221, %v181, 0.0
  %295 = vadd.xlane.f32.xlu0 %v294
  %v296 = vpop.xlane.xlu0 %295
  %v297 = vsel %vm221, %v182, 0.0
  %298 = vadd.xlane.f32.xlu0 %v297
  %v299 = vpop.xlane.xlu0 %298
  %v300 = vsel %vm221, %v183, 0.0
  %301 = vadd.xlane.f32.xlu0 %v300
  %v302 = vpop.xlane.xlu0 %301
  %v303 = vsel %vm221, %v184, 0.0
  %304 = vadd.xlane.f32.xlu0 %v303
  %v305 = vpop.xlane.xlu0 %304
  %v306 = vsel %vm221, %v185, 0.0
  %307 = vadd.xlane.f32.xlu0 %v306
  %v308 = vpop.xlane.xlu0 %307
  %v309 = vsel %vm221, %v186, 0.0
  %310 = vadd.xlane.f32.xlu0 %v309
  %v311 = vpop.xlane.xlu0 %310
  %v312 = vsel %vm221, %v187, 0.0
  %313 = vadd.xlane.f32.xlu0 %v312
  %v314 = vpop.xlane.xlu0 %313
  %v315 = vsel %vm221, %v188, 0.0
  %316 = vadd.xlane.f32.xlu0 %v315
  %v317 = vpop.xlane.xlu0 %316
  %v318 = vsel %vm221, %v189, 0.0
  %319 = vadd.xlane.f32.xlu0 %v318
  %v320 = vpop.xlane.xlu0 %319
  %v321 = vsel %vm221, %v190, 0.0
  %322 = vadd.xlane.f32.xlu0 %v321
  %v323 = vpop.xlane.xlu0 %322
  %v324 = vsel %vm221, %v191, 0.0
  %325 = vadd.xlane.f32.xlu0 %v324
  %v326 = vpop.xlane.xlu0 %325
  %v327 = vsel %vm221, %v192, 0.0
  %328 = vadd.xlane.f32.xlu0 %v327
  %v329 = vpop.xlane.xlu0 %328
  %v330 = vsel %vm221, %v193, 0.0
  %331 = vadd.xlane.f32.xlu0 %v330
  %v332 = vpop.xlane.xlu0 %331
  %v333 = vsel %vm221, %v194, 0.0
  %334 = vadd.xlane.f32.xlu0 %v333
  %v335 = vpop.xlane.xlu0 %334
  %v336 = vsel %vm221, %v195, 0.0
  %337 = vadd.xlane.f32.xlu0 %v336
  %v338 = vpop.xlane.xlu0 %337
  %v339 = vsel %vm221, %v196, 0.0
  %340 = vadd.xlane.f32.xlu0 %v339
  %v341 = vpop.xlane.xlu0 %340
  %v342 = vsel %vm221, %v197, 0.0
  %343 = vadd.xlane.f32.xlu0 %v342
  %v344 = vpop.xlane.xlu0 %343
  %v345 = vsel %vm221, %v198, 0.0
  %346 = vadd.xlane.f32.xlu0 %v345
  %v347 = vpop.xlane.xlu0 %346
  %v348 = vsel %vm221, %v199, 0.0
  %349 = vadd.xlane.f32.xlu0 %v348
  %v350 = vpop.xlane.xlu0 %349
  %v351 = vsel %vm221, %v200, 0.0
  %352 = vadd.xlane.f32.xlu0 %v351
  %v353 = vpop.xlane.xlu0 %352
  %v354 = vsel %vm221, %v201, 0.0
  %355 = vadd.xlane.f32.xlu0 %v354
  %v356 = vpop.xlane.xlu0 %355
  %v357 = vsel %vm221, %v202, 0.0
  %358 = vadd.xlane.f32.xlu0 %v357
  %v359 = vpop.xlane.xlu0 %358
  %v360 = vsel %vm221, %v203, 0.0
  %361 = vadd.xlane.f32.xlu0 %v360
  %v362 = vpop.xlane.xlu0 %361
  %v363 = vsel %vm221, %v204, 0.0
  %364 = vadd.xlane.f32.xlu0 %v363
  %v365 = vpop.xlane.xlu0 %364
  %v366 = vsel %vm221, %v205, 0.0
  %367 = vadd.xlane.f32.xlu0 %v366
  %v368 = vpop.xlane.xlu0 %367
  %v369 = vsel %vm221, %v206, 0.0
  %370 = vadd.xlane.f32.xlu0 %v369
  %v371 = vpop.xlane.xlu0 %370
  %v372 = vsel %vm221, %v207, 0.0
  %373 = vadd.xlane.f32.xlu0 %v372
  %v374 = vpop.xlane.xlu0 %373
  %v375 = vsel %vm221, %v208, 0.0
  %376 = vadd.xlane.f32.xlu0 %v375
  %v377 = vpop.xlane.xlu0 %376
  %v378 = vsel %vm221, %v209, 0.0
  %379 = vadd.xlane.f32.xlu0 %v378
  %v380 = vpop.xlane.xlu0 %379
  %v381 = vsel %vm221, %v210, 0.0
  %382 = vadd.xlane.f32.xlu0 %v381
  %v383 = vpop.xlane.xlu0 %382
  %v384 = vsel %vm221, %v211, 0.0
  %385 = vadd.xlane.f32.xlu0 %v384
  %v386 = vpop.xlane.xlu0 %385
  %v387 = vsel %vm221, %v212, 0.0
  %388 = vadd.xlane.f32.xlu0 %v387
  %v389 = vpop.xlane.xlu0 %388
  %v390 = vsel %vm221, %v213, 0.0
  %391 = vadd.xlane.f32.xlu0 %v390
  %v392 = vpop.xlane.xlu0 %391
  %v393 = vsel %vm221, %v214, 0.0
  %394 = vadd.xlane.f32.xlu0 %v393
  %v395 = vpop.xlane.xlu0 %394
  %v396 = vsel %vm221, %v215, 0.0
  %397 = vadd.xlane.f32.xlu0 %v396
  %v398 = vpop.xlane.xlu0 %397
  %v399 = vsel %vm221, %v216, 0.0
  %400 = vadd.xlane.f32.xlu0 %v399
  %v401 = vpop.xlane.xlu0 %400
  %v402 = vsel %vm221, %v217, 0.0
  %403 = vadd.xlane.f32.xlu0 %v402
  %v404 = vpop.xlane.xlu0 %403
  %v405 = vsel %vm221, %v218, 0.0
  %406 = vadd.xlane.f32.xlu0 %v405
  %v407 = vpop.xlane.xlu0 %406
  %v408 = vsel %vm221, %v219, 0.0
  %409 = vadd.xlane.f32.xlu0 %v408
  %v410 = vpop.xlane.xlu0 %409
  %v411 = vsel %vm221, %v220, 0.0
  %412 = vadd.xlane.f32.xlu0 %v411
  %v413 = vpop.xlane.xlu0 %412
  %v414 = vrcp.pop 32.0
  %v415 = vmul.f32 %v224, %v414
  %v416 = vmul.f32 %v227, %v414
  %v417 = vmul.f32 %v230, %v414
  %v418 = vmul.f32 %v233, %v414
  %v419 = vmul.f32 %v236, %v414
  %v420 = vmul.f32 %v239, %v414
  %v421 = vmul.f32 %v242, %v414
  %v422 = vmul.f32 %v245, %v414
  %v423 = vmul.f32 %v248, %v414
  %v424 = vmul.f32 %v251, %v414
  %v425 = vmul.f32 %v254, %v414
  %v426 = vmul.f32 %v257, %v414
  %v427 = vmul.f32 %v260, %v414
  %v428 = vmul.f32 %v263, %v414
  %v429 = vmul.f32 %v266, %v414
  %v430 = vmul.f32 %v269, %v414
  %v431 = vmul.f32 %v272, %v414
  %v432 = vmul.f32 %v275, %v414
  %v433 = vmul.f32 %v278, %v414
  %v434 = vmul.f32 %v281, %v414
  %v435 = vmul.f32 %v284, %v414
  %v436 = vmul.f32 %v287, %v414
  %v437 = vmul.f32 %v290, %v414
  %v438 = vmul.f32 %v293, %v414
  %v439 = vmul.f32 %v296, %v414
  %v440 = vmul.f32 %v299, %v414
  %v441 = vmul.f32 %v302, %v414
  %v442 = vmul.f32 %v305, %v414
  %v443 = vmul.f32 %v308, %v414
  %v444 = vmul.f32 %v311, %v414
  %v445 = vmul.f32 %v314, %v414
  %v446 = vmul.f32 %v317, %v414
  %v447 = vmul.f32 %v320, %v414
  %v448 = vmul.f32 %v323, %v414
  %v449 = vmul.f32 %v326, %v414
  %v450 = vmul.f32 %v329, %v414
  %v451 = vmul.f32 %v332, %v414
  %v452 = vmul.f32 %v335, %v414
  %v453 = vmul.f32 %v338, %v414
  %v454 = vmul.f32 %v341, %v414
  %v455 = vmul.f32 %v344, %v414
  %v456 = vmul.f32 %v347, %v414
  %v457 = vmul.f32 %v350, %v414
  %v458 = vmul.f32 %v353, %v414
  %v459 = vmul.f32 %v356, %v414
  %v460 = vmul.f32 %v359, %v414
  %v461 = vmul.f32 %v362, %v414
  %v462 = vmul.f32 %v365, %v414
  %v463 = vmul.f32 %v368, %v414
  %v464 = vmul.f32 %v371, %v414
  %v465 = vmul.f32 %v374, %v414
  %v466 = vmul.f32 %v377, %v414
  %v467 = vmul.f32 %v380, %v414
  %v468 = vmul.f32 %v383, %v414
  %v469 = vmul.f32 %v386, %v414
  %v470 = vmul.f32 %v389, %v414
  %v471 = vmul.f32 %v392, %v414
  %v472 = vmul.f32 %v395, %v414
  %v473 = vmul.f32 %v398, %v414
  %v474 = vmul.f32 %v401, %v414
  %v475 = vmul.f32 %v404, %v414
  %v476 = vmul.f32 %v407, %v414
  %v477 = vmul.f32 %v410, %v414
  %v478 = vmul.f32 %v413, %v414
  %v479 = vsub.f32 %v157, %v415
  %v480 = vsub.f32 %v158, %v416
  %v481 = vsub.f32 %v159, %v417
  %v482 = vsub.f32 %v160, %v418
  %v483 = vsub.f32 %v161, %v419
  %v484 = vsub.f32 %v162, %v420
  %v485 = vsub.f32 %v163, %v421
  %v486 = vsub.f32 %v164, %v422
  %v487 = vsub.f32 %v165, %v423
  %v488 = vsub.f32 %v166, %v424
  %v489 = vsub.f32 %v167, %v425
  %v490 = vsub.f32 %v168, %v426
  %v491 = vsub.f32 %v169, %v427
  %v492 = vsub.f32 %v170, %v428
  %v493 = vsub.f32 %v171, %v429
  %v494 = vsub.f32 %v172, %v430
  %v495 = vsub.f32 %v173, %v431
  %v496 = vsub.f32 %v174, %v432
  %v497 = vsub.f32 %v175, %v433
  %v498 = vsub.f32 %v176, %v434
  %v499 = vsub.f32 %v177, %v435
  %v500 = vsub.f32 %v178, %v436
  %v501 = vsub.f32 %v179, %v437
  %v502 = vsub.f32 %v180, %v438
  %v503 = vsub.f32 %v181, %v439
  %v504 = vsub.f32 %v182, %v440
  %v505 = vsub.f32 %v183, %v441
  %v506 = vsub.f32 %v184, %v442
  %v507 = vsub.f32 %v185, %v443
  %v508 = vsub.f32 %v186, %v444
  %v509 = vsub.f32 %v187, %v445
  %v510 = vsub.f32 %v188, %v446
  %v511 = vsub.f32 %v189, %v447
  %v512 = vsub.f32 %v190, %v448
  %v513 = vsub.f32 %v191, %v449
  %v514 = vsub.f32 %v192, %v450
  %v515 = vsub.f32 %v193, %v451
  %v516 = vsub.f32 %v194, %v452
  %v517 = vsub.f32 %v195, %v453
  %v518 = vsub.f32 %v196, %v454
  %v519 = vsub.f32 %v197, %v455
  %v520 = vsub.f32 %v198, %v456
  %v521 = vsub.f32 %v199, %v457
  %v522 = vsub.f32 %v200, %v458
  %v523 = vsub.f32 %v201, %v459
  %v524 = vsub.f32 %v202, %v460
  %v525 = vsub.f32 %v203, %v461
  %v526 = vsub.f32 %v204, %v462
  %v527 = vsub.f32 %v205, %v463
  %v528 = vsub.f32 %v206, %v464
  %v529 = vsub.f32 %v207, %v465
  %v530 = vsub.f32 %v208, %v466
  %v531 = vsub.f32 %v209, %v467
  %v532 = vsub.f32 %v210, %v468
  %v533 = vsub.f32 %v211, %v469
  %v534 = vsub.f32 %v212, %v470
  %v535 = vsub.f32 %v213, %v471
  %v536 = vsub.f32 %v214, %v472
  %v537 = vsub.f32 %v215, %v473
  %v538 = vsub.f32 %v216, %v474
  %v539 = vsub.f32 %v217, %v475
  %v540 = vsub.f32 %v218, %v476
  %v541 = vsub.f32 %v219, %v477
  %v542 = vsub.f32 %v220, %v478
  %v543 = vmul.f32 %v479, %v479
  %v544 = vmul.f32 %v480, %v480
  %v545 = vmul.f32 %v481, %v481
  %v546 = vmul.f32 %v482, %v482
  %v547 = vmul.f32 %v483, %v483
  %v548 = vmul.f32 %v484, %v484
  %v549 = vmul.f32 %v485, %v485
  %v550 = vmul.f32 %v486, %v486
  %v551 = vmul.f32 %v487, %v487
  %v552 = vmul.f32 %v488, %v488
  %v553 = vmul.f32 %v489, %v489
  %v554 = vmul.f32 %v490, %v490
  %v555 = vmul.f32 %v491, %v491
  %v556 = vmul.f32 %v492, %v492
  %v557 = vmul.f32 %v493, %v493
  %v558 = vmul.f32 %v494, %v494
  %v559 = vmul.f32 %v495, %v495
  %v560 = vmul.f32 %v496, %v496
  %v561 = vmul.f32 %v497, %v497
  %v562 = vmul.f32 %v498, %v498
  %v563 = vmul.f32 %v499, %v499
  %v564 = vmul.f32 %v500, %v500
  %v565 = vmul.f32 %v501, %v501
  %v566 = vmul.f32 %v502, %v502
  %v567 = vmul.f32 %v503, %v503
  %v568 = vmul.f32 %v504, %v504
  %v569 = vmul.f32 %v505, %v505
  %v570 = vmul.f32 %v506, %v506
  %v571 = vmul.f32 %v507, %v507
  %v572 = vmul.f32 %v508, %v508
  %v573 = vmul.f32 %v509, %v509
  %v574 = vmul.f32 %v510, %v510
  %v575 = vmul.f32 %v511, %v511
  %v576 = vmul.f32 %v512, %v512
  %v577 = vmul.f32 %v513, %v513
  %v578 = vmul.f32 %v514, %v514
  %v579 = vmul.f32 %v515, %v515
  %v580 = vmul.f32 %v516, %v516
  %v581 = vmul.f32 %v517, %v517
  %v582 = vmul.f32 %v518, %v518
  %v583 = vmul.f32 %v519, %v519
  %v584 = vmul.f32 %v520, %v520
  %v585 = vmul.f32 %v521, %v521
  %v586 = vmul.f32 %v522, %v522
  %v587 = vmul.f32 %v523, %v523
  %v588 = vmul.f32 %v524, %v524
  %v589 = vmul.f32 %v525, %v525
  %v590 = vmul.f32 %v526, %v526
  %v591 = vmul.f32 %v527, %v527
  %v592 = vmul.f32 %v528, %v528
  %v593 = vmul.f32 %v529, %v529
  %v594 = vmul.f32 %v530, %v530
  %v595 = vmul.f32 %v531, %v531
  %v596 = vmul.f32 %v532, %v532
  %v597 = vmul.f32 %v533, %v533
  %v598 = vmul.f32 %v534, %v534
  %v599 = vmul.f32 %v535, %v535
  %v600 = vmul.f32 %v536, %v536
  %v601 = vmul.f32 %v537, %v537
  %v602 = vmul.f32 %v538, %v538
  %v603 = vmul.f32 %v539, %v539
  %v604 = vmul.f32 %v540, %v540
  %v605 = vmul.f32 %v541, %v541
  %v606 = vmul.f32 %v542, %v542
  %v607 = vsel %vm221, %v543, 0.0
  %608 = vadd.xlane.f32.xlu0 %v607
  %v609 = vpop.xlane.xlu0 %608
  %v610 = vsel %vm221, %v544, 0.0
  %611 = vadd.xlane.f32.xlu0 %v610
  %v612 = vpop.xlane.xlu0 %611
  %v613 = vsel %vm221, %v545, 0.0
  %614 = vadd.xlane.f32.xlu0 %v613
  %v615 = vpop.xlane.xlu0 %614
  %v616 = vsel %vm221, %v546, 0.0
  %617 = vadd.xlane.f32.xlu0 %v616
  %v618 = vpop.xlane.xlu0 %617
  %v619 = vsel %vm221, %v547, 0.0
  %620 = vadd.xlane.f32.xlu0 %v619
  %v621 = vpop.xlane.xlu0 %620
  %v622 = vsel %vm221, %v548, 0.0
  %623 = vadd.xlane.f32.xlu0 %v622
  %v624 = vpop.xlane.xlu0 %623
  %v625 = vsel %vm221, %v549, 0.0
  %626 = vadd.xlane.f32.xlu0 %v625
  %v627 = vpop.xlane.xlu0 %626
  %v628 = vsel %vm221, %v550, 0.0
  %629 = vadd.xlane.f32.xlu0 %v628
  %v630 = vpop.xlane.xlu0 %629
  %v631 = vsel %vm221, %v551, 0.0
  %632 = vadd.xlane.f32.xlu0 %v631
  %v633 = vpop.xlane.xlu0 %632
  %v634 = vsel %vm221, %v552, 0.0
  %635 = vadd.xlane.f32.xlu0 %v634
  %v636 = vpop.xlane.xlu0 %635
  %v637 = vsel %vm221, %v553, 0.0
  %638 = vadd.xlane.f32.xlu0 %v637
  %v639 = vpop.xlane.xlu0 %638
  %v640 = vsel %vm221, %v554, 0.0
  %641 = vadd.xlane.f32.xlu0 %v640
  %v642 = vpop.xlane.xlu0 %641
  %v643 = vsel %vm221, %v555, 0.0
  %644 = vadd.xlane.f32.xlu0 %v643
  %v645 = vpop.xlane.xlu0 %644
  %v646 = vsel %vm221, %v556, 0.0
  %647 = vadd.xlane.f32.xlu0 %v646
  %v648 = vpop.xlane.xlu0 %647
  %v649 = vsel %vm221, %v557, 0.0
  %650 = vadd.xlane.f32.xlu0 %v649
  %v651 = vpop.xlane.xlu0 %650
  %v652 = vsel %vm221, %v558, 0.0
  %653 = vadd.xlane.f32.xlu0 %v652
  %v654 = vpop.xlane.xlu0 %653
  %v655 = vsel %vm221, %v559, 0.0
  %656 = vadd.xlane.f32.xlu0 %v655
  %v657 = vpop.xlane.xlu0 %656
  %v658 = vsel %vm221, %v560, 0.0
  %659 = vadd.xlane.f32.xlu0 %v658
  %v660 = vpop.xlane.xlu0 %659
  %v661 = vsel %vm221, %v561, 0.0
  %662 = vadd.xlane.f32.xlu0 %v661
  %v663 = vpop.xlane.xlu0 %662
  %v664 = vsel %vm221, %v562, 0.0
  %665 = vadd.xlane.f32.xlu0 %v664
  %v666 = vpop.xlane.xlu0 %665
  %v667 = vsel %vm221, %v563, 0.0
  %668 = vadd.xlane.f32.xlu0 %v667
  %v669 = vpop.xlane.xlu0 %668
  %v670 = vsel %vm221, %v564, 0.0
  %671 = vadd.xlane.f32.xlu0 %v670
  %v672 = vpop.xlane.xlu0 %671
  %v673 = vsel %vm221, %v565, 0.0
  %674 = vadd.xlane.f32.xlu0 %v673
  %v675 = vpop.xlane.xlu0 %674
  %v676 = vsel %vm221, %v566, 0.0
  %677 = vadd.xlane.f32.xlu0 %v676
  %v678 = vpop.xlane.xlu0 %677
  %v679 = vsel %vm221, %v567, 0.0
  %680 = vadd.xlane.f32.xlu0 %v679
  %v681 = vpop.xlane.xlu0 %680
  %v682 = vsel %vm221, %v568, 0.0
  %683 = vadd.xlane.f32.xlu0 %v682
  %v684 = vpop.xlane.xlu0 %683
  %v685 = vsel %vm221, %v569, 0.0
  %686 = vadd.xlane.f32.xlu0 %v685
  %v687 = vpop.xlane.xlu0 %686
  %v688 = vsel %vm221, %v570, 0.0
  %689 = vadd.xlane.f32.xlu0 %v688
  %v690 = vpop.xlane.xlu0 %689
  %v691 = vsel %vm221, %v571, 0.0
  %692 = vadd.xlane.f32.xlu0 %v691
  %v693 = vpop.xlane.xlu0 %692
  %v694 = vsel %vm221, %v572, 0.0
  %695 = vadd.xlane.f32.xlu0 %v694
  %v696 = vpop.xlane.xlu0 %695
  %v697 = vsel %vm221, %v573, 0.0
  %698 = vadd.xlane.f32.xlu0 %v697
  %v699 = vpop.xlane.xlu0 %698
  %v700 = vsel %vm221, %v574, 0.0
  %701 = vadd.xlane.f32.xlu0 %v700
  %v702 = vpop.xlane.xlu0 %701
  %v703 = vsel %vm221, %v575, 0.0
  %704 = vadd.xlane.f32.xlu0 %v703
  %v705 = vpop.xlane.xlu0 %704
  %v706 = vsel %vm221, %v576, 0.0
  %707 = vadd.xlane.f32.xlu0 %v706
  %v708 = vpop.xlane.xlu0 %707
  %v709 = vsel %vm221, %v577, 0.0
  %710 = vadd.xlane.f32.xlu0 %v709
  %v711 = vpop.xlane.xlu0 %710
  %v712 = vsel %vm221, %v578, 0.0
  %713 = vadd.xlane.f32.xlu0 %v712
  %v714 = vpop.xlane.xlu0 %713
  %v715 = vsel %vm221, %v579, 0.0
  %716 = vadd.xlane.f32.xlu0 %v715
  %v717 = vpop.xlane.xlu0 %716
  %v718 = vsel %vm221, %v580, 0.0
  %719 = vadd.xlane.f32.xlu0 %v718
  %v720 = vpop.xlane.xlu0 %719
  %v721 = vsel %vm221, %v581, 0.0
  %722 = vadd.xlane.f32.xlu0 %v721
  %v723 = vpop.xlane.xlu0 %722
  %v724 = vsel %vm221, %v582, 0.0
  %725 = vadd.xlane.f32.xlu0 %v724
  %v726 = vpop.xlane.xlu0 %725
  %v727 = vsel %vm221, %v583, 0.0
  %728 = vadd.xlane.f32.xlu0 %v727
  %v729 = vpop.xlane.xlu0 %728
  %v730 = vsel %vm221, %v584, 0.0
  %731 = vadd.xlane.f32.xlu0 %v730
  %v732 = vpop.xlane.xlu0 %731
  %v733 = vsel %vm221, %v585, 0.0
  %734 = vadd.xlane.f32.xlu0 %v733
  %v735 = vpop.xlane.xlu0 %734
  %v736 = vsel %vm221, %v586, 0.0
  %737 = vadd.xlane.f32.xlu0 %v736
  %v738 = vpop.xlane.xlu0 %737
  %v739 = vsel %vm221, %v587, 0.0
  %740 = vadd.xlane.f32.xlu0 %v739
  %v741 = vpop.xlane.xlu0 %740
  %v742 = vsel %vm221, %v588, 0.0
  %743 = vadd.xlane.f32.xlu0 %v742
  %v744 = vpop.xlane.xlu0 %743
  %v745 = vsel %vm221, %v589, 0.0
  %746 = vadd.xlane.f32.xlu0 %v745
  %v747 = vpop.xlane.xlu0 %746
  %v748 = vsel %vm221, %v590, 0.0
  %749 = vadd.xlane.f32.xlu0 %v748
  %v750 = vpop.xlane.xlu0 %749
  %v751 = vsel %vm221, %v591, 0.0
  %752 = vadd.xlane.f32.xlu0 %v751
  %v753 = vpop.xlane.xlu0 %752
  %v754 = vsel %vm221, %v592, 0.0
  %755 = vadd.xlane.f32.xlu0 %v754
  %v756 = vpop.xlane.xlu0 %755
  %v757 = vsel %vm221, %v593, 0.0
  %758 = vadd.xlane.f32.xlu0 %v757
  %v759 = vpop.xlane.xlu0 %758
  %v760 = vsel %vm221, %v594, 0.0
  %761 = vadd.xlane.f32.xlu0 %v760
  %v762 = vpop.xlane.xlu0 %761
  %v763 = vsel %vm221, %v595, 0.0
  %764 = vadd.xlane.f32.xlu0 %v763
  %v765 = vpop.xlane.xlu0 %764
  %v766 = vsel %vm221, %v596, 0.0
  %767 = vadd.xlane.f32.xlu0 %v766
  %v768 = vpop.xlane.xlu0 %767
  %v769 = vsel %vm221, %v597, 0.0
  %770 = vadd.xlane.f32.xlu0 %v769
  %v771 = vpop.xlane.xlu0 %770
  %v772 = vsel %vm221, %v598, 0.0
  %773 = vadd.xlane.f32.xlu0 %v772
  %v774 = vpop.xlane.xlu0 %773
  %v775 = vsel %vm221, %v599, 0.0
  %776 = vadd.xlane.f32.xlu0 %v775
  %v777 = vpop.xlane.xlu0 %776
  %v778 = vsel %vm221, %v600, 0.0
  %779 = vadd.xlane.f32.xlu0 %v778
  %v780 = vpop.xlane.xlu0 %779
  %v781 = vsel %vm221, %v601, 0.0
  %782 = vadd.xlane.f32.xlu0 %v781
  %v783 = vpop.xlane.xlu0 %782
  %v784 = vsel %vm221, %v602, 0.0
  %785 = vadd.xlane.f32.xlu0 %v784
  %v786 = vpop.xlane.xlu0 %785
  %v787 = vsel %vm221, %v603, 0.0
  %788 = vadd.xlane.f32.xlu0 %v787
  %v789 = vpop.xlane.xlu0 %788
  %v790 = vsel %vm221, %v604, 0.0
  %791 = vadd.xlane.f32.xlu0 %v790
  %v792 = vpop.xlane.xlu0 %791
  %v793 = vsel %vm221, %v605, 0.0
  %794 = vadd.xlane.f32.xlu0 %v793
  %v795 = vpop.xlane.xlu0 %794
  %v796 = vsel %vm221, %v606, 0.0
  %797 = vadd.xlane.f32.xlu0 %v796
  %v798 = vpop.xlane.xlu0 %797
  %v799 = vmul.f32 %v609, %v414
  %v800 = vmul.f32 %v612, %v414
  %v801 = vmul.f32 %v615, %v414
  %v802 = vmul.f32 %v618, %v414
  %v803 = vmul.f32 %v621, %v414
  %v804 = vmul.f32 %v624, %v414
  %v805 = vmul.f32 %v627, %v414
  %v806 = vmul.f32 %v630, %v414
  %v807 = vmul.f32 %v633, %v414
  %v808 = vmul.f32 %v636, %v414
  %v809 = vmul.f32 %v639, %v414
  %v810 = vmul.f32 %v642, %v414
  %v811 = vmul.f32 %v645, %v414
  %v812 = vmul.f32 %v648, %v414
  %v813 = vmul.f32 %v651, %v414
  %v814 = vmul.f32 %v654, %v414
  %v815 = vmul.f32 %v657, %v414
  %v816 = vmul.f32 %v660, %v414
  %v817 = vmul.f32 %v663, %v414
  %v818 = vmul.f32 %v666, %v414
  %v819 = vmul.f32 %v669, %v414
  %v820 = vmul.f32 %v672, %v414
  %v821 = vmul.f32 %v675, %v414
  %v822 = vmul.f32 %v678, %v414
  %v823 = vmul.f32 %v681, %v414
  %v824 = vmul.f32 %v684, %v414
  %v825 = vmul.f32 %v687, %v414
  %v826 = vmul.f32 %v690, %v414
  %v827 = vmul.f32 %v693, %v414
  %v828 = vmul.f32 %v696, %v414
  %v829 = vmul.f32 %v699, %v414
  %v830 = vmul.f32 %v702, %v414
  %v831 = vmul.f32 %v705, %v414
  %v832 = vmul.f32 %v708, %v414
  %v833 = vmul.f32 %v711, %v414
  %v834 = vmul.f32 %v714, %v414
  %v835 = vmul.f32 %v717, %v414
  %v836 = vmul.f32 %v720, %v414
  %v837 = vmul.f32 %v723, %v414
  %v838 = vmul.f32 %v726, %v414
  %v839 = vmul.f32 %v729, %v414
  %v840 = vmul.f32 %v732, %v414
  %v841 = vmul.f32 %v735, %v414
  %v842 = vmul.f32 %v738, %v414
  %v843 = vmul.f32 %v741, %v414
  %v844 = vmul.f32 %v744, %v414
  %v845 = vmul.f32 %v747, %v414
  %v846 = vmul.f32 %v750, %v414
  %v847 = vmul.f32 %v753, %v414
  %v848 = vmul.f32 %v756, %v414
  %v849 = vmul.f32 %v759, %v414
  %v850 = vmul.f32 %v762, %v414
  %v851 = vmul.f32 %v765, %v414
  %v852 = vmul.f32 %v768, %v414
  %v853 = vmul.f32 %v771, %v414
  %v854 = vmul.f32 %v774, %v414
  %v855 = vmul.f32 %v777, %v414
  %v856 = vmul.f32 %v780, %v414
  %v857 = vmul.f32 %v783, %v414
  %v858 = vmul.f32 %v786, %v414
  %v859 = vmul.f32 %v789, %v414
  %v860 = vmul.f32 %v792, %v414
  %v861 = vmul.f32 %v795, %v414
  %v862 = vmul.f32 %v798, %v414
  %v863 = vadd.f32 %v799, 1e-05
  %v864 = vadd.f32 %v800, 1e-05
  %v865 = vadd.f32 %v801, 1e-05
  %v866 = vadd.f32 %v802, 1e-05
  %v867 = vadd.f32 %v803, 1e-05
  %v868 = vadd.f32 %v804, 1e-05
  %v869 = vadd.f32 %v805, 1e-05
  %v870 = vadd.f32 %v806, 1e-05
  %v871 = vadd.f32 %v807, 1e-05
  %v872 = vadd.f32 %v808, 1e-05
  %v873 = vadd.f32 %v809, 1e-05
  %v874 = vadd.f32 %v810, 1e-05
  %v875 = vadd.f32 %v811, 1e-05
  %v876 = vadd.f32 %v812, 1e-05
  %v877 = vadd.f32 %v813, 1e-05
  %v878 = vadd.f32 %v814, 1e-05
  %v879 = vadd.f32 %v815, 1e-05
  %v880 = vadd.f32 %v816, 1e-05
  %v881 = vadd.f32 %v817, 1e-05
  %v882 = vadd.f32 %v818, 1e-05
  %v883 = vadd.f32 %v819, 1e-05
  %v884 = vadd.f32 %v820, 1e-05
  %v885 = vadd.f32 %v821, 1e-05
  %v886 = vadd.f32 %v822, 1e-05
  %v887 = vadd.f32 %v823, 1e-05
  %v888 = vadd.f32 %v824, 1e-05
  %v889 = vadd.f32 %v825, 1e-05
  %v890 = vadd.f32 %v826, 1e-05
  %v891 = vadd.f32 %v827, 1e-05
  %v892 = vadd.f32 %v828, 1e-05
  %v893 = vadd.f32 %v829, 1e-05
  %v894 = vadd.f32 %v830, 1e-05
  %v895 = vadd.f32 %v831, 1e-05
  %v896 = vadd.f32 %v832, 1e-05
  %v897 = vadd.f32 %v833, 1e-05
  %v898 = vadd.f32 %v834, 1e-05
  %v899 = vadd.f32 %v835, 1e-05
  %v900 = vadd.f32 %v836, 1e-05
  %v901 = vadd.f32 %v837, 1e-05
  %v902 = vadd.f32 %v838, 1e-05
  %v903 = vadd.f32 %v839, 1e-05
  %v904 = vadd.f32 %v840, 1e-05
  %v905 = vadd.f32 %v841, 1e-05
  %v906 = vadd.f32 %v842, 1e-05
  %v907 = vadd.f32 %v843, 1e-05
  %v908 = vadd.f32 %v844, 1e-05
  %v909 = vadd.f32 %v845, 1e-05
  %v910 = vadd.f32 %v846, 1e-05
  %v911 = vadd.f32 %v847, 1e-05
  %v912 = vadd.f32 %v848, 1e-05
  %v913 = vadd.f32 %v849, 1e-05
  %v914 = vadd.f32 %v850, 1e-05
  %v915 = vadd.f32 %v851, 1e-05
  %v916 = vadd.f32 %v852, 1e-05
  %v917 = vadd.f32 %v853, 1e-05
  %v918 = vadd.f32 %v854, 1e-05
  %v919 = vadd.f32 %v855, 1e-05
  %v920 = vadd.f32 %v856, 1e-05
  %v921 = vadd.f32 %v857, 1e-05
  %v922 = vadd.f32 %v858, 1e-05
  %v923 = vadd.f32 %v859, 1e-05
  %v924 = vadd.f32 %v860, 1e-05
  %v925 = vadd.f32 %v861, 1e-05
  %v926 = vadd.f32 %v862, 1e-05
  %v927 = vrsqrt.pop %v863
  %v928 = vrsqrt.pop %v864
  %v929 = vrsqrt.pop %v865
  %v930 = vrsqrt.pop %v866
  %v931 = vrsqrt.pop %v867
  %v932 = vrsqrt.pop %v868
  %v933 = vrsqrt.pop %v869
  %v934 = vrsqrt.pop %v870
  %v935 = vrsqrt.pop %v871
  %v936 = vrsqrt.pop %v872
  %v937 = vrsqrt.pop %v873
  %v938 = vrsqrt.pop %v874
  %v939 = vrsqrt.pop %v875
  %v940 = vrsqrt.pop %v876
  %v941 = vrsqrt.pop %v877
  %v942 = vrsqrt.pop %v878
  %v943 = vrsqrt.pop %v879
  %v944 = vrsqrt.pop %v880
  %v945 = vrsqrt.pop %v881
  %v946 = vrsqrt.pop %v882
  %v947 = vrsqrt.pop %v883
  %v948 = vrsqrt.pop %v884
  %v949 = vrsqrt.pop %v885
  %v950 = vrsqrt.pop %v886
  %v951 = vrsqrt.pop %v887
  %v952 = vrsqrt.pop %v888
  %v953 = vrsqrt.pop %v889
  %v954 = vrsqrt.pop %v890
  %v955 = vrsqrt.pop %v891
  %v956 = vrsqrt.pop %v892
  %v957 = vrsqrt.pop %v893
  %v958 = vrsqrt.pop %v894
  %v959 = vrsqrt.pop %v895
  %v960 = vrsqrt.pop %v896
  %v961 = vrsqrt.pop %v897
  %v962 = vrsqrt.pop %v898
  %v963 = vrsqrt.pop %v899
  %v964 = vrsqrt.pop %v900
  %v965 = vrsqrt.pop %v901
  %v966 = vrsqrt.pop %v902
  %v967 = vrsqrt.pop %v903
  %v968 = vrsqrt.pop %v904
  %v969 = vrsqrt.pop %v905
  %v970 = vrsqrt.pop %v906
  %v971 = vrsqrt.pop %v907
  %v972 = vrsqrt.pop %v908
  %v973 = vrsqrt.pop %v909
  %v974 = vrsqrt.pop %v910
  %v975 = vrsqrt.pop %v911
  %v976 = vrsqrt.pop %v912
  %v977 = vrsqrt.pop %v913
  %v978 = vrsqrt.pop %v914
  %v979 = vrsqrt.pop %v915
  %v980 = vrsqrt.pop %v916
  %v981 = vrsqrt.pop %v917
  %v982 = vrsqrt.pop %v918
  %v983 = vrsqrt.pop %v919
  %v984 = vrsqrt.pop %v920
  %v985 = vrsqrt.pop %v921
  %v986 = vrsqrt.pop %v922
  %v987 = vrsqrt.pop %v923
  %v988 = vrsqrt.pop %v924
  %v989 = vrsqrt.pop %v925
  %v990 = vrsqrt.pop %v926
  %v991 = vmul.f32 %v479, %v927
  %v992 = vmul.f32 %v480, %v928
  %v993 = vmul.f32 %v481, %v929
  %v994 = vmul.f32 %v482, %v930
  %v995 = vmul.f32 %v483, %v931
  %v996 = vmul.f32 %v484, %v932
  %v997 = vmul.f32 %v485, %v933
  %v998 = vmul.f32 %v486, %v934
  %v999 = vmul.f32 %v487, %v935
  %v1000 = vmul.f32 %v488, %v936
  %v1001 = vmul.f32 %v489, %v937
  %v1002 = vmul.f32 %v490, %v938
  %v1003 = vmul.f32 %v491, %v939
  %v1004 = vmul.f32 %v492, %v940
  %v1005 = vmul.f32 %v493, %v941
  %v1006 = vmul.f32 %v494, %v942
  %v1007 = vmul.f32 %v495, %v943
  %v1008 = vmul.f32 %v496, %v944
  %v1009 = vmul.f32 %v497, %v945
  %v1010 = vmul.f32 %v498, %v946
  %v1011 = vmul.f32 %v499, %v947
  %v1012 = vmul.f32 %v500, %v948
  %v1013 = vmul.f32 %v501, %v949
  %v1014 = vmul.f32 %v502, %v950
  %v1015 = vmul.f32 %v503, %v951
  %v1016 = vmul.f32 %v504, %v952
  %v1017 = vmul.f32 %v505, %v953
  %v1018 = vmul.f32 %v506, %v954
  %v1019 = vmul.f32 %v507, %v955
  %v1020 = vmul.f32 %v508, %v956
  %v1021 = vmul.f32 %v509, %v957
  %v1022 = vmul.f32 %v510, %v958
  %v1023 = vmul.f32 %v511, %v959
  %v1024 = vmul.f32 %v512, %v960
  %v1025 = vmul.f32 %v513, %v961
  %v1026 = vmul.f32 %v514, %v962
  %v1027 = vmul.f32 %v515, %v963
  %v1028 = vmul.f32 %v516, %v964
  %v1029 = vmul.f32 %v517, %v965
  %v1030 = vmul.f32 %v518, %v966
  %v1031 = vmul.f32 %v519, %v967
  %v1032 = vmul.f32 %v520, %v968
  %v1033 = vmul.f32 %v521, %v969
  %v1034 = vmul.f32 %v522, %v970
  %v1035 = vmul.f32 %v523, %v971
  %v1036 = vmul.f32 %v524, %v972
  %v1037 = vmul.f32 %v525, %v973
  %v1038 = vmul.f32 %v526, %v974
  %v1039 = vmul.f32 %v527, %v975
  %v1040 = vmul.f32 %v528, %v976
  %v1041 = vmul.f32 %v529, %v977
  %v1042 = vmul.f32 %v530, %v978
  %v1043 = vmul.f32 %v531, %v979
  %v1044 = vmul.f32 %v532, %v980
  %v1045 = vmul.f32 %v533, %v981
  %v1046 = vmul.f32 %v534, %v982
  %v1047 = vmul.f32 %v535, %v983
  %v1048 = vmul.f32 %v536, %v984
  %v1049 = vmul.f32 %v537, %v985
  %v1050 = vmul.f32 %v538, %v986
  %v1051 = vmul.f32 %v539, %v987
  %v1052 = vmul.f32 %v540, %v988
  %v1053 = vmul.f32 %v541, %v989
  %v1054 = vmul.f32 %v542, %v990
  %v1055 = vld [vmem:[%s2] sm:$0x1]
  %v1057 = vlaneseq
  %v1058 = vshrl.u32 %v1057, 7
  %v1059 = vsub.s32 0, %v1058
  %v1060 = vrot.slane %v1055, %v1059
  %v1062 = vmul.f32 %v991, %v1060
  %v1063 = vmul.f32 %v992, %v1060
  %v1064 = vmul.f32 %v993, %v1060
  %v1065 = vmul.f32 %v994, %v1060
  %v1066 = vmul.f32 %v995, %v1060
  %v1067 = vmul.f32 %v996, %v1060
  %v1068 = vmul.f32 %v997, %v1060
  %v1069 = vmul.f32 %v998, %v1060
  %v1070 = vmul.f32 %v999, %v1060
  %v1071 = vmul.f32 %v1000, %v1060
  %v1072 = vmul.f32 %v1001, %v1060
  %v1073 = vmul.f32 %v1002, %v1060
  %v1074 = vmul.f32 %v1003, %v1060
  %v1075 = vmul.f32 %v1004, %v1060
  %v1076 = vmul.f32 %v1005, %v1060
  %v1077 = vmul.f32 %v1006, %v1060
  %v1078 = vmul.f32 %v1007, %v1060
  %v1079 = vmul.f32 %v1008, %v1060
  %v1080 = vmul.f32 %v1009, %v1060
  %v1081 = vmul.f32 %v1010, %v1060
  %v1082 = vmul.f32 %v1011, %v1060
  %v1083 = vmul.f32 %v1012, %v1060
  %v1084 = vmul.f32 %v1013, %v1060
  %v1085 = vmul.f32 %v1014, %v1060
  %v1086 = vmul.f32 %v1015, %v1060
  %v1087 = vmul.f32 %v1016, %v1060
  %v1088 = vmul.f32 %v1017, %v1060
  %v1089 = vmul.f32 %v1018, %v1060
  %v1090 = vmul.f32 %v1019, %v1060
  %v1091 = vmul.f32 %v1020, %v1060
  %v1092 = vmul.f32 %v1021, %v1060
  %v1093 = vmul.f32 %v1022, %v1060
  %v1094 = vmul.f32 %v1023, %v1060
  %v1095 = vmul.f32 %v1024, %v1060
  %v1096 = vmul.f32 %v1025, %v1060
  %v1097 = vmul.f32 %v1026, %v1060
  %v1098 = vmul.f32 %v1027, %v1060
  %v1099 = vmul.f32 %v1028, %v1060
  %v1100 = vmul.f32 %v1029, %v1060
  %v1101 = vmul.f32 %v1030, %v1060
  %v1102 = vmul.f32 %v1031, %v1060
  %v1103 = vmul.f32 %v1032, %v1060
  %v1104 = vmul.f32 %v1033, %v1060
  %v1105 = vmul.f32 %v1034, %v1060
  %v1106 = vmul.f32 %v1035, %v1060
  %v1107 = vmul.f32 %v1036, %v1060
  %v1108 = vmul.f32 %v1037, %v1060
  %v1109 = vmul.f32 %v1038, %v1060
  %v1110 = vmul.f32 %v1039, %v1060
  %v1111 = vmul.f32 %v1040, %v1060
  %v1112 = vmul.f32 %v1041, %v1060
  %v1113 = vmul.f32 %v1042, %v1060
  %v1114 = vmul.f32 %v1043, %v1060
  %v1115 = vmul.f32 %v1044, %v1060
  %v1116 = vmul.f32 %v1045, %v1060
  %v1117 = vmul.f32 %v1046, %v1060
  %v1118 = vmul.f32 %v1047, %v1060
  %v1119 = vmul.f32 %v1048, %v1060
  %v1120 = vmul.f32 %v1049, %v1060
  %v1121 = vmul.f32 %v1050, %v1060
  %v1122 = vmul.f32 %v1051, %v1060
  %v1123 = vmul.f32 %v1052, %v1060
  %v1124 = vmul.f32 %v1053, %v1060
  %v1125 = vmul.f32 %v1054, %v1060
  %v1126 = vld [vmem:[%s3] sm:$0x1]
  %v1128 = vlaneseq
  %v1129 = vshrl.u32 %v1128, 7
  %v1130 = vsub.s32 0, %v1129
  %v1131 = vrot.slane %v1126, %v1130
  %v1133 = vadd.f32 %v1062, %v1131
  %v1134 = vadd.f32 %v1063, %v1131
  %v1135 = vadd.f32 %v1064, %v1131
  %v1136 = vadd.f32 %v1065, %v1131
  %v1137 = vadd.f32 %v1066, %v1131
  %v1138 = vadd.f32 %v1067, %v1131
  %v1139 = vadd.f32 %v1068, %v1131
  %v1140 = vadd.f32 %v1069, %v1131
  %v1141 = vadd.f32 %v1070, %v1131
  %v1142 = vadd.f32 %v1071, %v1131
  %v1143 = vadd.f32 %v1072, %v1131
  %v1144 = vadd.f32 %v1073, %v1131
  %v1145 = vadd.f32 %v1074, %v1131
  %v1146 = vadd.f32 %v1075, %v1131
  %v1147 = vadd.f32 %v1076, %v1131
  %v1148 = vadd.f32 %v1077, %v1131
  %v1149 = vadd.f32 %v1078, %v1131
  %v1150 = vadd.f32 %v1079, %v1131
  %v1151 = vadd.f32 %v1080, %v1131
  %v1152 = vadd.f32 %v1081, %v1131
  %v1153 = vadd.f32 %v1082, %v1131
  %v1154 = vadd.f32 %v1083, %v1131
  %v1155 = vadd.f32 %v1084, %v1131
  %v1156 = vadd.f32 %v1085, %v1131
  %v1157 = vadd.f32 %v1086, %v1131
  %v1158 = vadd.f32 %v1087, %v1131
  %v1159 = vadd.f32 %v1088, %v1131
  %v1160 = vadd.f32 %v1089, %v1131
  %v1161 = vadd.f32 %v1090, %v1131
  %v1162 = vadd.f32 %v1091, %v1131
  %v1163 = vadd.f32 %v1092, %v1131
  %v1164 = vadd.f32 %v1093, %v1131
  %v1165 = vadd.f32 %v1094, %v1131
  %v1166 = vadd.f32 %v1095, %v1131
  %v1167 = vadd.f32 %v1096, %v1131
  %v1168 = vadd.f32 %v1097, %v1131
  %v1169 = vadd.f32 %v1098, %v1131
  %v1170 = vadd.f32 %v1099, %v1131
  %v1171 = vadd.f32 %v1100, %v1131
  %v1172 = vadd.f32 %v1101, %v1131
  %v1173 = vadd.f32 %v1102, %v1131
  %v1174 = vadd.f32 %v1103, %v1131
  %v1175 = vadd.f32 %v1104, %v1131
  %v1176 = vadd.f32 %v1105, %v1131
  %v1177 = vadd.f32 %v1106, %v1131
  %v1178 = vadd.f32 %v1107, %v1131
  %v1179 = vadd.f32 %v1108, %v1131
  %v1180 = vadd.f32 %v1109, %v1131
  %v1181 = vadd.f32 %v1110, %v1131
  %v1182 = vadd.f32 %v1111, %v1131
  %v1183 = vadd.f32 %v1112, %v1131
  %v1184 = vadd.f32 %v1113, %v1131
  %v1185 = vadd.f32 %v1114, %v1131
  %v1186 = vadd.f32 %v1115, %v1131
  %v1187 = vadd.f32 %v1116, %v1131
  %v1188 = vadd.f32 %v1117, %v1131
  %v1189 = vadd.f32 %v1118, %v1131
  %v1190 = vadd.f32 %v1119, %v1131
  %v1191 = vadd.f32 %v1120, %v1131
  %v1192 = vadd.f32 %v1121, %v1131
  %v1193 = vadd.f32 %v1122, %v1131
  %v1194 = vadd.f32 %v1123, %v1131
  %v1195 = vadd.f32 %v1124, %v1131
  %v1196 = vadd.f32 %v1125, %v1131
  %v1197 = vld [vmem:[%s4] sm:$0xff]
  %v1198 = vld [vmem:[%s4 + $0x8] sm:$0xff]
  %v1199 = vld [vmem:[%s4 + $0x10] sm:$0xff]
  %v1200 = vld [vmem:[%s4 + $0x18] sm:$0xff]
  %v1201 = vld [vmem:[%s5] sm:$0x1]
  %v1203 = vlaneseq
  %v1204 = vshrl.u32 %v1203, 7
  %v1205 = vsub.s32 0, %v1204
  %v1206 = vrot.slane %v1201, %v1205
  %v1209 = vsel %vm221, %v1133, 0
  %v1212 = vsel %vm221, %v1134, 0
  %v1215 = vsel %vm221, %v1135, 0
  %v1218 = vsel %vm221, %v1136, 0
  %v1221 = vsel %vm221, %v1137, 0
  %v1224 = vsel %vm221, %v1138, 0
  %v1227 = vsel %vm221, %v1139, 0
  %v1230 = vsel %vm221, %v1140, 0
  %v1233 = vsel %vm221, %v1141, 0
  %v1236 = vsel %vm221, %v1142, 0
  %v1239 = vsel %vm221, %v1143, 0
  %v1242 = vsel %vm221, %v1144, 0
  %v1245 = vsel %vm221, %v1145, 0
  %v1248 = vsel %vm221, %v1146, 0
  %v1251 = vsel %vm221, %v1147, 0
  %v1254 = vsel %vm221, %v1148, 0
  %v1257 = vsel %vm221, %v1149, 0
  %v1260 = vsel %vm221, %v1150, 0
  %v1263 = vsel %vm221, %v1151, 0
  %v1266 = vsel %vm221, %v1152, 0
  %v1269 = vsel %vm221, %v1153, 0
  %v1272 = vsel %vm221, %v1154, 0
  %v1275 = vsel %vm221, %v1155, 0
  %v1278 = vsel %vm221, %v1156, 0
  %v1281 = vsel %vm221, %v1157, 0
  %v1284 = vsel %vm221, %v1158, 0
  %v1287 = vsel %vm221, %v1159, 0
  %v1290 = vsel %vm221, %v1160, 0
  %v1293 = vsel %vm221, %v1161, 0
  %v1296 = vsel %vm221, %v1162, 0
  %v1299 = vsel %vm221, %v1163, 0
  %v1302 = vsel %vm221, %v1164, 0
  %v1305 = vsel %vm221, %v1165, 0
  %v1308 = vsel %vm221, %v1166, 0
  %v1311 = vsel %vm221, %v1167, 0
  %v1314 = vsel %vm221, %v1168, 0
  %v1317 = vsel %vm221, %v1169, 0
  %v1320 = vsel %vm221, %v1170, 0
  %v1323 = vsel %vm221, %v1171, 0
  %v1326 = vsel %vm221, %v1172, 0
  %v1329 = vsel %vm221, %v1173, 0
  %v1332 = vsel %vm221, %v1174, 0
  %v1335 = vsel %vm221, %v1175, 0
  %v1338 = vsel %vm221, %v1176, 0
  %v1341 = vsel %vm221, %v1177, 0
  %v1344 = vsel %vm221, %v1178, 0
  %v1347 = vsel %vm221, %v1179, 0
  %v1350 = vsel %vm221, %v1180, 0
  %v1353 = vsel %vm221, %v1181, 0
  %v1356 = vsel %vm221, %v1182, 0
  %v1359 = vsel %vm221, %v1183, 0
  %v1362 = vsel %vm221, %v1184, 0
  %v1365 = vsel %vm221, %v1185, 0
  %v1368 = vsel %vm221, %v1186, 0
  %v1371 = vsel %vm221, %v1187, 0
  %v1374 = vsel %vm221, %v1188, 0
  %v1377 = vsel %vm221, %v1189, 0
  %v1380 = vsel %vm221, %v1190, 0
  %v1383 = vsel %vm221, %v1191, 0
  %v1386 = vsel %vm221, %v1192, 0
  %v1389 = vsel %vm221, %v1193, 0
  %v1392 = vsel %vm221, %v1194, 0
  %v1395 = vsel %vm221, %v1195, 0
  %v1398 = vsel %vm221, %v1196, 0
  %1400 = vmatprep.subr.mxu0 0.0
  %1401 = vmatpush1.msra.mxu0 %v1197
  %1402 = vmatprep.subr.mxu0 0.0
  %1403 = vmatpush1.msra.mxu0 %v1198
  %1404 = vmatprep.subr.mxu0 0.0
  %1405 = vmatpush1.msra.mxu0 %v1199
  %1406 = vmatprep.subr.mxu0 0.0
  %1407 = vmatpush1.msra.mxu0 %v1200
  %1408 = vmatprep.subr.mxu0 0.0
  %1409 = vmatpush1.msra.mxu0 0.0
  %1410 = vmatprep.subr.mxu0 0.0
  %1411 = vmatpush1.msra.mxu0 0.0
  %1412 = vmatprep.subr.mxu0 0.0
  %1413 = vmatpush1.msra.mxu0 0.0
  %1414 = vmatprep.subr.mxu0 0.0
  %1415 = vmatpush1.msra.mxu0 0.0
  %1416 = vmatprep.subr.mxu0 0.0
  %1417 = vmatpush1.msra.mxu0 0.0
  %1418 = vmatprep.subr.mxu0 0.0
  %1419 = vmatpush1.msra.mxu0 0.0
  %1420 = vmatprep.subr.mxu0 0.0
  %1421 = vmatpush1.msra.mxu0 0.0
  %1422 = vmatprep.subr.mxu0 0.0
  %1423 = vmatpush1.msra.mxu0 0.0
  %1424 = vmatprep.subr.mxu0 0.0
  %1425 = vmatpush1.msra.mxu0 0.0
  %1426 = vmatprep.subr.mxu0 0.0
  %1427 = vmatpush1.msra.mxu0 0.0
  %1428 = vmatprep.subr.mxu0 0.0
  %1429 = vmatpush1.msra.mxu0 0.0
  %1430 = vmatprep.subr.mxu0 0.0
  %1431 = vmatpush1.msra.mxu0 0.0
  %1432 = vmatprep.subr.mxu0 0.0
  %1433 = vmatpush1.msra.mxu0 0.0
  %1434 = vmatprep.subr.mxu0 0.0
  %1435 = vmatpush1.msra.mxu0 0.0
  %1436 = vmatprep.subr.mxu0 0.0
  %1437 = vmatpush1.msra.mxu0 0.0
  %1438 = vmatprep.subr.mxu0 0.0
  %1439 = vmatpush1.msra.mxu0 0.0
  %1440 = vmatprep.subr.mxu0 0.0
  %1441 = vmatpush1.msra.mxu0 0.0
  %1442 = vmatprep.subr.mxu0 0.0
  %1443 = vmatpush1.msra.mxu0 0.0
  %1444 = vmatprep.subr.mxu0 0.0
  %1445 = vmatpush1.msra.mxu0 0.0
  %1446 = vmatprep.subr.mxu0 0.0
  %1447 = vmatpush1.msra.mxu0 0.0
  %1448 = vmatprep.subr.mxu0 0.0
  %1449 = vmatpush1.msra.mxu0 0.0
  %1450 = vmatprep.subr.mxu0 0.0
  %1451 = vmatpush1.msra.mxu0 0.0
  %1452 = vmatprep.subr.mxu0 0.0
  %1453 = vmatpush1.msra.mxu0 0.0
  %1454 = vmatprep.subr.mxu0 0.0
  %1455 = vmatpush1.msra.mxu0 0.0
  %1456 = vmatprep.subr.mxu0 0.0
  %1457 = vmatpush1.msra.mxu0 0.0
  %1458 = vmatprep.subr.mxu0 0.0
  %1459 = vmatpush1.msra.mxu0 0.0
  %1460 = vmatprep.subr.mxu0 0.0
  %1461 = vmatpush1.msra.mxu0 0.0
  %1462 = vmatprep.subr.mxu0 0.0
  %1463 = vmatpush1.msra.mxu0 0.0
  %1464 = vmatprep.mubr.f32.mxu0 0.0
  %1465 = vmatmul.mubr.f32.gmra.mrb[0].mxu0 %v1209
  %v1466 = vpop.f32.mrb[0].mxu0
  %v1467 = vadd.f32 %v1206, %v1466
  %v1468 = vpop.f32.mrb[0].mxu0
  %1469 = vmatprep.mubr.f32.mxu0 0.0
  %1470 = vmatmul.mubr.f32.gmra.mrb[0].mxu0 %v1212
  %v1471 = vpop.f32.mrb[0].mxu0
  %v1472 = vadd.f32 %v1206, %v1471
  %v1473 = vpop.f32.mrb[0].mxu0
  %1474 = vmatprep.mubr.f32.mxu0 0.0
  %1475 = vmatmul.mubr.f32.gmra.mrb[0].mxu0 %v1215
  %v1476 = vpop.f32.mrb[0].mxu0
  %v1477 = vadd.f32 %v1206, %v1476
  %v1478 = vpop.f32.mrb[0].mxu0
  %1479 = vmatprep.mubr.f32.mxu0 0.0
  %1480 = vmatmul.mubr.f32.gmra.mrb[0].mxu0 %v1218
  %v1481 = vpop.f32.mrb[0].mxu0
  %v1482 = vadd.f32 %v1206, %v1481
  %v1483 = vpop.f32.mrb[0].mxu0
  %1484 = vmatprep.mubr.f32.mxu0 0.0
  %1485 = vmatmul.mubr.f32.gmra.mrb[0].mxu0 %v1221
  %v1486 = vpop.f32.mrb[0].mxu0
  %v1487 = vadd.f32 %v1206, %v1486
  %v1488 = vpop.f32.mrb[0].mxu0
  %1489 = vmatprep.mubr.f32.mxu0 0.0
  %1490 = vmatmul.mubr.f32.gmra.mrb[0].mxu0 %v1224
  %v1491 = vpop.f32.mrb[0].mxu0
  %v1492 = vadd.f32 %v1206, %v1491
  %v1493 = vpop.f32.mrb[0].mxu0
  %1494 = vmatprep.mubr.f32.mxu0 0.0
  %1495 = vmatmul.mubr.f32.gmra.mrb[0].mxu0 %v1227
  %v1496 = vpop.f32.mrb[0].mxu0
  %v1497 = vadd.f32 %v1206, %v1496
  %v1498 = vpop.f32.mrb[0].mxu0
  %1499 = vmatprep.mubr.f32.mxu0 0.0
  %1500 = vmatmul.mubr.f32.gmra.mrb[0].mxu0 %v1230
  %v1501 = vpop.f32.mrb[0].mxu0
  %v1502 = vadd.f32 %v1206, %v1501
  %v1503 = vpop.f32.mrb[0].mxu0
  %1504 = vmatprep.mubr.f32.mxu0 0.0
  %1505 = vmatmul.mubr.f32.gmra.mrb[0].mxu0 %v1233
  %v1506 = vpop.f32.mrb[0].mxu0
  %v1507 = vadd.f32 %v1206, %v1506
  %v1508 = vpop.f32.mrb[0].mxu0
  %1509 = vmatprep.mubr.f32.mxu0 0.0
  %1510 = vmatmul.mubr.f32.gmra.mrb[0].mxu0 %v1236
  %v1511 = vpop.f32.mrb[0].mxu0
  %v1512 = vadd.f32 %v1206, %v1511
  %v1513 = vpop.f32.mrb[0].mxu0
  %1514 = vmatprep.mubr.f32.mxu0 0.0
  %1515 = vmatmul.mubr.f32.gmra.mrb[0].mxu0 %v1239
  %v1516 = vpop.f32.mrb[0].mxu0
  %v1517 = vadd.f32 %v1206, %v1516
  %v1518 = vpop.f32.mrb[0].mxu0
  %1519 = vmatprep.mubr.f32.mxu0 0.0
  %1520 = vmatmul.mubr.f32.gmra.mrb[0].mxu0 %v1242
  %v1521 = vpop.f32.mrb[0].mxu0
  %v1522 = vadd.f32 %v1206, %v1521
  %v1523 = vpop.f32.mrb[0].mxu0
  %1524 = vmatprep.mubr.f32.mxu0 0.0
  %1525 = vmatmul.mubr.f32.gmra.mrb[0].mxu0 %v1245
  %v1526 = vpop.f32.mrb[0].mxu0
  %v1527 = vadd.f32 %v1206, %v1526
  %v1528 = vpop.f32.mrb[0].mxu0
  %1529 = vmatprep.mubr.f32.mxu0 0.0
  %1530 = vmatmul.mubr.f32.gmra.mrb[0].mxu0 %v1248
  %v1531 = vpop.f32.mrb[0].mxu0
  %v1532 = vadd.f32 %v1206, %v1531
  %v1533 = vpop.f32.mrb[0].mxu0
  %1534 = vmatprep.mubr.f32.mxu0 0.0
  %1535 = vmatmul.mubr.f32.gmra.mrb[0].mxu0 %v1251
  %v1536 = vpop.f32.mrb[0].mxu0
  %v1537 = vadd.f32 %v1206, %v1536
  %v1538 = vpop.f32.mrb[0].mxu0
  %1539 = vmatprep.mubr.f32.mxu0 0.0
  %1540 = vmatmul.mubr.f32.gmra.mrb[0].mxu0 %v1254
  %v1541 = vpop.f32.mrb[0].mxu0
  %v1542 = vadd.f32 %v1206, %v1541
  %v1543 = vpop.f32.mrb[0].mxu0
  %1544 = vmatprep.mubr.f32.mxu0 0.0
  %1545 = vmatmul.mubr.f32.gmra.mrb[0].mxu0 %v1257
  %v1546 = vpop.f32.mrb[0].mxu0
  %v1547 = vadd.f32 %v1206, %v1546
  %v1548 = vpop.f32.mrb[0].mxu0
  %1549 = vmatprep.mubr.f32.mxu0 0.0
  %1550 = vmatmul.mubr.f32.gmra.mrb[0].mxu0 %v1260
  %v1551 = vpop.f32.mrb[0].mxu0
  %v1552 = vadd.f32 %v1206, %v1551
  %v1553 = vpop.f32.mrb[0].mxu0
  %1554 = vmatprep.mubr.f32.mxu0 0.0
  %1555 = vmatmul.mubr.f32.gmra.mrb[0].mxu0 %v1263
  %v1556 = vpop.f32.mrb[0].mxu0
  %v1557 = vadd.f32 %v1206, %v1556
  %v1558 = vpop.f32.mrb[0].mxu0
  %1559 = vmatprep.mubr.f32.mxu0 0.0
  %1560 = vmatmul.mubr.f32.gmra.mrb[0].mxu0 %v1266
  %v1561 = vpop.f32.mrb[0].mxu0
  %v1562 = vadd.f32 %v1206, %v1561
  %v1563 = vpop.f32.mrb[0].mxu0
  %1564 = vmatprep.mubr.f32.mxu0 0.0
  %1565 = vmatmul.mubr.f32.gmra.mrb[0].mxu0 %v1269
  %v1566 = vpop.f32.mrb[0].mxu0
  %v1567 = vadd.f32 %v1206, %v1566
  %v1568 = vpop.f32.mrb[0].mxu0
  %1569 = vmatprep.mubr.f32.mxu0 0.0
  %1570 = vmatmul.mubr.f32.gmra.mrb[0].mxu0 %v1272
  %v1571 = vpop.f32.mrb[0].mxu0
  %v1572 = vadd.f32 %v1206, %v1571
  %v1573 = vpop.f32.mrb[0].mxu0
  %1574 = vmatprep.mubr.f32.mxu0 0.0
  %1575 = vmatmul.mubr.f32.gmra.mrb[0].mxu0 %v1275
  %v1576 = vpop.f32.mrb[0].mxu0
  %v1577 = vadd.f32 %v1206, %v1576
  %v1578 = vpop.f32.mrb[0].mxu0
  %1579 = vmatprep.mubr.f32.mxu0 0.0
  %1580 = vmatmul.mubr.f32.gmra.mrb[0].mxu0 %v1278
  %v1581 = vpop.f32.mrb[0].mxu0
  %v1582 = vadd.f32 %v1206, %v1581
  %v1583 = vpop.f32.mrb[0].mxu0
  %1584 = vmatprep.mubr.f32.mxu0 0.0
  %1585 = vmatmul.mubr.f32.gmra.mrb[0].mxu0 %v1281
  %v1586 = vpop.f32.mrb[0].mxu0
  %v1587 = vadd.f32 %v1206, %v1586
  %v1588 = vpop.f32.mrb[0].mxu0
  %1589 = vmatprep.mubr.f32.mxu0 0.0
  %1590 = vmatmul.mubr.f32.gmra.mrb[0].mxu0 %v1284
  %v1591 = vpop.f32.mrb[0].mxu0
  %v1592 = vadd.f32 %v1206, %v1591
  %v1593 = vpop.f32.mrb[0].mxu0
  %1594 = vmatprep.mubr.f32.mxu0 0.0
  %1595 = vmatmul.mubr.f32.gmra.mrb[0].mxu0 %v1287
  %v1596 = vpop.f32.mrb[0].mxu0
  %v1597 = vadd.f32 %v1206, %v1596
  %v1598 = vpop.f32.mrb[0].mxu0
  %1599 = vmatprep.mubr.f32.mxu0 0.0
  %1600 = vmatmul.mubr.f32.gmra.mrb[0].mxu0 %v1290
  %v1601 = vpop.f32.mrb[0].mxu0
  %v1602 = vadd.f32 %v1206, %v1601
  %v1603 = vpop.f32.mrb[0].mxu0
  %1604 = vmatprep.mubr.f32.mxu0 0.0
  %1605 = vmatmul.mubr.f32.gmra.mrb[0].mxu0 %v1293
  %v1606 = vpop.f32.mrb[0].mxu0
  %v1607 = vadd.f32 %v1206, %v1606
  %v1608 = vpop.f32.mrb[0].mxu0
  %1609 = vmatprep.mubr.f32.mxu0 0.0
  %1610 = vmatmul.mubr.f32.gmra.mrb[0].mxu0 %v1296
  %v1611 = vpop.f32.mrb[0].mxu0
  %v1612 = vadd.f32 %v1206, %v1611
  %v1613 = vpop.f32.mrb[0].mxu0
  %1614 = vmatprep.mubr.f32.mxu0 0.0
  %1615 = vmatmul.mubr.f32.gmra.mrb[0].mxu0 %v1299
  %v1616 = vpop.f32.mrb[0].mxu0
  %v1617 = vadd.f32 %v1206, %v1616
  %v1618 = vpop.f32.mrb[0].mxu0
  %1619 = vmatprep.mubr.f32.mxu0 0.0
  %1620 = vmatmul.mubr.f32.gmra.mrb[0].mxu0 %v1302
  %v1621 = vpop.f32.mrb[0].mxu0
  %v1622 = vadd.f32 %v1206, %v1621
  %v1623 = vpop.f32.mrb[0].mxu0
  %1624 = vmatprep.mubr.f32.mxu0 0.0
  %1625 = vmatmul.mubr.f32.gmra.mrb[0].mxu0 %v1305
  %v1626 = vpop.f32.mrb[0].mxu0
  %v1627 = vadd.f32 %v1206, %v1626
  %v1628 = vpop.f32.mrb[0].mxu0
  %1629 = vmatprep.mubr.f32.mxu0 0.0
  %1630 = vmatmul.mubr.f32.gmra.mrb[0].mxu0 %v1308
  %v1631 = vpop.f32.mrb[0].mxu0
  %v1632 = vadd.f32 %v1206, %v1631
  %v1633 = vpop.f32.mrb[0].mxu0
  %1634 = vmatprep.mubr.f32.mxu0 0.0
  %1635 = vmatmul.mubr.f32.gmra.mrb[0].mxu0 %v1311
  %v1636 = vpop.f32.mrb[0].mxu0
  %v1637 = vadd.f32 %v1206, %v1636
  %v1638 = vpop.f32.mrb[0].mxu0
  %1639 = vmatprep.mubr.f32.mxu0 0.0
  %1640 = vmatmul.mubr.f32.gmra.mrb[0].mxu0 %v1314
  %v1641 = vpop.f32.mrb[0].mxu0
  %v1642 = vadd.f32 %v1206, %v1641
  %v1643 = vpop.f32.mrb[0].mxu0
  %1644 = vmatprep.mubr.f32.mxu0 0.0
  %1645 = vmatmul.mubr.f32.gmra.mrb[0].mxu0 %v1317
  %v1646 = vpop.f32.mrb[0].mxu0
  %v1647 = vadd.f32 %v1206, %v1646
  %v1648 = vpop.f32.mrb[0].mxu0
  %1649 = vmatprep.mubr.f32.mxu0 0.0
  %1650 = vmatmul.mubr.f32.gmra.mrb[0].mxu0 %v1320
  %v1651 = vpop.f32.mrb[0].mxu0
  %v1652 = vadd.f32 %v1206, %v1651
  %v1653 = vpop.f32.mrb[0].mxu0
  %1654 = vmatprep.mubr.f32.mxu0 0.0
  %1655 = vmatmul.mubr.f32.gmra.mrb[0].mxu0 %v1323
  %v1656 = vpop.f32.mrb[0].mxu0
  %v1657 = vadd.f32 %v1206, %v1656
  %v1658 = vpop.f32.mrb[0].mxu0
  %1659 = vmatprep.mubr.f32.mxu0 0.0
  %1660 = vmatmul.mubr.f32.gmra.mrb[0].mxu0 %v1326
  %v1661 = vpop.f32.mrb[0].mxu0
  %v1662 = vadd.f32 %v1206, %v1661
  %v1663 = vpop.f32.mrb[0].mxu0
  %1664 = vmatprep.mubr.f32.mxu0 0.0
  %1665 = vmatmul.mubr.f32.gmra.mrb[0].mxu0 %v1329
  %v1666 = vpop.f32.mrb[0].mxu0
  %v1667 = vadd.f32 %v1206, %v1666
  %v1668 = vpop.f32.mrb[0].mxu0
  %1669 = vmatprep.mubr.f32.mxu0 0.0
  %1670 = vmatmul.mubr.f32.gmra.mrb[0].mxu0 %v1332
  %v1671 = vpop.f32.mrb[0].mxu0
  %v1672 = vadd.f32 %v1206, %v1671
  %v1673 = vpop.f32.mrb[0].mxu0
  %1674 = vmatprep.mubr.f32.mxu0 0.0
  %1675 = vmatmul.mubr.f32.gmra.mrb[0].mxu0 %v1335
  %v1676 = vpop.f32.mrb[0].mxu0
  %v1677 = vadd.f32 %v1206, %v1676
  %v1678 = vpop.f32.mrb[0].mxu0
  %1679 = vmatprep.mubr.f32.mxu0 0.0
  %1680 = vmatmul.mubr.f32.gmra.mrb[0].mxu0 %v1338
  %v1681 = vpop.f32.mrb[0].mxu0
  %v1682 = vadd.f32 %v1206, %v1681
  %v1683 = vpop.f32.mrb[0].mxu0
  %1684 = vmatprep.mubr.f32.mxu0 0.0
  %1685 = vmatmul.mubr.f32.gmra.mrb[0].mxu0 %v1341
  %v1686 = vpop.f32.mrb[0].mxu0
  %v1687 = vadd.f32 %v1206, %v1686
  %v1688 = vpop.f32.mrb[0].mxu0
  %1689 = vmatprep.mubr.f32.mxu0 0.0
  %1690 = vmatmul.mubr.f32.gmra.mrb[0].mxu0 %v1344
  %v1691 = vpop.f32.mrb[0].mxu0
  %v1692 = vadd.f32 %v1206, %v1691
  %v1693 = vpop.f32.mrb[0].mxu0
  %1694 = vmatprep.mubr.f32.mxu0 0.0
  %1695 = vmatmul.mubr.f32.gmra.mrb[0].mxu0 %v1347
  %v1696 = vpop.f32.mrb[0].mxu0
  %v1697 = vadd.f32 %v1206, %v1696
  %v1698 = vpop.f32.mrb[0].mxu0
  %1699 = vmatprep.mubr.f32.mxu0 0.0
  %1700 = vmatmul.mubr.f32.gmra.mrb[0].mxu0 %v1350
  %v1701 = vpop.f32.mrb[0].mxu0
  %v1702 = vadd.f32 %v1206, %v1701
  %v1703 = vpop.f32.mrb[0].mxu0
  %1704 = vmatprep.mubr.f32.mxu0 0.0
  %1705 = vmatmul.mubr.f32.gmra.mrb[0].mxu0 %v1353
  %v1706 = vpop.f32.mrb[0].mxu0
  %v1707 = vadd.f32 %v1206, %v1706
  %v1708 = vpop.f32.mrb[0].mxu0
  %1709 = vmatprep.mubr.f32.mxu0 0.0
  %1710 = vmatmul.mubr.f32.gmra.mrb[0].mxu0 %v1356
  %v1711 = vpop.f32.mrb[0].mxu0
  %v1712 = vadd.f32 %v1206, %v1711
  %v1713 = vpop.f32.mrb[0].mxu0
  %1714 = vmatprep.mubr.f32.mxu0 0.0
  %1715 = vmatmul.mubr.f32.gmra.mrb[0].mxu0 %v1359
  %v1716 = vpop.f32.mrb[0].mxu0
  %v1717 = vadd.f32 %v1206, %v1716
  %v1718 = vpop.f32.mrb[0].mxu0
  %1719 = vmatprep.mubr.f32.mxu0 0.0
  %1720 = vmatmul.mubr.f32.gmra.mrb[0].mxu0 %v1362
  %v1721 = vpop.f32.mrb[0].mxu0
  %v1722 = vadd.f32 %v1206, %v1721
  %v1723 = vpop.f32.mrb[0].mxu0
  %1724 = vmatprep.mubr.f32.mxu0 0.0
  %1725 = vmatmul.mubr.f32.gmra.mrb[0].mxu0 %v1365
  %v1726 = vpop.f32.mrb[0].mxu0
  %v1727 = vadd.f32 %v1206, %v1726
  %v1728 = vpop.f32.mrb[0].mxu0
  %1729 = vmatprep.mubr.f32.mxu0 0.0
  %1730 = vmatmul.mubr.f32.gmra.mrb[0].mxu0 %v1368
  %v1731 = vpop.f32.mrb[0].mxu0
  %v1732 = vadd.f32 %v1206, %v1731
  %v1733 = vpop.f32.mrb[0].mxu0
  %1734 = vmatprep.mubr.f32.mxu0 0.0
  %1735 = vmatmul.mubr.f32.gmra.mrb[0].mxu0 %v1371
  %v1736 = vpop.f32.mrb[0].mxu0
  %v1737 = vadd.f32 %v1206, %v1736
  %v1738 = vpop.f32.mrb[0].mxu0
  %1739 = vmatprep.mubr.f32.mxu0 0.0
  %1740 = vmatmul.mubr.f32.gmra.mrb[0].mxu0 %v1374
  %v1741 = vpop.f32.mrb[0].mxu0
  %v1742 = vadd.f32 %v1206, %v1741
  %v1743 = vpop.f32.mrb[0].mxu0
  %1744 = vmatprep.mubr.f32.mxu0 0.0
  %1745 = vmatmul.mubr.f32.gmra.mrb[0].mxu0 %v1377
  %v1746 = vpop.f32.mrb[0].mxu0
  %v1747 = vadd.f32 %v1206, %v1746
  %v1748 = vpop.f32.mrb[0].mxu0
  %1749 = vmatprep.mubr.f32.mxu0 0.0
  %1750 = vmatmul.mubr.f32.gmra.mrb[0].mxu0 %v1380
  %v1751 = vpop.f32.mrb[0].mxu0
  %v1752 = vadd.f32 %v1206, %v1751
  %v1753 = vpop.f32.mrb[0].mxu0
  %1754 = vmatprep.mubr.f32.mxu0 0.0
  %1755 = vmatmul.mubr.f32.gmra.mrb[0].mxu0 %v1383
  %v1756 = vpop.f32.mrb[0].mxu0
  %v1757 = vadd.f32 %v1206, %v1756
  %v1758 = vpop.f32.mrb[0].mxu0
  %1759 = vmatprep.mubr.f32.mxu0 0.0
  %1760 = vmatmul.mubr.f32.gmra.mrb[0].mxu0 %v1386
  %v1761 = vpop.f32.mrb[0].mxu0
  %v1762 = vadd.f32 %v1206, %v1761
  %v1763 = vpop.f32.mrb[0].mxu0
  %1764 = vmatprep.mubr.f32.mxu0 0.0
  %1765 = vmatmul.mubr.f32.gmra.mrb[0].mxu0 %v1389
  %v1766 = vpop.f32.mrb[0].mxu0
  %v1767 = vadd.f32 %v1206, %v1766
  %v1768 = vpop.f32.mrb[0].mxu0
  %1769 = vmatprep.mubr.f32.mxu0 0.0
  %1770 = vmatmul.mubr.f32.gmra.mrb[0].mxu0 %v1392
  %v1771 = vpop.f32.mrb[0].mxu0
  %v1772 = vadd.f32 %v1206, %v1771
  %v1773 = vpop.f32.mrb[0].mxu0
  %1774 = vmatprep.mubr.f32.mxu0 0.0
  %1775 = vmatmul.mubr.f32.gmra.mrb[0].mxu0 %v1395
  %v1776 = vpop.f32.mrb[0].mxu0
  %v1777 = vadd.f32 %v1206, %v1776
  %v1778 = vpop.f32.mrb[0].mxu0
  %1779 = vmatprep.mubr.f32.mxu0 0.0
  %1780 = vmatmul.mubr.f32.gmra.mrb[0].mxu0 %v1398
  %v1781 = vpop.f32.mrb[0].mxu0
  %v1782 = vadd.f32 %v1206, %v1781
  %v1783 = vpop.f32.mrb[0].mxu0
  %1784 = vdwg.mxu0
  %v1785 = vmul.f32 %v1467, 0.5
  %v1786 = vmul.f32 %v1472, 0.5
  %v1787 = vmul.f32 %v1477, 0.5
  %v1788 = vmul.f32 %v1482, 0.5
  %v1789 = vmul.f32 %v1487, 0.5
  %v1790 = vmul.f32 %v1492, 0.5
  %v1791 = vmul.f32 %v1497, 0.5
  %v1792 = vmul.f32 %v1502, 0.5
  %v1793 = vmul.f32 %v1507, 0.5
  %v1794 = vmul.f32 %v1512, 0.5
  %v1795 = vmul.f32 %v1517, 0.5
  %v1796 = vmul.f32 %v1522, 0.5
  %v1797 = vmul.f32 %v1527, 0.5
  %v1798 = vmul.f32 %v1532, 0.5
  %v1799 = vmul.f32 %v1537, 0.5
  %v1800 = vmul.f32 %v1542, 0.5
  %v1801 = vmul.f32 %v1547, 0.5
  %v1802 = vmul.f32 %v1552, 0.5
  %v1803 = vmul.f32 %v1557, 0.5
  %v1804 = vmul.f32 %v1562, 0.5
  %v1805 = vmul.f32 %v1567, 0.5
  %v1806 = vmul.f32 %v1572, 0.5
  %v1807 = vmul.f32 %v1577, 0.5
  %v1808 = vmul.f32 %v1582, 0.5
  %v1809 = vmul.f32 %v1587, 0.5
  %v1810 = vmul.f32 %v1592, 0.5
  %v1811 = vmul.f32 %v1597, 0.5
  %v1812 = vmul.f32 %v1602, 0.5
  %v1813 = vmul.f32 %v1607, 0.5
  %v1814 = vmul.f32 %v1612, 0.5
  %v1815 = vmul.f32 %v1617, 0.5
  %v1816 = vmul.f32 %v1622, 0.5
  %v1817 = vmul.f32 %v1627, 0.5
  %v1818 = vmul.f32 %v1632, 0.5
  %v1819 = vmul.f32 %v1637, 0.5
  %v1820 = vmul.f32 %v1642, 0.5
  %v1821 = vmul.f32 %v1647, 0.5
  %v1822 = vmul.f32 %v1652, 0.5
  %v1823 = vmul.f32 %v1657, 0.5
  %v1824 = vmul.f32 %v1662, 0.5
  %v1825 = vmul.f32 %v1667, 0.5
  %v1826 = vmul.f32 %v1672, 0.5
  %v1827 = vmul.f32 %v1677, 0.5
  %v1828 = vmul.f32 %v1682, 0.5
  %v1829 = vmul.f32 %v1687, 0.5
  %v1830 = vmul.f32 %v1692, 0.5
  %v1831 = vmul.f32 %v1697, 0.5
  %v1832 = vmul.f32 %v1702, 0.5
  %v1833 = vmul.f32 %v1707, 0.5
  %v1834 = vmul.f32 %v1712, 0.5
  %v1835 = vmul.f32 %v1717, 0.5
  %v1836 = vmul.f32 %v1722, 0.5
  %v1837 = vmul.f32 %v1727, 0.5
  %v1838 = vmul.f32 %v1732, 0.5
  %v1839 = vmul.f32 %v1737, 0.5
  %v1840 = vmul.f32 %v1742, 0.5
  %v1841 = vmul.f32 %v1747, 0.5
  %v1842 = vmul.f32 %v1752, 0.5
  %v1843 = vmul.f32 %v1757, 0.5
  %v1844 = vmul.f32 %v1762, 0.5
  %v1845 = vmul.f32 %v1767, 0.5
  %v1846 = vmul.f32 %v1772, 0.5
  %v1847 = vmul.f32 %v1777, 0.5
  %v1848 = vmul.f32 %v1782, 0.5
  %v1849 = vmul.f32 %v1467, 0.044715
  %v1850 = vmul.f32 %v1472, 0.044715
  %v1851 = vmul.f32 %v1477, 0.044715
  %v1852 = vmul.f32 %v1482, 0.044715
  %v1853 = vmul.f32 %v1487, 0.044715
  %v1854 = vmul.f32 %v1492, 0.044715
  %v1855 = vmul.f32 %v1497, 0.044715
  %v1856 = vmul.f32 %v1502, 0.044715
  %v1857 = vmul.f32 %v1507, 0.044715
  %v1858 = vmul.f32 %v1512, 0.044715
  %v1859 = vmul.f32 %v1517, 0.044715
  %v1860 = vmul.f32 %v1522, 0.044715
  %v1861 = vmul.f32 %v1527, 0.044715
  %v1862 = vmul.f32 %v1532, 0.044715
  %v1863 = vmul.f32 %v1537, 0.044715
  %v1864 = vmul.f32 %v1542, 0.044715
  %v1865 = vmul.f32 %v1547, 0.044715
  %v1866 = vmul.f32 %v1552, 0.044715
  %v1867 = vmul.f32 %v1557, 0.044715
  %v1868 = vmul.f32 %v1562, 0.044715
  %v1869 = vmul.f32 %v1567, 0.044715
  %v1870 = vmul.f32 %v1572, 0.044715
  %v1871 = vmul.f32 %v1577, 0.044715
  %v1872 = vmul.f32 %v1582, 0.044715
  %v1873 = vmul.f32 %v1587, 0.044715
  %v1874 = vmul.f32 %v1592, 0.044715
  %v1875 = vmul.f32 %v1597, 0.044715
  %v1876 = vmul.f32 %v1602, 0.044715
  %v1877 = vmul.f32 %v1607, 0.044715
  %v1878 = vmul.f32 %v1612, 0.044715
  %v1879 = vmul.f32 %v1617, 0.044715
  %v1880 = vmul.f32 %v1622, 0.044715
  %v1881 = vmul.f32 %v1627, 0.044715
  %v1882 = vmul.f32 %v1632, 0.044715
  %v1883 = vmul.f32 %v1637, 0.044715
  %v1884 = vmul.f32 %v1642, 0.044715
  %v1885 = vmul.f32 %v1647, 0.044715
  %v1886 = vmul.f32 %v1652, 0.044715
  %v1887 = vmul.f32 %v1657, 0.044715
  %v1888 = vmul.f32 %v1662, 0.044715
  %v1889 = vmul.f32 %v1667, 0.044715
  %v1890 = vmul.f32 %v1672, 0.044715
  %v1891 = vmul.f32 %v1677, 0.044715
  %v1892 = vmul.f32 %v1682, 0.044715
  %v1893 = vmul.f32 %v1687, 0.044715
  %v1894 = vmul.f32 %v1692, 0.044715
  %v1895 = vmul.f32 %v1697, 0.044715
  %v1896 = vmul.f32 %v1702, 0.044715
  %v1897 = vmul.f32 %v1707, 0.044715
  %v1898 = vmul.f32 %v1712, 0.044715
  %v1899 = vmul.f32 %v1717, 0.044715
  %v1900 = vmul.f32 %v1722, 0.044715
  %v1901 = vmul.f32 %v1727, 0.044715
  %v1902 = vmul.f32 %v1732, 0.044715
  %v1903 = vmul.f32 %v1737, 0.044715
  %v1904 = vmul.f32 %v1742, 0.044715
  %v1905 = vmul.f32 %v1747, 0.044715
  %v1906 = vmul.f32 %v1752, 0.044715
  %v1907 = vmul.f32 %v1757, 0.044715
  %v1908 = vmul.f32 %v1762, 0.044715
  %v1909 = vmul.f32 %v1767, 0.044715
  %v1910 = vmul.f32 %v1772, 0.044715
  %v1911 = vmul.f32 %v1777, 0.044715
  %v1912 = vmul.f32 %v1782, 0.044715
  %v1913 = vmul.f32 %v1849, %v1467
  %v1914 = vmul.f32 %v1850, %v1472
  %v1915 = vmul.f32 %v1851, %v1477
  %v1916 = vmul.f32 %v1852, %v1482
  %v1917 = vmul.f32 %v1853, %v1487
  %v1918 = vmul.f32 %v1854, %v1492
  %v1919 = vmul.f32 %v1855, %v1497
  %v1920 = vmul.f32 %v1856, %v1502
  %v1921 = vmul.f32 %v1857, %v1507
  %v1922 = vmul.f32 %v1858, %v1512
  %v1923 = vmul.f32 %v1859, %v1517
  %v1924 = vmul.f32 %v1860, %v1522
  %v1925 = vmul.f32 %v1861, %v1527
  %v1926 = vmul.f32 %v1862, %v1532
  %v1927 = vmul.f32 %v1863, %v1537
  %v1928 = vmul.f32 %v1864, %v1542
  %v1929 = vmul.f32 %v1865, %v1547
  %v1930 = vmul.f32 %v1866, %v1552
  %v1931 = vmul.f32 %v1867, %v1557
  %v1932 = vmul.f32 %v1868, %v1562
  %v1933 = vmul.f32 %v1869, %v1567
  %v1934 = vmul.f32 %v1870, %v1572
  %v1935 = vmul.f32 %v1871, %v1577
  %v1936 = vmul.f32 %v1872, %v1582
  %v1937 = vmul.f32 %v1873, %v1587
  %v1938 = vmul.f32 %v1874, %v1592
  %v1939 = vmul.f32 %v1875, %v1597
  %v1940 = vmul.f32 %v1876, %v1602
  %v1941 = vmul.f32 %v1877, %v1607
  %v1942 = vmul.f32 %v1878, %v1612
  %v1943 = vmul.f32 %v1879, %v1617
  %v1944 = vmul.f32 %v1880, %v1622
  %v1945 = vmul.f32 %v1881, %v1627
  %v1946 = vmul.f32 %v1882, %v1632
  %v1947 = vmul.f32 %v1883, %v1637
  %v1948 = vmul.f32 %v1884, %v1642
  %v1949 = vmul.f32 %v1885, %v1647
  %v1950 = vmul.f32 %v1886, %v1652
  %v1951 = vmul.f32 %v1887, %v1657
  %v1952 = vmul.f32 %v1888, %v1662
  %v1953 = vmul.f32 %v1889, %v1667
  %v1954 = vmul.f32 %v1890, %v1672
  %v1955 = vmul.f32 %v1891, %v1677
  %v1956 = vmul.f32 %v1892, %v1682
  %v1957 = vmul.f32 %v1893, %v1687
  %v1958 = vmul.f32 %v1894, %v1692
  %v1959 = vmul.f32 %v1895, %v1697
  %v1960 = vmul.f32 %v1896, %v1702
  %v1961 = vmul.f32 %v1897, %v1707
  %v1962 = vmul.f32 %v1898, %v1712
  %v1963 = vmul.f32 %v1899, %v1717
  %v1964 = vmul.f32 %v1900, %v1722
  %v1965 = vmul.f32 %v1901, %v1727
  %v1966 = vmul.f32 %v1902, %v1732
  %v1967 = vmul.f32 %v1903, %v1737
  %v1968 = vmul.f32 %v1904, %v1742
  %v1969 = vmul.f32 %v1905, %v1747
  %v1970 = vmul.f32 %v1906, %v1752
  %v1971 = vmul.f32 %v1907, %v1757
  %v1972 = vmul.f32 %v1908, %v1762
  %v1973 = vmul.f32 %v1909, %v1767
  %v1974 = vmul.f32 %v1910, %v1772
  %v1975 = vmul.f32 %v1911, %v1777
  %v1976 = vmul.f32 %v1912, %v1782
  %v1977 = vmul.f32 %v1913, %v1467
  %v1978 = vmul.f32 %v1914, %v1472
  %v1979 = vmul.f32 %v1915, %v1477
  %v1980 = vmul.f32 %v1916, %v1482
  %v1981 = vmul.f32 %v1917, %v1487
  %v1982 = vmul.f32 %v1918, %v1492
  %v1983 = vmul.f32 %v1919, %v1497
  %v1984 = vmul.f32 %v1920, %v1502
  %v1985 = vmul.f32 %v1921, %v1507
  %v1986 = vmul.f32 %v1922, %v1512
  %v1987 = vmul.f32 %v1923, %v1517
  %v1988 = vmul.f32 %v1924, %v1522
  %v1989 = vmul.f32 %v1925, %v1527
  %v1990 = vmul.f32 %v1926, %v1532
  %v1991 = vmul.f32 %v1927, %v1537
  %v1992 = vmul.f32 %v1928, %v1542
  %v1993 = vmul.f32 %v1929, %v1547
  %v1994 = vmul.f32 %v1930, %v1552
  %v1995 = vmul.f32 %v1931, %v1557
  %v1996 = vmul.f32 %v1932, %v1562
  %v1997 = vmul.f32 %v1933, %v1567
  %v1998 = vmul.f32 %v1934, %v1572
  %v1999 = vmul.f32 %v1935, %v1577
  %v2000 = vmul.f32 %v1936, %v1582
  %v2001 = vmul.f32 %v1937, %v1587
  %v2002 = vmul.f32 %v1938, %v1592
  %v2003 = vmul.f32 %v1939, %v1597
  %v2004 = vmul.f32 %v1940, %v1602
  %v2005 = vmul.f32 %v1941, %v1607
  %v2006 = vmul.f32 %v1942, %v1612
  %v2007 = vmul.f32 %v1943, %v1617
  %v2008 = vmul.f32 %v1944, %v1622
  %v2009 = vmul.f32 %v1945, %v1627
  %v2010 = vmul.f32 %v1946, %v1632
  %v2011 = vmul.f32 %v1947, %v1637
  %v2012 = vmul.f32 %v1948, %v1642
  %v2013 = vmul.f32 %v1949, %v1647
  %v2014 = vmul.f32 %v1950, %v1652
  %v2015 = vmul.f32 %v1951, %v1657
  %v2016 = vmul.f32 %v1952, %v1662
  %v2017 = vmul.f32 %v1953, %v1667
  %v2018 = vmul.f32 %v1954, %v1672
  %v2019 = vmul.f32 %v1955, %v1677
  %v2020 = vmul.f32 %v1956, %v1682
  %v2021 = vmul.f32 %v1957, %v1687
  %v2022 = vmul.f32 %v1958, %v1692
  %v2023 = vmul.f32 %v1959, %v1697
  %v2024 = vmul.f32 %v1960, %v1702
  %v2025 = vmul.f32 %v1961, %v1707
  %v2026 = vmul.f32 %v1962, %v1712
  %v2027 = vmul.f32 %v1963, %v1717
  %v2028 = vmul.f32 %v1964, %v1722
  %v2029 = vmul.f32 %v1965, %v1727
  %v2030 = vmul.f32 %v1966, %v1732
  %v2031 = vmul.f32 %v1967, %v1737
  %v2032 = vmul.f32 %v1968, %v1742
  %v2033 = vmul.f32 %v1969, %v1747
  %v2034 = vmul.f32 %v1970, %v1752
  %v2035 = vmul.f32 %v1971, %v1757
  %v2036 = vmul.f32 %v1972, %v1762
  %v2037 = vmul.f32 %v1973, %v1767
  %v2038 = vmul.f32 %v1974, %v1772
  %v2039 = vmul.f32 %v1975, %v1777
  %v2040 = vmul.f32 %v1976, %v1782
  %v2041 = vadd.f32 %v1467, %v1977
  %v2042 = vadd.f32 %v1472, %v1978
  %v2043 = vadd.f32 %v1477, %v1979
  %v2044 = vadd.f32 %v1482, %v1980
  %v2045 = vadd.f32 %v1487, %v1981
  %v2046 = vadd.f32 %v1492, %v1982
  %v2047 = vadd.f32 %v1497, %v1983
  %v2048 = vadd.f32 %v1502, %v1984
  %v2049 = vadd.f32 %v1507, %v1985
  %v2050 = vadd.f32 %v1512, %v1986
  %v2051 = vadd.f32 %v1517, %v1987
  %v2052 = vadd.f32 %v1522, %v1988
  %v2053 = vadd.f32 %v1527, %v1989
  %v2054 = vadd.f32 %v1532, %v1990
  %v2055 = vadd.f32 %v1537, %v1991
  %v2056 = vadd.f32 %v1542, %v1992
  %v2057 = vadd.f32 %v1547, %v1993
  %v2058 = vadd.f32 %v1552, %v1994
  %v2059 = vadd.f32 %v1557, %v1995
  %v2060 = vadd.f32 %v1562, %v1996
  %v2061 = vadd.f32 %v1567, %v1997
  %v2062 = vadd.f32 %v1572, %v1998
  %v2063 = vadd.f32 %v1577, %v1999
  %v2064 = vadd.f32 %v1582, %v2000
  %v2065 = vadd.f32 %v1587, %v2001
  %v2066 = vadd.f32 %v1592, %v2002
  %v2067 = vadd.f32 %v1597, %v2003
  %v2068 = vadd.f32 %v1602, %v2004
  %v2069 = vadd.f32 %v1607, %v2005
  %v2070 = vadd.f32 %v1612, %v2006
  %v2071 = vadd.f32 %v1617, %v2007
  %v2072 = vadd.f32 %v1622, %v2008
  %v2073 = vadd.f32 %v1627, %v2009
  %v2074 = vadd.f32 %v1632, %v2010
  %v2075 = vadd.f32 %v1637, %v2011
  %v2076 = vadd.f32 %v1642, %v2012
  %v2077 = vadd.f32 %v1647, %v2013
  %v2078 = vadd.f32 %v1652, %v2014
  %v2079 = vadd.f32 %v1657, %v2015
  %v2080 = vadd.f32 %v1662, %v2016
  %v2081 = vadd.f32 %v1667, %v2017
  %v2082 = vadd.f32 %v1672, %v2018
  %v2083 = vadd.f32 %v1677, %v2019
  %v2084 = vadd.f32 %v1682, %v2020
  %v2085 = vadd.f32 %v1687, %v2021
  %v2086 = vadd.f32 %v1692, %v2022
  %v2087 = vadd.f32 %v1697, %v2023
  %v2088 = vadd.f32 %v1702, %v2024
  %v2089 = vadd.f32 %v1707, %v2025
  %v2090 = vadd.f32 %v1712, %v2026
  %v2091 = vadd.f32 %v1717, %v2027
  %v2092 = vadd.f32 %v1722, %v2028
  %v2093 = vadd.f32 %v1727, %v2029
  %v2094 = vadd.f32 %v1732, %v2030
  %v2095 = vadd.f32 %v1737, %v2031
  %v2096 = vadd.f32 %v1742, %v2032
  %v2097 = vadd.f32 %v1747, %v2033
  %v2098 = vadd.f32 %v1752, %v2034
  %v2099 = vadd.f32 %v1757, %v2035
  %v2100 = vadd.f32 %v1762, %v2036
  %v2101 = vadd.f32 %v1767, %v2037
  %v2102 = vadd.f32 %v1772, %v2038
  %v2103 = vadd.f32 %v1777, %v2039
  %v2104 = vadd.f32 %v1782, %v2040
  %v2105 = vmul.f32 %v2041, 0.7978846
  %v2106 = vmul.f32 %v2042, 0.7978846
  %v2107 = vmul.f32 %v2043, 0.7978846
  %v2108 = vmul.f32 %v2044, 0.7978846
  %v2109 = vmul.f32 %v2045, 0.7978846
  %v2110 = vmul.f32 %v2046, 0.7978846
  %v2111 = vmul.f32 %v2047, 0.7978846
  %v2112 = vmul.f32 %v2048, 0.7978846
  %v2113 = vmul.f32 %v2049, 0.7978846
  %v2114 = vmul.f32 %v2050, 0.7978846
  %v2115 = vmul.f32 %v2051, 0.7978846
  %v2116 = vmul.f32 %v2052, 0.7978846
  %v2117 = vmul.f32 %v2053, 0.7978846
  %v2118 = vmul.f32 %v2054, 0.7978846
  %v2119 = vmul.f32 %v2055, 0.7978846
  %v2120 = vmul.f32 %v2056, 0.7978846
  %v2121 = vmul.f32 %v2057, 0.7978846
  %v2122 = vmul.f32 %v2058, 0.7978846
  %v2123 = vmul.f32 %v2059, 0.7978846
  %v2124 = vmul.f32 %v2060, 0.7978846
  %v2125 = vmul.f32 %v2061, 0.7978846
  %v2126 = vmul.f32 %v2062, 0.7978846
  %v2127 = vmul.f32 %v2063, 0.7978846
  %v2128 = vmul.f32 %v2064, 0.7978846
  %v2129 = vmul.f32 %v2065, 0.7978846
  %v2130 = vmul.f32 %v2066, 0.7978846
  %v2131 = vmul.f32 %v2067, 0.7978846
  %v2132 = vmul.f32 %v2068, 0.7978846
  %v2133 = vmul.f32 %v2069, 0.7978846
  %v2134 = vmul.f32 %v2070, 0.7978846
  %v2135 = vmul.f32 %v2071, 0.7978846
  %v2136 = vmul.f32 %v2072, 0.7978846
  %v2137 = vmul.f32 %v2073, 0.7978846
  %v2138 = vmul.f32 %v2074, 0.7978846
  %v2139 = vmul.f32 %v2075, 0.7978846
  %v2140 = vmul.f32 %v2076, 0.7978846
  %v2141 = vmul.f32 %v2077, 0.7978846
  %v2142 = vmul.f32 %v2078, 0.7978846
  %v2143 = vmul.f32 %v2079, 0.7978846
  %v2144 = vmul.f32 %v2080, 0.7978846
  %v2145 = vmul.f32 %v2081, 0.7978846
  %v2146 = vmul.f32 %v2082, 0.7978846
  %v2147 = vmul.f32 %v2083, 0.7978846
  %v2148 = vmul.f32 %v2084, 0.7978846
  %v2149 = vmul.f32 %v2085, 0.7978846
  %v2150 = vmul.f32 %v2086, 0.7978846
  %v2151 = vmul.f32 %v2087, 0.7978846
  %v2152 = vmul.f32 %v2088, 0.7978846
  %v2153 = vmul.f32 %v2089, 0.7978846
  %v2154 = vmul.f32 %v2090, 0.7978846
  %v2155 = vmul.f32 %v2091, 0.7978846
  %v2156 = vmul.f32 %v2092, 0.7978846
  %v2157 = vmul.f32 %v2093, 0.7978846
  %v2158 = vmul.f32 %v2094, 0.7978846
  %v2159 = vmul.f32 %v2095, 0.7978846
  %v2160 = vmul.f32 %v2096, 0.7978846
  %v2161 = vmul.f32 %v2097, 0.7978846
  %v2162 = vmul.f32 %v2098, 0.7978846
  %v2163 = vmul.f32 %v2099, 0.7978846
  %v2164 = vmul.f32 %v2100, 0.7978846
  %v2165 = vmul.f32 %v2101, 0.7978846
  %v2166 = vmul.f32 %v2102, 0.7978846
  %v2167 = vmul.f32 %v2103, 0.7978846
  %v2168 = vmul.f32 %v2104, 0.7978846
  %v2169 = vtanh.pop %v2105
  %v2170 = vtanh.pop %v2106
  %v2171 = vtanh.pop %v2107
  %v2172 = vtanh.pop %v2108
  %v2173 = vtanh.pop %v2109
  %v2174 = vtanh.pop %v2110
  %v2175 = vtanh.pop %v2111
  %v2176 = vtanh.pop %v2112
  %v2177 = vtanh.pop %v2113
  %v2178 = vtanh.pop %v2114
  %v2179 = vtanh.pop %v2115
  %v2180 = vtanh.pop %v2116
  %v2181 = vtanh.pop %v2117
  %v2182 = vtanh.pop %v2118
  %v2183 = vtanh.pop %v2119
  %v2184 = vtanh.pop %v2120
  %v2185 = vtanh.pop %v2121
  %v2186 = vtanh.pop %v2122
  %v2187 = vtanh.pop %v2123
  %v2188 = vtanh.pop %v2124
  %v2189 = vtanh.pop %v2125
  %v2190 = vtanh.pop %v2126
  %v2191 = vtanh.pop %v2127
  %v2192 = vtanh.pop %v2128
  %v2193 = vtanh.pop %v2129
  %v2194 = vtanh.pop %v2130
  %v2195 = vtanh.pop %v2131
  %v2196 = vtanh.pop %v2132
  %v2197 = vtanh.pop %v2133
  %v2198 = vtanh.pop %v2134
  %v2199 = vtanh.pop %v2135
  %v2200 = vtanh.pop %v2136
  %v2201 = vtanh.pop %v2137
  %v2202 = vtanh.pop %v2138
  %v2203 = vtanh.pop %v2139
  %v2204 = vtanh.pop %v2140
  %v2205 = vtanh.pop %v2141
  %v2206 = vtanh.pop %v2142
  %v2207 = vtanh.pop %v2143
  %v2208 = vtanh.pop %v2144
  %v2209 = vtanh.pop %v2145
  %v2210 = vtanh.pop %v2146
  %v2211 = vtanh.pop %v2147
  %v2212 = vtanh.pop %v2148
  %v2213 = vtanh.pop %v2149
  %v2214 = vtanh.pop %v2150
  %v2215 = vtanh.pop %v2151
  %v2216 = vtanh.pop %v2152
  %v2217 = vtanh.pop %v2153
  %v2218 = vtanh.pop %v2154
  %v2219 = vtanh.pop %v2155
  %v2220 = vtanh.pop %v2156
  %v2221 = vtanh.pop %v2157
  %v2222 = vtanh.pop %v2158
  %v2223 = vtanh.pop %v2159
  %v2224 = vtanh.pop %v2160
  %v2225 = vtanh.pop %v2161
  %v2226 = vtanh.pop %v2162
  %v2227 = vtanh.pop %v2163
  %v2228 = vtanh.pop %v2164
  %v2229 = vtanh.pop %v2165
  %v2230 = vtanh.pop %v2166
  %v2231 = vtanh.pop %v2167
  %v2232 = vtanh.pop %v2168
  %v2233 = vadd.f32 %v2169, 1.0
  %v2234 = vadd.f32 %v2170, 1.0
  %v2235 = vadd.f32 %v2171, 1.0
  %v2236 = vadd.f32 %v2172, 1.0
  %v2237 = vadd.f32 %v2173, 1.0
  %v2238 = vadd.f32 %v2174, 1.0
  %v2239 = vadd.f32 %v2175, 1.0
  %v2240 = vadd.f32 %v2176, 1.0
  %v2241 = vadd.f32 %v2177, 1.0
  %v2242 = vadd.f32 %v2178, 1.0
  %v2243 = vadd.f32 %v2179, 1.0
  %v2244 = vadd.f32 %v2180, 1.0
  %v2245 = vadd.f32 %v2181, 1.0
  %v2246 = vadd.f32 %v2182, 1.0
  %v2247 = vadd.f32 %v2183, 1.0
  %v2248 = vadd.f32 %v2184, 1.0
  %v2249 = vadd.f32 %v2185, 1.0
  %v2250 = vadd.f32 %v2186, 1.0
  %v2251 = vadd.f32 %v2187, 1.0
  %v2252 = vadd.f32 %v2188, 1.0
  %v2253 = vadd.f32 %v2189, 1.0
  %v2254 = vadd.f32 %v2190, 1.0
  %v2255 = vadd.f32 %v2191, 1.0
  %v2256 = vadd.f32 %v2192, 1.0
  %v2257 = vadd.f32 %v2193, 1.0
  %v2258 = vadd.f32 %v2194, 1.0
  %v2259 = vadd.f32 %v2195, 1.0
  %v2260 = vadd.f32 %v2196, 1.0
  %v2261 = vadd.f32 %v2197, 1.0
  %v2262 = vadd.f32 %v2198, 1.0
  %v2263 = vadd.f32 %v2199, 1.0
  %v2264 = vadd.f32 %v2200, 1.0
  %v2265 = vadd.f32 %v2201, 1.0
  %v2266 = vadd.f32 %v2202, 1.0
  %v2267 = vadd.f32 %v2203, 1.0
  %v2268 = vadd.f32 %v2204, 1.0
  %v2269 = vadd.f32 %v2205, 1.0
  %v2270 = vadd.f32 %v2206, 1.0
  %v2271 = vadd.f32 %v2207, 1.0
  %v2272 = vadd.f32 %v2208, 1.0
  %v2273 = vadd.f32 %v2209, 1.0
  %v2274 = vadd.f32 %v2210, 1.0
  %v2275 = vadd.f32 %v2211, 1.0
  %v2276 = vadd.f32 %v2212, 1.0
  %v2277 = vadd.f32 %v2213, 1.0
  %v2278 = vadd.f32 %v2214, 1.0
  %v2279 = vadd.f32 %v2215, 1.0
  %v2280 = vadd.f32 %v2216, 1.0
  %v2281 = vadd.f32 %v2217, 1.0
  %v2282 = vadd.f32 %v2218, 1.0
  %v2283 = vadd.f32 %v2219, 1.0
  %v2284 = vadd.f32 %v2220, 1.0
  %v2285 = vadd.f32 %v2221, 1.0
  %v2286 = vadd.f32 %v2222, 1.0
  %v2287 = vadd.f32 %v2223, 1.0
  %v2288 = vadd.f32 %v2224, 1.0
  %v2289 = vadd.f32 %v2225, 1.0
  %v2290 = vadd.f32 %v2226, 1.0
  %v2291 = vadd.f32 %v2227, 1.0
  %v2292 = vadd.f32 %v2228, 1.0
  %v2293 = vadd.f32 %v2229, 1.0
  %v2294 = vadd.f32 %v2230, 1.0
  %v2295 = vadd.f32 %v2231, 1.0
  %v2296 = vadd.f32 %v2232, 1.0
  %v2297 = vmul.f32 %v1785, %v2233
  %v2298 = vmul.f32 %v1786, %v2234
  %v2299 = vmul.f32 %v1787, %v2235
  %v2300 = vmul.f32 %v1788, %v2236
  %v2301 = vmul.f32 %v1789, %v2237
  %v2302 = vmul.f32 %v1790, %v2238
  %v2303 = vmul.f32 %v1791, %v2239
  %v2304 = vmul.f32 %v1792, %v2240
  %v2305 = vmul.f32 %v1793, %v2241
  %v2306 = vmul.f32 %v1794, %v2242
  %v2307 = vmul.f32 %v1795, %v2243
  %v2308 = vmul.f32 %v1796, %v2244
  %v2309 = vmul.f32 %v1797, %v2245
  %v2310 = vmul.f32 %v1798, %v2246
  %v2311 = vmul.f32 %v1799, %v2247
  %v2312 = vmul.f32 %v1800, %v2248
  %v2313 = vmul.f32 %v1801, %v2249
  %v2314 = vmul.f32 %v1802, %v2250
  %v2315 = vmul.f32 %v1803, %v2251
  %v2316 = vmul.f32 %v1804, %v2252
  %v2317 = vmul.f32 %v1805, %v2253
  %v2318 = vmul.f32 %v1806, %v2254
  %v2319 = vmul.f32 %v1807, %v2255
  %v2320 = vmul.f32 %v1808, %v2256
  %v2321 = vmul.f32 %v1809, %v2257
  %v2322 = vmul.f32 %v1810, %v2258
  %v2323 = vmul.f32 %v1811, %v2259
  %v2324 = vmul.f32 %v1812, %v2260
  %v2325 = vmul.f32 %v1813, %v2261
  %v2326 = vmul.f32 %v1814, %v2262
  %v2327 = vmul.f32 %v1815, %v2263
  %v2328 = vmul.f32 %v1816, %v2264
  %v2329 = vmul.f32 %v1817, %v2265
  %v2330 = vmul.f32 %v1818, %v2266
  %v2331 = vmul.f32 %v1819, %v2267
  %v2332 = vmul.f32 %v1820, %v2268
  %v2333 = vmul.f32 %v1821, %v2269
  %v2334 = vmul.f32 %v1822, %v2270
  %v2335 = vmul.f32 %v1823, %v2271
  %v2336 = vmul.f32 %v1824, %v2272
  %v2337 = vmul.f32 %v1825, %v2273
  %v2338 = vmul.f32 %v1826, %v2274
  %v2339 = vmul.f32 %v1827, %v2275
  %v2340 = vmul.f32 %v1828, %v2276
  %v2341 = vmul.f32 %v1829, %v2277
  %v2342 = vmul.f32 %v1830, %v2278
  %v2343 = vmul.f32 %v1831, %v2279
  %v2344 = vmul.f32 %v1832, %v2280
  %v2345 = vmul.f32 %v1833, %v2281
  %v2346 = vmul.f32 %v1834, %v2282
  %v2347 = vmul.f32 %v1835, %v2283
  %v2348 = vmul.f32 %v1836, %v2284
  %v2349 = vmul.f32 %v1837, %v2285
  %v2350 = vmul.f32 %v1838, %v2286
  %v2351 = vmul.f32 %v1839, %v2287
  %v2352 = vmul.f32 %v1840, %v2288
  %v2353 = vmul.f32 %v1841, %v2289
  %v2354 = vmul.f32 %v1842, %v2290
  %v2355 = vmul.f32 %v1843, %v2291
  %v2356 = vmul.f32 %v1844, %v2292
  %v2357 = vmul.f32 %v1845, %v2293
  %v2358 = vmul.f32 %v1846, %v2294
  %v2359 = vmul.f32 %v1847, %v2295
  %v2360 = vmul.f32 %v1848, %v2296
  %v2361 = vld [vmem:[%s6] sm:$0xff]
  %v2362 = vld [vmem:[%s6 + $0x8] sm:$0xff]
  %v2363 = vld [vmem:[%s6 + $0x10] sm:$0xff]
  %v2364 = vld [vmem:[%s6 + $0x18] sm:$0xff]
  %v2365 = vld [vmem:[%s6 + $0x20] sm:$0xff]
  %v2366 = vld [vmem:[%s6 + $0x28] sm:$0xff]
  %v2367 = vld [vmem:[%s6 + $0x30] sm:$0xff]
  %v2368 = vld [vmem:[%s6 + $0x38] sm:$0xff]
  %v2369 = vld [vmem:[%s6 + $0x40] sm:$0xff]
  %v2370 = vld [vmem:[%s6 + $0x48] sm:$0xff]
  %v2371 = vld [vmem:[%s6 + $0x50] sm:$0xff]
  %v2372 = vld [vmem:[%s6 + $0x58] sm:$0xff]
  %v2373 = vld [vmem:[%s6 + $0x60] sm:$0xff]
  %v2374 = vld [vmem:[%s6 + $0x68] sm:$0xff]
  %v2375 = vld [vmem:[%s6 + $0x70] sm:$0xff]
  %v2376 = vld [vmem:[%s6 + $0x78] sm:$0xff]
  %v2377 = vld [vmem:[%s7] sm:$0x1]
  %v2379 = vlaneseq
  %v2380 = vshrl.u32 %v2379, 7
  %v2381 = vsub.s32 0, %v2380
  %v2382 = vrot.slane %v2377, %v2381
  %2384 = vmatprep.subr.mxu0 0.0
  %2385 = vmatpush1.msra.mxu0 %v2361
  %2386 = vmatprep.subr.mxu0 0.0
  %2387 = vmatpush1.msra.mxu0 %v2362
  %2388 = vmatprep.subr.mxu0 0.0
  %2389 = vmatpush1.msra.mxu0 %v2363
  %2390 = vmatprep.subr.mxu0 0.0
  %2391 = vmatpush1.msra.mxu0 %v2364
  %2392 = vmatprep.subr.mxu0 0.0
  %2393 = vmatpush1.msra.mxu0 %v2365
  %2394 = vmatprep.subr.mxu0 0.0
  %2395 = vmatpush1.msra.mxu0 %v2366
  %2396 = vmatprep.subr.mxu0 0.0
  %2397 = vmatpush1.msra.mxu0 %v2367
  %2398 = vmatprep.subr.mxu0 0.0
  %2399 = vmatpush1.msra.mxu0 %v2368
  %2400 = vmatprep.subr.mxu0 0.0
  %2401 = vmatpush1.msra.mxu0 %v2369
  %2402 = vmatprep.subr.mxu0 0.0
  %2403 = vmatpush1.msra.mxu0 %v2370
  %2404 = vmatprep.subr.mxu0 0.0
  %2405 = vmatpush1.msra.mxu0 %v2371
  %2406 = vmatprep.subr.mxu0 0.0
  %2407 = vmatpush1.msra.mxu0 %v2372
  %2408 = vmatprep.subr.mxu0 0.0
  %2409 = vmatpush1.msra.mxu0 %v2373
  %2410 = vmatprep.subr.mxu0 0.0
  %2411 = vmatpush1.msra.mxu0 %v2374
  %2412 = vmatprep.subr.mxu0 0.0
  %2413 = vmatpush1.msra.mxu0 %v2375
  %2414 = vmatprep.subr.mxu0 0.0
  %2415 = vmatpush1.msra.mxu0 %v2376
  %2416 = vmatprep.subr.mxu0 0.0
  %2417 = vmatpush1.msra.mxu0 0.0
  %2418 = vmatprep.subr.mxu0 0.0
  %2419 = vmatpush1.msra.mxu0 0.0
  %2420 = vmatprep.subr.mxu0 0.0
  %2421 = vmatpush1.msra.mxu0 0.0
  %2422 = vmatprep.subr.mxu0 0.0
  %2423 = vmatpush1.msra.mxu0 0.0
  %2424 = vmatprep.subr.mxu0 0.0
  %2425 = vmatpush1.msra.mxu0 0.0
  %2426 = vmatprep.subr.mxu0 0.0
  %2427 = vmatpush1.msra.mxu0 0.0
  %2428 = vmatprep.subr.mxu0 0.0
  %2429 = vmatpush1.msra.mxu0 0.0
  %2430 = vmatprep.subr.mxu0 0.0
  %2431 = vmatpush1.msra.mxu0 0.0
  %2432 = vmatprep.subr.mxu0 0.0
  %2433 = vmatpush1.msra.mxu0 0.0
  %2434 = vmatprep.subr.mxu0 0.0
  %2435 = vmatpush1.msra.mxu0 0.0
  %2436 = vmatprep.subr.mxu0 0.0
  %2437 = vmatpush1.msra.mxu0 0.0
  %2438 = vmatprep.subr.mxu0 0.0
  %2439 = vmatpush1.msra.mxu0 0.0
  %2440 = vmatprep.subr.mxu0 0.0
  %2441 = vmatpush1.msra.mxu0 0.0
  %2442 = vmatprep.subr.mxu0 0.0
  %2443 = vmatpush1.msra.mxu0 0.0
  %2444 = vmatprep.subr.mxu0 0.0
  %2445 = vmatpush1.msra.mxu0 0.0
  %2446 = vmatprep.subr.mxu0 0.0
  %2447 = vmatpush1.msra.mxu0 0.0
  %2448 = vmatprep.mubr.f32.mxu0 0.0
  %2449 = vmatmul.mubr.f32.gmra.mrb[0].mxu0 %v2297
  %v2450 = vpop.f32.mrb[0].mxu0
  %v2451 = vadd.f32 %v2382, %v2450
  %v2452 = vpop.f32.mrb[0].mxu0
  %2453 = vmatprep.mubr.f32.mxu0 0.0
  %2454 = vmatmul.mubr.f32.gmra.mrb[0].mxu0 %v2298
  %v2455 = vpop.f32.mrb[0].mxu0
  %v2456 = vadd.f32 %v2382, %v2455
  %v2457 = vpop.f32.mrb[0].mxu0
  %2458 = vmatprep.mubr.f32.mxu0 0.0
  %2459 = vmatmul.mubr.f32.gmra.mrb[0].mxu0 %v2299
  %v2460 = vpop.f32.mrb[0].mxu0
  %v2461 = vadd.f32 %v2382, %v2460
  %v2462 = vpop.f32.mrb[0].mxu0
  %2463 = vmatprep.mubr.f32.mxu0 0.0
  %2464 = vmatmul.mubr.f32.gmra.mrb[0].mxu0 %v2300
  %v2465 = vpop.f32.mrb[0].mxu0
  %v2466 = vadd.f32 %v2382, %v2465
  %v2467 = vpop.f32.mrb[0].mxu0
  %2468 = vmatprep.mubr.f32.mxu0 0.0
  %2469 = vmatmul.mubr.f32.gmra.mrb[0].mxu0 %v2301
  %v2470 = vpop.f32.mrb[0].mxu0
  %v2471 = vadd.f32 %v2382, %v2470
  %v2472 = vpop.f32.mrb[0].mxu0
  %2473 = vmatprep.mubr.f32.mxu0 0.0
  %2474 = vmatmul.mubr.f32.gmra.mrb[0].mxu0 %v2302
  %v2475 = vpop.f32.mrb[0].mxu0
  %v2476 = vadd.f32 %v2382, %v2475
  %v2477 = vpop.f32.mrb[0].mxu0
  %2478 = vmatprep.mubr.f32.mxu0 0.0
  %2479 = vmatmul.mubr.f32.gmra.mrb[0].mxu0 %v2303
  %v2480 = vpop.f32.mrb[0].mxu0
  %v2481 = vadd.f32 %v2382, %v2480
  %v2482 = vpop.f32.mrb[0].mxu0
  %2483 = vmatprep.mubr.f32.mxu0 0.0
  %2484 = vmatmul.mubr.f32.gmra.mrb[0].mxu0 %v2304
  %v2485 = vpop.f32.mrb[0].mxu0
  %v2486 = vadd.f32 %v2382, %v2485
  %v2487 = vpop.f32.mrb[0].mxu0
  %2488 = vmatprep.mubr.f32.mxu0 0.0
  %2489 = vmatmul.mubr.f32.gmra.mrb[0].mxu0 %v2305
  %v2490 = vpop.f32.mrb[0].mxu0
  %v2491 = vadd.f32 %v2382, %v2490
  %v2492 = vpop.f32.mrb[0].mxu0
  %2493 = vmatprep.mubr.f32.mxu0 0.0
  %2494 = vmatmul.mubr.f32.gmra.mrb[0].mxu0 %v2306
  %v2495 = vpop.f32.mrb[0].mxu0
  %v2496 = vadd.f32 %v2382, %v2495
  %v2497 = vpop.f32.mrb[0].mxu0
  %2498 = vmatprep.mubr.f32.mxu0 0.0
  %2499 = vmatmul.mubr.f32.gmra.mrb[0].mxu0 %v2307
  %v2500 = vpop.f32.mrb[0].mxu0
  %v2501 = vadd.f32 %v2382, %v2500
  %v2502 = vpop.f32.mrb[0].mxu0
  %2503 = vmatprep.mubr.f32.mxu0 0.0
  %2504 = vmatmul.mubr.f32.gmra.mrb[0].mxu0 %v2308
  %v2505 = vpop.f32.mrb[0].mxu0
  %v2506 = vadd.f32 %v2382, %v2505
  %v2507 = vpop.f32.mrb[0].mxu0
  %2508 = vmatprep.mubr.f32.mxu0 0.0
  %2509 = vmatmul.mubr.f32.gmra.mrb[0].mxu0 %v2309
  %v2510 = vpop.f32.mrb[0].mxu0
  %v2511 = vadd.f32 %v2382, %v2510
  %v2512 = vpop.f32.mrb[0].mxu0
  %2513 = vmatprep.mubr.f32.mxu0 0.0
  %2514 = vmatmul.mubr.f32.gmra.mrb[0].mxu0 %v2310
  %v2515 = vpop.f32.mrb[0].mxu0
  %v2516 = vadd.f32 %v2382, %v2515
  %v2517 = vpop.f32.mrb[0].mxu0
  %2518 = vmatprep.mubr.f32.mxu0 0.0
  %2519 = vmatmul.mubr.f32.gmra.mrb[0].mxu0 %v2311
  %v2520 = vpop.f32.mrb[0].mxu0
  %v2521 = vadd.f32 %v2382, %v2520
  %v2522 = vpop.f32.mrb[0].mxu0
  %2523 = vmatprep.mubr.f32.mxu0 0.0
  %2524 = vmatmul.mubr.f32.gmra.mrb[0].mxu0 %v2312
  %v2525 = vpop.f32.mrb[0].mxu0
  %v2526 = vadd.f32 %v2382, %v2525
  %v2527 = vpop.f32.mrb[0].mxu0
  %2528 = vmatprep.mubr.f32.mxu0 0.0
  %2529 = vmatmul.mubr.f32.gmra.mrb[0].mxu0 %v2313
  %v2530 = vpop.f32.mrb[0].mxu0
  %v2531 = vadd.f32 %v2382, %v2530
  %v2532 = vpop.f32.mrb[0].mxu0
  %2533 = vmatprep.mubr.f32.mxu0 0.0
  %2534 = vmatmul.mubr.f32.gmra.mrb[0].mxu0 %v2314
  %v2535 = vpop.f32.mrb[0].mxu0
  %v2536 = vadd.f32 %v2382, %v2535
  %v2537 = vpop.f32.mrb[0].mxu0
  %2538 = vmatprep.mubr.f32.mxu0 0.0
  %2539 = vmatmul.mubr.f32.gmra.mrb[0].mxu0 %v2315
  %v2540 = vpop.f32.mrb[0].mxu0
  %v2541 = vadd.f32 %v2382, %v2540
  %v2542 = vpop.f32.mrb[0].mxu0
  %2543 = vmatprep.mubr.f32.mxu0 0.0
  %2544 = vmatmul.mubr.f32.gmra.mrb[0].mxu0 %v2316
  %v2545 = vpop.f32.mrb[0].mxu0
  %v2546 = vadd.f32 %v2382, %v2545
  %v2547 = vpop.f32.mrb[0].mxu0
  %2548 = vmatprep.mubr.f32.mxu0 0.0
  %2549 = vmatmul.mubr.f32.gmra.mrb[0].mxu0 %v2317
  %v2550 = vpop.f32.mrb[0].mxu0
  %v2551 = vadd.f32 %v2382, %v2550
  %v2552 = vpop.f32.mrb[0].mxu0
  %2553 = vmatprep.mubr.f32.mxu0 0.0
  %2554 = vmatmul.mubr.f32.gmra.mrb[0].mxu0 %v2318
  %v2555 = vpop.f32.mrb[0].mxu0
  %v2556 = vadd.f32 %v2382, %v2555
  %v2557 = vpop.f32.mrb[0].mxu0
  %2558 = vmatprep.mubr.f32.mxu0 0.0
  %2559 = vmatmul.mubr.f32.gmra.mrb[0].mxu0 %v2319
  %v2560 = vpop.f32.mrb[0].mxu0
  %v2561 = vadd.f32 %v2382, %v2560
  %v2562 = vpop.f32.mrb[0].mxu0
  %2563 = vmatprep.mubr.f32.mxu0 0.0
  %2564 = vmatmul.mubr.f32.gmra.mrb[0].mxu0 %v2320
  %v2565 = vpop.f32.mrb[0].mxu0
  %v2566 = vadd.f32 %v2382, %v2565
  %v2567 = vpop.f32.mrb[0].mxu0
  %2568 = vmatprep.mubr.f32.mxu0 0.0
  %2569 = vmatmul.mubr.f32.gmra.mrb[0].mxu0 %v2321
  %v2570 = vpop.f32.mrb[0].mxu0
  %v2571 = vadd.f32 %v2382, %v2570
  %v2572 = vpop.f32.mrb[0].mxu0
  %2573 = vmatprep.mubr.f32.mxu0 0.0
  %2574 = vmatmul.mubr.f32.gmra.mrb[0].mxu0 %v2322
  %v2575 = vpop.f32.mrb[0].mxu0
  %v2576 = vadd.f32 %v2382, %v2575
  %v2577 = vpop.f32.mrb[0].mxu0
  %2578 = vmatprep.mubr.f32.mxu0 0.0
  %2579 = vmatmul.mubr.f32.gmra.mrb[0].mxu0 %v2323
  %v2580 = vpop.f32.mrb[0].mxu0
  %v2581 = vadd.f32 %v2382, %v2580
  %v2582 = vpop.f32.mrb[0].mxu0
  %2583 = vmatprep.mubr.f32.mxu0 0.0
  %2584 = vmatmul.mubr.f32.gmra.mrb[0].mxu0 %v2324
  %v2585 = vpop.f32.mrb[0].mxu0
  %v2586 = vadd.f32 %v2382, %v2585
  %v2587 = vpop.f32.mrb[0].mxu0
  %2588 = vmatprep.mubr.f32.mxu0 0.0
  %2589 = vmatmul.mubr.f32.gmra.mrb[0].mxu0 %v2325
  %v2590 = vpop.f32.mrb[0].mxu0
  %v2591 = vadd.f32 %v2382, %v2590
  %v2592 = vpop.f32.mrb[0].mxu0
  %2593 = vmatprep.mubr.f32.mxu0 0.0
  %2594 = vmatmul.mubr.f32.gmra.mrb[0].mxu0 %v2326
  %v2595 = vpop.f32.mrb[0].mxu0
  %v2596 = vadd.f32 %v2382, %v2595
  %v2597 = vpop.f32.mrb[0].mxu0
  %2598 = vmatprep.mubr.f32.mxu0 0.0
  %2599 = vmatmul.mubr.f32.gmra.mrb[0].mxu0 %v2327
  %v2600 = vpop.f32.mrb[0].mxu0
  %v2601 = vadd.f32 %v2382, %v2600
  %v2602 = vpop.f32.mrb[0].mxu0
  %2603 = vmatprep.mubr.f32.mxu0 0.0
  %2604 = vmatmul.mubr.f32.gmra.mrb[0].mxu0 %v2328
  %v2605 = vpop.f32.mrb[0].mxu0
  %v2606 = vadd.f32 %v2382, %v2605
  %v2607 = vpop.f32.mrb[0].mxu0
  %2608 = vmatprep.mubr.f32.mxu0 0.0
  %2609 = vmatmul.mubr.f32.gmra.mrb[0].mxu0 %v2329
  %v2610 = vpop.f32.mrb[0].mxu0
  %v2611 = vadd.f32 %v2382, %v2610
  %v2612 = vpop.f32.mrb[0].mxu0
  %2613 = vmatprep.mubr.f32.mxu0 0.0
  %2614 = vmatmul.mubr.f32.gmra.mrb[0].mxu0 %v2330
  %v2615 = vpop.f32.mrb[0].mxu0
  %v2616 = vadd.f32 %v2382, %v2615
  %v2617 = vpop.f32.mrb[0].mxu0
  %2618 = vmatprep.mubr.f32.mxu0 0.0
  %2619 = vmatmul.mubr.f32.gmra.mrb[0].mxu0 %v2331
  %v2620 = vpop.f32.mrb[0].mxu0
  %v2621 = vadd.f32 %v2382, %v2620
  %v2622 = vpop.f32.mrb[0].mxu0
  %2623 = vmatprep.mubr.f32.mxu0 0.0
  %2624 = vmatmul.mubr.f32.gmra.mrb[0].mxu0 %v2332
  %v2625 = vpop.f32.mrb[0].mxu0
  %v2626 = vadd.f32 %v2382, %v2625
  %v2627 = vpop.f32.mrb[0].mxu0
  %2628 = vmatprep.mubr.f32.mxu0 0.0
  %2629 = vmatmul.mubr.f32.gmra.mrb[0].mxu0 %v2333
  %v2630 = vpop.f32.mrb[0].mxu0
  %v2631 = vadd.f32 %v2382, %v2630
  %v2632 = vpop.f32.mrb[0].mxu0
  %2633 = vmatprep.mubr.f32.mxu0 0.0
  %2634 = vmatmul.mubr.f32.gmra.mrb[0].mxu0 %v2334
  %v2635 = vpop.f32.mrb[0].mxu0
  %v2636 = vadd.f32 %v2382, %v2635
  %v2637 = vpop.f32.mrb[0].mxu0
  %2638 = vmatprep.mubr.f32.mxu0 0.0
  %2639 = vmatmul.mubr.f32.gmra.mrb[0].mxu0 %v2335
  %v2640 = vpop.f32.mrb[0].mxu0
  %v2641 = vadd.f32 %v2382, %v2640
  %v2642 = vpop.f32.mrb[0].mxu0
  %2643 = vmatprep.mubr.f32.mxu0 0.0
  %2644 = vmatmul.mubr.f32.gmra.mrb[0].mxu0 %v2336
  %v2645 = vpop.f32.mrb[0].mxu0
  %v2646 = vadd.f32 %v2382, %v2645
  %v2647 = vpop.f32.mrb[0].mxu0
  %2648 = vmatprep.mubr.f32.mxu0 0.0
  %2649 = vmatmul.mubr.f32.gmra.mrb[0].mxu0 %v2337
  %v2650 = vpop.f32.mrb[0].mxu0
  %v2651 = vadd.f32 %v2382, %v2650
  %v2652 = vpop.f32.mrb[0].mxu0
  %2653 = vmatprep.mubr.f32.mxu0 0.0
  %2654 = vmatmul.mubr.f32.gmra.mrb[0].mxu0 %v2338
  %v2655 = vpop.f32.mrb[0].mxu0
  %v2656 = vadd.f32 %v2382, %v2655
  %v2657 = vpop.f32.mrb[0].mxu0
  %2658 = vmatprep.mubr.f32.mxu0 0.0
  %2659 = vmatmul.mubr.f32.gmra.mrb[0].mxu0 %v2339
  %v2660 = vpop.f32.mrb[0].mxu0
  %v2661 = vadd.f32 %v2382, %v2660
  %v2662 = vpop.f32.mrb[0].mxu0
  %2663 = vmatprep.mubr.f32.mxu0 0.0
  %2664 = vmatmul.mubr.f32.gmra.mrb[0].mxu0 %v2340
  %v2665 = vpop.f32.mrb[0].mxu0
  %v2666 = vadd.f32 %v2382, %v2665
  %v2667 = vpop.f32.mrb[0].mxu0
  %2668 = vmatprep.mubr.f32.mxu0 0.0
  %2669 = vmatmul.mubr.f32.gmra.mrb[0].mxu0 %v2341
  %v2670 = vpop.f32.mrb[0].mxu0
  %v2671 = vadd.f32 %v2382, %v2670
  %v2672 = vpop.f32.mrb[0].mxu0
  %2673 = vmatprep.mubr.f32.mxu0 0.0
  %2674 = vmatmul.mubr.f32.gmra.mrb[0].mxu0 %v2342
  %v2675 = vpop.f32.mrb[0].mxu0
  %v2676 = vadd.f32 %v2382, %v2675
  %v2677 = vpop.f32.mrb[0].mxu0
  %2678 = vmatprep.mubr.f32.mxu0 0.0
  %2679 = vmatmul.mubr.f32.gmra.mrb[0].mxu0 %v2343
  %v2680 = vpop.f32.mrb[0].mxu0
  %v2681 = vadd.f32 %v2382, %v2680
  %v2682 = vpop.f32.mrb[0].mxu0
  %2683 = vmatprep.mubr.f32.mxu0 0.0
  %2684 = vmatmul.mubr.f32.gmra.mrb[0].mxu0 %v2344
  %v2685 = vpop.f32.mrb[0].mxu0
  %v2686 = vadd.f32 %v2382, %v2685
  %v2687 = vpop.f32.mrb[0].mxu0
  %2688 = vmatprep.mubr.f32.mxu0 0.0
  %2689 = vmatmul.mubr.f32.gmra.mrb[0].mxu0 %v2345
  %v2690 = vpop.f32.mrb[0].mxu0
  %v2691 = vadd.f32 %v2382, %v2690
  %v2692 = vpop.f32.mrb[0].mxu0
  %2693 = vmatprep.mubr.f32.mxu0 0.0
  %2694 = vmatmul.mubr.f32.gmra.mrb[0].mxu0 %v2346
  %v2695 = vpop.f32.mrb[0].mxu0
  %v2696 = vadd.f32 %v2382, %v2695
  %v2697 = vpop.f32.mrb[0].mxu0
  %2698 = vmatprep.mubr.f32.mxu0 0.0
  %2699 = vmatmul.mubr.f32.gmra.mrb[0].mxu0 %v2347
  %v2700 = vpop.f32.mrb[0].mxu0
  %v2701 = vadd.f32 %v2382, %v2700
  %v2702 = vpop.f32.mrb[0].mxu0
  %2703 = vmatprep.mubr.f32.mxu0 0.0
  %2704 = vmatmul.mubr.f32.gmra.mrb[0].mxu0 %v2348
  %v2705 = vpop.f32.mrb[0].mxu0
  %v2706 = vadd.f32 %v2382, %v2705
  %v2707 = vpop.f32.mrb[0].mxu0
  %2708 = vmatprep.mubr.f32.mxu0 0.0
  %2709 = vmatmul.mubr.f32.gmra.mrb[0].mxu0 %v2349
  %v2710 = vpop.f32.mrb[0].mxu0
  %v2711 = vadd.f32 %v2382, %v2710
  %v2712 = vpop.f32.mrb[0].mxu0
  %2713 = vmatprep.mubr.f32.mxu0 0.0
  %2714 = vmatmul.mubr.f32.gmra.mrb[0].mxu0 %v2350
  %v2715 = vpop.f32.mrb[0].mxu0
  %v2716 = vadd.f32 %v2382, %v2715
  %v2717 = vpop.f32.mrb[0].mxu0
  %2718 = vmatprep.mubr.f32.mxu0 0.0
  %2719 = vmatmul.mubr.f32.gmra.mrb[0].mxu0 %v2351
  %v2720 = vpop.f32.mrb[0].mxu0
  %v2721 = vadd.f32 %v2382, %v2720
  %v2722 = vpop.f32.mrb[0].mxu0
  %2723 = vmatprep.mubr.f32.mxu0 0.0
  %2724 = vmatmul.mubr.f32.gmra.mrb[0].mxu0 %v2352
  %v2725 = vpop.f32.mrb[0].mxu0
  %v2726 = vadd.f32 %v2382, %v2725
  %v2727 = vpop.f32.mrb[0].mxu0
  %2728 = vmatprep.mubr.f32.mxu0 0.0
  %2729 = vmatmul.mubr.f32.gmra.mrb[0].mxu0 %v2353
  %v2730 = vpop.f32.mrb[0].mxu0
  %v2731 = vadd.f32 %v2382, %v2730
  %v2732 = vpop.f32.mrb[0].mxu0
  %2733 = vmatprep.mubr.f32.mxu0 0.0
  %2734 = vmatmul.mubr.f32.gmra.mrb[0].mxu0 %v2354
  %v2735 = vpop.f32.mrb[0].mxu0
  %v2736 = vadd.f32 %v2382, %v2735
  %v2737 = vpop.f32.mrb[0].mxu0
  %2738 = vmatprep.mubr.f32.mxu0 0.0
  %2739 = vmatmul.mubr.f32.gmra.mrb[0].mxu0 %v2355
  %v2740 = vpop.f32.mrb[0].mxu0
  %v2741 = vadd.f32 %v2382, %v2740
  %v2742 = vpop.f32.mrb[0].mxu0
  %2743 = vmatprep.mubr.f32.mxu0 0.0
  %2744 = vmatmul.mubr.f32.gmra.mrb[0].mxu0 %v2356
  %v2745 = vpop.f32.mrb[0].mxu0
  %v2746 = vadd.f32 %v2382, %v2745
  %v2747 = vpop.f32.mrb[0].mxu0
  %2748 = vmatprep.mubr.f32.mxu0 0.0
  %2749 = vmatmul.mubr.f32.gmra.mrb[0].mxu0 %v2357
  %v2750 = vpop.f32.mrb[0].mxu0
  %v2751 = vadd.f32 %v2382, %v2750
  %v2752 = vpop.f32.mrb[0].mxu0
  %2753 = vmatprep.mubr.f32.mxu0 0.0
  %2754 = vmatmul.mubr.f32.gmra.mrb[0].mxu0 %v2358
  %v2755 = vpop.f32.mrb[0].mxu0
  %v2756 = vadd.f32 %v2382, %v2755
  %v2757 = vpop.f32.mrb[0].mxu0
  %2758 = vmatprep.mubr.f32.mxu0 0.0
  %2759 = vmatmul.mubr.f32.gmra.mrb[0].mxu0 %v2359
  %v2760 = vpop.f32.mrb[0].mxu0
  %v2761 = vadd.f32 %v2382, %v2760
  %v2762 = vpop.f32.mrb[0].mxu0
  %2763 = vmatprep.mubr.f32.mxu0 0.0
  %2764 = vmatmul.mubr.f32.gmra.mrb[0].mxu0 %v2360
  %v2765 = vpop.f32.mrb[0].mxu0
  %v2766 = vadd.f32 %v2382, %v2765
  %v2767 = vpop.f32.mrb[0].mxu0
  %2768 = vdwg.mxu0
  %v2769 = vadd.f32 %v157, %v2451
  %v2770 = vadd.f32 %v158, %v2456
  %v2771 = vadd.f32 %v159, %v2461
  %v2772 = vadd.f32 %v160, %v2466
  %v2773 = vadd.f32 %v161, %v2471
  %v2774 = vadd.f32 %v162, %v2476
  %v2775 = vadd.f32 %v163, %v2481
  %v2776 = vadd.f32 %v164, %v2486
  %v2777 = vadd.f32 %v165, %v2491
  %v2778 = vadd.f32 %v166, %v2496
  %v2779 = vadd.f32 %v167, %v2501
  %v2780 = vadd.f32 %v168, %v2506
  %v2781 = vadd.f32 %v169, %v2511
  %v2782 = vadd.f32 %v170, %v2516
  %v2783 = vadd.f32 %v171, %v2521
  %v2784 = vadd.f32 %v172, %v2526
  %v2785 = vadd.f32 %v173, %v2531
  %v2786 = vadd.f32 %v174, %v2536
  %v2787 = vadd.f32 %v175, %v2541
  %v2788 = vadd.f32 %v176, %v2546
  %v2789 = vadd.f32 %v177, %v2551
  %v2790 = vadd.f32 %v178, %v2556
  %v2791 = vadd.f32 %v179, %v2561
  %v2792 = vadd.f32 %v180, %v2566
  %v2793 = vadd.f32 %v181, %v2571
  %v2794 = vadd.f32 %v182, %v2576
  %v2795 = vadd.f32 %v183, %v2581
  %v2796 = vadd.f32 %v184, %v2586
  %v2797 = vadd.f32 %v185, %v2591
  %v2798 = vadd.f32 %v186, %v2596
  %v2799 = vadd.f32 %v187, %v2601
  %v2800 = vadd.f32 %v188, %v2606
  %v2801 = vadd.f32 %v189, %v2611
  %v2802 = vadd.f32 %v190, %v2616
  %v2803 = vadd.f32 %v191, %v2621
  %v2804 = vadd.f32 %v192, %v2626
  %v2805 = vadd.f32 %v193, %v2631
  %v2806 = vadd.f32 %v194, %v2636
  %v2807 = vadd.f32 %v195, %v2641
  %v2808 = vadd.f32 %v196, %v2646
  %v2809 = vadd.f32 %v197, %v2651
  %v2810 = vadd.f32 %v198, %v2656
  %v2811 = vadd.f32 %v199, %v2661
  %v2812 = vadd.f32 %v200, %v2666
  %v2813 = vadd.f32 %v201, %v2671
  %v2814 = vadd.f32 %v202, %v2676
  %v2815 = vadd.f32 %v203, %v2681
  %v2816 = vadd.f32 %v204, %v2686
  %v2817 = vadd.f32 %v205, %v2691
  %v2818 = vadd.f32 %v206, %v2696
  %v2819 = vadd.f32 %v207, %v2701
  %v2820 = vadd.f32 %v208, %v2706
  %v2821 = vadd.f32 %v209, %v2711
  %v2822 = vadd.f32 %v210, %v2716
  %v2823 = vadd.f32 %v211, %v2721
  %v2824 = vadd.f32 %v212, %v2726
  %v2825 = vadd.f32 %v213, %v2731
  %v2826 = vadd.f32 %v214, %v2736
  %v2827 = vadd.f32 %v215, %v2741
  %v2828 = vadd.f32 %v216, %v2746
  %v2829 = vadd.f32 %v217, %v2751
  %v2830 = vadd.f32 %v218, %v2756
  %v2831 = vadd.f32 %v219, %v2761
  %v2832 = vadd.f32 %v220, %v2766
  %2833 = vst.msk [vmem:[%s8] sm:$0xff] %vm221, %v2769
  %2834 = vst.msk [vmem:[%s8 + $0x8] sm:$0xff] %vm221, %v2770
  %2835 = vst.msk [vmem:[%s8 + $0x10] sm:$0xff] %vm221, %v2771
  %2836 = vst.msk [vmem:[%s8 + $0x18] sm:$0xff] %vm221, %v2772
  %2837 = vst.msk [vmem:[%s8 + $0x20] sm:$0xff] %vm221, %v2773
  %2838 = vst.msk [vmem:[%s8 + $0x28] sm:$0xff] %vm221, %v2774
  %2839 = vst.msk [vmem:[%s8 + $0x30] sm:$0xff] %vm221, %v2775
  %2840 = vst.msk [vmem:[%s8 + $0x38] sm:$0xff] %vm221, %v2776
  %2841 = vst.msk [vmem:[%s8 + $0x40] sm:$0xff] %vm221, %v2777
  %2842 = vst.msk [vmem:[%s8 + $0x48] sm:$0xff] %vm221, %v2778
  %2843 = vst.msk [vmem:[%s8 + $0x50] sm:$0xff] %vm221, %v2779
  %2844 = vst.msk [vmem:[%s8 + $0x58] sm:$0xff] %vm221, %v2780
  %2845 = vst.msk [vmem:[%s8 + $0x60] sm:$0xff] %vm221, %v2781
  %2846 = vst.msk [vmem:[%s8 + $0x68] sm:$0xff] %vm221, %v2782
  %2847 = vst.msk [vmem:[%s8 + $0x70] sm:$0xff] %vm221, %v2783
  %2848 = vst.msk [vmem:[%s8 + $0x78] sm:$0xff] %vm221, %v2784
  %2849 = vst.msk [vmem:[%s8 + $0x80] sm:$0xff] %vm221, %v2785
  %2850 = vst.msk [vmem:[%s8 + $0x88] sm:$0xff] %vm221, %v2786
  %2851 = vst.msk [vmem:[%s8 + $0x90] sm:$0xff] %vm221, %v2787
  %2852 = vst.msk [vmem:[%s8 + $0x98] sm:$0xff] %vm221, %v2788
  %2853 = vst.msk [vmem:[%s8 + $0xa0] sm:$0xff] %vm221, %v2789
  %2854 = vst.msk [vmem:[%s8 + $0xa8] sm:$0xff] %vm221, %v2790
  %2855 = vst.msk [vmem:[%s8 + $0xb0] sm:$0xff] %vm221, %v2791
  %2856 = vst.msk [vmem:[%s8 + $0xb8] sm:$0xff] %vm221, %v2792
  %2857 = vst.msk [vmem:[%s8 + $0xc0] sm:$0xff] %vm221, %v2793
  %2858 = vst.msk [vmem:[%s8 + $0xc8] sm:$0xff] %vm221, %v2794
  %2859 = vst.msk [vmem:[%s8 + $0xd0] sm:$0xff] %vm221, %v2795
  %2860 = vst.msk [vmem:[%s8 + $0xd8] sm:$0xff] %vm221, %v2796
  %2861 = vst.msk [vmem:[%s8 + $0xe0] sm:$0xff] %vm221, %v2797
  %2862 = vst.msk [vmem:[%s8 + $0xe8] sm:$0xff] %vm221, %v2798
  %2863 = vst.msk [vmem:[%s8 + $0xf0] sm:$0xff] %vm221, %v2799
  %2864 = vst.msk [vmem:[%s8 + $0xf8] sm:$0xff] %vm221, %v2800
  %2865 = vst.msk [vmem:[%s8 + $0x100] sm:$0xff] %vm221, %v2801
  %2866 = vst.msk [vmem:[%s8 + $0x108] sm:$0xff] %vm221, %v2802
  %2867 = vst.msk [vmem:[%s8 + $0x110] sm:$0xff] %vm221, %v2803
  %2868 = vst.msk [vmem:[%s8 + $0x118] sm:$0xff] %vm221, %v2804
  %2869 = vst.msk [vmem:[%s8 + $0x120] sm:$0xff] %vm221, %v2805
  %2870 = vst.msk [vmem:[%s8 + $0x128] sm:$0xff] %vm221, %v2806
  %2871 = vst.msk [vmem:[%s8 + $0x130] sm:$0xff] %vm221, %v2807
  %2872 = vst.msk [vmem:[%s8 + $0x138] sm:$0xff] %vm221, %v2808
  %2873 = vst.msk [vmem:[%s8 + $0x140] sm:$0xff] %vm221, %v2809
  %2874 = vst.msk [vmem:[%s8 + $0x148] sm:$0xff] %vm221, %v2810
  %2875 = vst.msk [vmem:[%s8 + $0x150] sm:$0xff] %vm221, %v2811
  %2876 = vst.msk [vmem:[%s8 + $0x158] sm:$0xff] %vm221, %v2812
  %2877 = vst.msk [vmem:[%s8 + $0x160] sm:$0xff] %vm221, %v2813
  %2878 = vst.msk [vmem:[%s8 + $0x168] sm:$0xff] %vm221, %v2814
  %2879 = vst.msk [vmem:[%s8 + $0x170] sm:$0xff] %vm221, %v2815
  %2880 = vst.msk [vmem:[%s8 + $0x178] sm:$0xff] %vm221, %v2816
  %2881 = vst.msk [vmem:[%s8 + $0x180] sm:$0xff] %vm221, %v2817
  %2882 = vst.msk [vmem:[%s8 + $0x188] sm:$0xff] %vm221, %v2818
  %2883 = vst.msk [vmem:[%s8 + $0x190] sm:$0xff] %vm221, %v2819
  %2884 = vst.msk [vmem:[%s8 + $0x198] sm:$0xff] %vm221, %v2820
  %2885 = vst.msk [vmem:[%s8 + $0x1a0] sm:$0xff] %vm221, %v2821
  %2886 = vst.msk [vmem:[%s8 + $0x1a8] sm:$0xff] %vm221, %v2822
  %2887 = vst.msk [vmem:[%s8 + $0x1b0] sm:$0xff] %vm221, %v2823
  %2888 = vst.msk [vmem:[%s8 + $0x1b8] sm:$0xff] %vm221, %v2824
  %2889 = vst.msk [vmem:[%s8 + $0x1c0] sm:$0xff] %vm221, %v2825
  %2890 = vst.msk [vmem:[%s8 + $0x1c8] sm:$0xff] %vm221, %v2826
  %2891 = vst.msk [vmem:[%s8 + $0x1d0] sm:$0xff] %vm221, %v2827
  %2892 = vst.msk [vmem:[%s8 + $0x1d8] sm:$0xff] %vm221, %v2828
  %2893 = vst.msk [vmem:[%s8 + $0x1e0] sm:$0xff] %vm221, %v2829
  %2894 = vst.msk [vmem:[%s8 + $0x1e8] sm:$0xff] %vm221, %v2830
  %2895 = vst.msk [vmem:[%s8 + $0x1f0] sm:$0xff] %vm221, %v2831
  %2896 = vst.msk [vmem:[%s8 + $0x1f8] sm:$0xff] %vm221, %v2832
  // Predicated region
  $region34: #{swin_layer_forward.3} parent=0 // pred_check
    _
  $region35: #{swin_layer_forward.3} parent=0 // pred_check_branch
    %2898 = sbr.rel (0) target = $region37
  $region36: #{swin_layer_forward.3} parent=0 // pred_region
    _
  $region37: #{swin_layer_forward.3} parent=0 // pred_fallthru
    _
  // Predicated region
  $region38: #{swin_layer_forward.3} parent=0 // pred_check
    _
  $region39: #{swin_layer_forward.3} parent=0 // pred_check_branch
    %2900 = sbr.rel (0) target = $region41
  $region40: #{swin_layer_forward.3} parent=0 // pred_region
    _
  $region41: #{swin_layer_forward.3} parent=0 // pred_fallthru
    _

</llo_original>
